<compile_context>
chip_gen: v5e
topology: v5e:2x2
jax: 0.10.0
libtpu: 0.0.40
codegen_flags: <defaults>
</compile_context>

<pallas_src>
import math

import jax
import jax.numpy as jnp
from jax.experimental import pallas as pl
from jax.experimental.pallas import tpu as pltpu

D_MODEL = 32
N_HEADS = 4
D_FF = 64
N_LAYERS = 2
EPS = 1e-6


def _layer_norm(x, gamma, beta):
    mean = jnp.mean(x, axis=-1, keepdims=True)
    var = jnp.mean((x - mean) ** 2, axis=-1, keepdims=True)
    return (x - mean) * jax.lax.rsqrt(var + EPS) * gamma + beta


def encoder_kernel(x_ref, mask_ref,
                   ln1_g_ref, ln1_b_ref, wqkv_ref, bqkv_ref, wo_ref, bo_ref,
                   ln2_g_ref, ln2_b_ref, w1_ref, b1_ref, w2_ref, b2_ref,
                   fg_ref, fb_ref,
                   o_ref):
    x = x_ref[...]                        # (B*S, D) f32 residual stream, VMEM-resident
    n_layers = wqkv_ref.shape[0]
    n_batch = mask_ref.shape[0]
    seq = mask_ref.shape[1]
    d = x.shape[-1]
    dk = d // N_HEADS

    for l in range(n_layers):                       # static layer loop
        # ---- sublayer 1: pre-norm multi-head self-attention + residual ----
        xn = _layer_norm(x, ln1_g_ref[l], ln1_b_ref[l])
        # fused QKV projection; 1/sqrt(dk) already folded into the Q columns
        qkv = jnp.dot(xn.astype(jnp.bfloat16), wqkv_ref[l],
                      preferred_element_type=jnp.float32) + bqkv_ref[l]
        q = qkv[:, 0:d].astype(jnp.bfloat16)
        k = qkv[:, d:2 * d].astype(jnp.bfloat16)
        v = qkv[:, 2 * d:3 * d].astype(jnp.bfloat16)
        wo_l = wo_ref[l]                            # (D, D) bf16

        attn_blocks = []
        for b in range(n_batch):                    # per-batch (S,S) attention
            rows = slice(b * seq, (b + 1) * seq)
            keep = mask_ref[b] > 0.0                # (S, S) bool, same as reference
            attn_b = jnp.zeros((seq, d), jnp.float32)
            for h in range(N_HEADS):                # static head loop
                cols = slice(h * dk, (h + 1) * dk)
                qs = q[rows, cols]
                ks = k[rows, cols]
                vs = v[rows, cols]
                # contract on last dims: no explicit K transpose needed
                s = jnp.einsum('qd,kd->qk', qs, ks,
                               preferred_element_type=jnp.float32)
                s = jnp.where(keep, s, jnp.float32(-1e9))
                s = s - jnp.max(s, axis=-1, keepdims=True)
                p = jnp.exp(s)
                # approx reciprocal (EUP slot); fine at this tolerance, not for training numerics
                p = p * pl.reciprocal(jnp.sum(p, axis=-1, keepdims=True), approx=True)
                ctx = jnp.dot(p.astype(jnp.bfloat16), vs,
                              preferred_element_type=jnp.float32)
                # concat(head_0..head_H) @ Wo == sum_h head_h @ Wo[h*dk:(h+1)*dk, :]
                attn_b = attn_b + jnp.dot(ctx.astype(jnp.bfloat16), wo_l[cols, :],
                                          preferred_element_type=jnp.float32)
            attn_blocks.append(attn_b)
        attn = attn_blocks[0] if n_batch == 1 else jnp.concatenate(attn_blocks, axis=0)
        x = x + attn + bo_ref[l]

        # ---- sublayer 2: pre-norm feed-forward + residual ------------------
        xn2 = _layer_norm(x, ln2_g_ref[l], ln2_b_ref[l])
        h1 = jnp.dot(xn2.astype(jnp.bfloat16), w1_ref[l],
                     preferred_element_type=jnp.float32) + b1_ref[l]
        h1 = jnp.maximum(h1, 0.0)
        x = x + jnp.dot(h1.astype(jnp.bfloat16), w2_ref[l],
                        preferred_element_type=jnp.float32) + b2_ref[l]

    # ---- final LayerNorm, fused into the same kernel ------------------------
    o_ref[...] = _layer_norm(x, fg_ref[...], fb_ref[...])


@jax.jit
def encoder_forward(x, mask, prepped):
    B, S, D = x.shape
    dk = D // N_HEADS
    bs = B * S
    x2 = x.reshape(bs, D)                  # free XLA reshape outside the kernel
    args = (x2, mask.astype(jnp.float32)) + tuple(prepped)

    per_layer_flops = (2 * bs * D * 3 * D              # fused QKV projection
                       + 4 * B * N_HEADS * S * S * dk  # scores + context
                       + 2 * bs * D * D                # output projection
                       + 2 * bs * D * D_FF             # FFN up
                       + 2 * bs * D_FF * D)            # FFN down
    flops = N_LAYERS * per_layer_flops
    transcendentals = N_LAYERS * B * N_HEADS * S * (S + 1)   # exp + reciprocal
    bytes_accessed = sum(int(a.size) * a.dtype.itemsize for a in args) + bs * D * 4

    out = pl.pallas_call(
        encoder_kernel,
        out_shape=jax.ShapeDtypeStruct((bs, D), jnp.float32),
        # no grid: single program, whole working set (<70 KB) resident in VMEM
        in_specs=[pl.BlockSpec(memory_space=pltpu.MemorySpace.VMEM)] * len(args),
        out_specs=pl.BlockSpec(memory_space=pltpu.MemorySpace.VMEM),
        compiler_params=pltpu.CompilerParams(vmem_limit_bytes=32 * 1024 * 1024),
        cost_estimate=pl.CostEstimate(flops=flops,
                                      transcendentals=transcendentals,
                                      bytes_accessed=bytes_accessed),
    )(*args)
    return out.reshape(B, S, D)


# ----------------------------- parameters -----------------------------------

def init_params(key, d_model, d_ff, n_layers):
    """Per-layer params in the same layout as the PyTorch module (used by ref)."""
    def w(k, shape):
        return jax.random.normal(k, shape, jnp.float32) * 0.02

    layers = []
    for _ in range(n_layers):
        key, *ks = jax.random.split(key, 13)
        layer = [
            jnp.ones((1, d_model), jnp.float32), jnp.zeros((1, d_model), jnp.float32),  # ln1 g,b
            w(ks[0], (d_model, d_model)),        w(ks[1], (1, d_model)),                # Wq, bq
            w(ks[2], (d_model, d_model)),        w(ks[3], (1, d_model)),                # Wk, bk
            w(ks[4], (d_model, d_model)),        w(ks[5], (1, d_model)),                # Wv, bv
            w(ks[6], (d_model, d_model)),        w(ks[7], (1, d_model)),                # Wo, bo
            jnp.ones((1, d_model), jnp.float32), jnp.zeros((1, d_model), jnp.float32),  # ln2 g,b
            w(ks[8], (d_model, d_ff)),           w(ks[9], (1, d_ff)),                   # W1, b1
            w(ks[10], (d_ff, d_model)),          w(ks[11], (1, d_model)),               # W2, b2
        ]
        layers.append(layer)
    final = [jnp.ones((1, d_model), jnp.float32), jnp.zeros((1, d_model), jnp.float32)]
    return layers, final


def prepare_params(layer_params, final_params):
    """Stack params along a layer axis, fuse QKV, fold 1/sqrt(dk), cast weights to bf16."""
    scale = jnp.float32(1.0 / math.sqrt(D_MODEL // N_HEADS))

    def stack(idx):
        return jnp.stack([lp[idx] for lp in layer_params], axis=0)

    ln1_g, ln1_b = stack(0), stack(1)                       # (L,1,D) f32
    wq, bq = stack(2) * scale, stack(3) * scale             # scale folded into Q
    wk, bk = stack(4), stack(5)
    wv, bv = stack(6), stack(7)
    wqkv = jnp.concatenate([wq, wk, wv], axis=-1).astype(jnp.bfloat16)   # (L, D, 3D)
    bqkv = jnp.concatenate([bq, bk, bv], axis=-1)                        # (L, 1, 3D) f32
    wo, bo = stack(8).astype(jnp.bfloat16), stack(9)        # (L,D,D) bf16, (L,1,D) f32
    ln2_g, ln2_b = stack(10), stack(11)
    w1, b1 = stack(12).astype(jnp.bfloat16), stack(13)      # (L,D,DFF) bf16, (L,1,DFF) f32
    w2, b2 = stack(14).astype(jnp.bfloat16), stack(15)      # (L,DFF,D) bf16, (L,1,D) f32
    return (ln1_g, ln1_b, wqkv, bqkv, wo, bo, ln2_g, ln2_b,
            w1, b1, w2, b2, final_params[0], final_params[1])


# ----------------------------- reference -------------------------------------

def ref_encoder(x, mask, layer_params, final_params):
    """Plain-JAX f32 reference mirroring the PyTorch Encoder forward."""
    def ln(x, g, b):
        mean = x.mean(-1, keepdims=True)
        var = ((x - mean) ** 2).mean(-1, keepdims=True)
        return (x - mean) / jnp.sqrt(var + EPS) * g + b

    B, S, D = x.shape
    dk = D // N_HEADS
    for (ln1g, ln1b, wq, bq, wk, bk, wv, bv, wo, bo,
         ln2g, ln2b, w1, b1, w2, b2) in layer_params:
        xn = ln(x, ln1g, ln1b)
        q = xn @ wq + bq
        k = xn @ wk + bk
        v = xn @ wv + bv
        qh = q.reshape(B, S, N_HEADS, dk).transpose(0, 2, 1, 3)
        kh = k.reshape(B, S, N_HEADS, dk).transpose(0, 2, 1, 3)
        vh = v.reshape(B, S, N_HEADS, dk).transpose(0, 2, 1, 3)
        sc = jnp.einsum('bhqd,bhkd->bhqk', qh, kh) / jnp.sqrt(jnp.float32(dk))
        sc = jnp.where(mask[:, None, :, :] > 0, sc, -1e9)
        p = jax.nn.softmax(sc, axis=-1)
        o = jnp.einsum('bhqk,bhkd->bhqd', p, vh).transpose(0, 2, 1, 3).reshape(B, S, D)
        x = x + (o @ wo + bo)
        xn2 = ln(x, ln2g, ln2b)
        x = x + (jnp.maximum(xn2 @ w1 + b1, 0.0) @ w2 + b2)
    return ln(x, final_params[0], final_params[1])


if __name__ == "__main__":
    key = jax.random.PRNGKey(0)
    B, S = 2, 8
    kx, kp = jax.random.split(key)
    x = jax.random.normal(kx, (B, S, D_MODEL), jnp.float32)
    mask = jnp.ones((B, S, S), jnp.float32)
    mask = mask.at[1, :, 6:].set(0.0)   # pad out last two key positions of batch 1

    layer_params, final_params = init_params(kp, D_MODEL, D_FF, N_LAYERS)
    prepped = prepare_params(layer_params, final_params)

    out = encoder_forward(x, mask, prepped)
    out = jax.block_until_ready(out)

    ref = ref_encoder(x, mask, layer_params, final_params)
    max_err = float(jnp.max(jnp.abs(out - ref)))
    assert out.shape == (B, S, D_MODEL) and max_err < 2e-2, f"max_err={max_err}"
    print("KERNEL_OK")
</pallas_src>

<mosaic_0001>
module attributes {stable_mosaic.version = 11 : i64} {
  func.func @encoder_kernel(%arg0: memref<16x32xf32, #tpu.memory_space<vmem>>, %arg1: memref<2x8x8xf32, #tpu.memory_space<vmem>>, %arg2: memref<2x1x32xf32, #tpu.memory_space<vmem>>, %arg3: memref<2x1x32xf32, #tpu.memory_space<vmem>>, %arg4: memref<2x32x96xbf16, #tpu.memory_space<vmem>>, %arg5: memref<2x1x96xf32, #tpu.memory_space<vmem>>, %arg6: memref<2x32x32xbf16, #tpu.memory_space<vmem>>, %arg7: memref<2x1x32xf32, #tpu.memory_space<vmem>>, %arg8: memref<2x1x32xf32, #tpu.memory_space<vmem>>, %arg9: memref<2x1x32xf32, #tpu.memory_space<vmem>>, %arg10: memref<2x32x64xbf16, #tpu.memory_space<vmem>>, %arg11: memref<2x1x64xf32, #tpu.memory_space<vmem>>, %arg12: memref<2x64x32xbf16, #tpu.memory_space<vmem>>, %arg13: memref<2x1x32xf32, #tpu.memory_space<vmem>>, %arg14: memref<1x32xf32, #tpu.memory_space<vmem>>, %arg15: memref<1x32xf32, #tpu.memory_space<vmem>>, %arg16: memref<16x32xf32, #tpu.memory_space<vmem>>) attributes {dimension_semantics = [], scalar_prefetch = 0 : i64, scratch_operands = 0 : i64, tpu.core_type = #tpu.core_type<tc>} {
    %c0 = arith.constant 0 : index
    %c0_0 = arith.constant 0 : index
    %0 = vector.load %arg0[%c0, %c0_0] : memref<16x32xf32, #tpu.memory_space<vmem>>, vector<16x32xf32>
    %c0_1 = arith.constant 0 : index
    %c0_2 = arith.constant 0 : index
    %c0_3 = arith.constant 0 : index
    %1 = vector.load %arg2[%c0_1, %c0_2, %c0_3] : memref<2x1x32xf32, #tpu.memory_space<vmem>>, vector<1x1x32xf32>
    %2 = vector.shape_cast %1 : vector<1x1x32xf32> to vector<1x32xf32>
    %c0_4 = arith.constant 0 : index
    %c0_5 = arith.constant 0 : index
    %c0_6 = arith.constant 0 : index
    %3 = vector.load %arg3[%c0_4, %c0_5, %c0_6] : memref<2x1x32xf32, #tpu.memory_space<vmem>>, vector<1x1x32xf32>
    %4 = vector.shape_cast %3 : vector<1x1x32xf32> to vector<1x32xf32>
    %cst = arith.constant dense<0.000000e+00> : vector<16xf32>
    %5 = vector.multi_reduction <add>, %0, %cst [1] : vector<16x32xf32> to vector<16xf32>
    %6 = vector.shape_cast %5 : vector<16xf32> to vector<16x1xf32>
    %cst_7 = arith.constant 3.200000e+01 : f32
    %7 = vector.broadcast %cst_7 : f32 to vector<16x1xf32>
    %8 = arith.divf %6, %7 : vector<16x1xf32>
    %9 = vector.broadcast %8 : vector<16x1xf32> to vector<16x32xf32>
    %10 = arith.subf %0, %9 : vector<16x32xf32>
    %11 = arith.mulf %10, %10 : vector<16x32xf32>
    %cst_8 = arith.constant dense<0.000000e+00> : vector<16xf32>
    %12 = vector.multi_reduction <add>, %11, %cst_8 [1] : vector<16x32xf32> to vector<16xf32>
    %13 = vector.shape_cast %12 : vector<16xf32> to vector<16x1xf32>
    %cst_9 = arith.constant 3.200000e+01 : f32
    %14 = vector.broadcast %cst_9 : f32 to vector<16x1xf32>
    %15 = arith.divf %13, %14 : vector<16x1xf32>
    %16 = vector.broadcast %8 : vector<16x1xf32> to vector<16x32xf32>
    %17 = arith.subf %0, %16 : vector<16x32xf32>
    %cst_10 = arith.constant 9.99999997E-7 : f32
    %18 = vector.broadcast %cst_10 : f32 to vector<16x1xf32>
    %19 = arith.addf %15, %18 : vector<16x1xf32>
    %20 = math.rsqrt %19 : vector<16x1xf32>
    %21 = vector.broadcast %20 : vector<16x1xf32> to vector<16x32xf32>
    %22 = arith.mulf %17, %21 : vector<16x32xf32>
    %23 = vector.broadcast %2 : vector<1x32xf32> to vector<16x32xf32>
    %24 = arith.mulf %22, %23 : vector<16x32xf32>
    %25 = vector.broadcast %4 : vector<1x32xf32> to vector<16x32xf32>
    %26 = arith.addf %24, %25 : vector<16x32xf32>
    %27 = arith.truncf %26 : vector<16x32xf32> to vector<16x32xbf16>
    %c0_11 = arith.constant 0 : index
    %c0_12 = arith.constant 0 : index
    %c0_13 = arith.constant 0 : index
    %28 = vector.load %arg4[%c0_11, %c0_12, %c0_13] : memref<2x32x96xbf16, #tpu.memory_space<vmem>>, vector<1x32x96xbf16>
    %29 = vector.shape_cast %28 : vector<1x32x96xbf16> to vector<32x96xbf16>
    %cst_14 = arith.constant dense<0.000000e+00> : vector<16x96xf32>
    %30 = tpu.matmul %27, %29, %cst_14 {dimension_numbers = #tpu.dot_dimension_numbers<[1], [0], [0], [1], [0, 0, 1, 1], [], []>} : vector<16x32xbf16>, vector<32x96xbf16>, vector<16x96xf32> -> vector<16x96xf32>
    %c0_15 = arith.constant 0 : index
    %c0_16 = arith.constant 0 : index
    %c0_17 = arith.constant 0 : index
    %31 = vector.load %arg5[%c0_15, %c0_16, %c0_17] : memref<2x1x96xf32, #tpu.memory_space<vmem>>, vector<1x1x96xf32>
    %32 = vector.shape_cast %31 : vector<1x1x96xf32> to vector<1x96xf32>
    %33 = vector.broadcast %32 : vector<1x96xf32> to vector<16x96xf32>
    %34 = arith.addf %30, %33 : vector<16x96xf32>
    %35 = vector.extract_strided_slice %34 {offsets = [0, 0], sizes = [16, 32], strides = [1, 1]} : vector<16x96xf32> to vector<16x32xf32>
    %36 = arith.truncf %35 : vector<16x32xf32> to vector<16x32xbf16>
    %37 = vector.extract_strided_slice %34 {offsets = [0, 32], sizes = [16, 32], strides = [1, 1]} : vector<16x96xf32> to vector<16x32xf32>
    %38 = arith.truncf %37 : vector<16x32xf32> to vector<16x32xbf16>
    %39 = vector.extract_strided_slice %34 {offsets = [0, 64], sizes = [16, 32], strides = [1, 1]} : vector<16x96xf32> to vector<16x32xf32>
    %40 = arith.truncf %39 : vector<16x32xf32> to vector<16x32xbf16>
    %c0_18 = arith.constant 0 : index
    %c0_19 = arith.constant 0 : index
    %c0_20 = arith.constant 0 : index
    %41 = vector.load %arg6[%c0_18, %c0_19, %c0_20] : memref<2x32x32xbf16, #tpu.memory_space<vmem>>, vector<1x32x32xbf16>
    %42 = vector.shape_cast %41 : vector<1x32x32xbf16> to vector<32x32xbf16>
    %c0_21 = arith.constant 0 : index
    %c0_22 = arith.constant 0 : index
    %c0_23 = arith.constant 0 : index
    %43 = vector.load %arg1[%c0_21, %c0_22, %c0_23] : memref<2x8x8xf32, #tpu.memory_space<vmem>>, vector<1x8x8xf32>
    %44 = vector.shape_cast %43 : vector<1x8x8xf32> to vector<8x8xf32>
    %cst_24 = arith.constant 0.000000e+00 : f32
    %45 = vector.broadcast %cst_24 : f32 to vector<8x8xf32>
    %46 = arith.cmpf ogt, %44, %45 : vector<8x8xf32>
    %cst_25 = arith.constant 0.000000e+00 : f32
    %47 = vector.broadcast %cst_25 : f32 to vector<8x32xf32>
    %48 = vector.extract_strided_slice %36 {offsets = [0, 0], sizes = [8, 8], strides = [1, 1]} : vector<16x32xbf16> to vector<8x8xbf16>
    %49 = vector.extract_strided_slice %38 {offsets = [0, 0], sizes = [8, 8], strides = [1, 1]} : vector<16x32xbf16> to vector<8x8xbf16>
    %50 = vector.extract_strided_slice %40 {offsets = [0, 0], sizes = [8, 8], strides = [1, 1]} : vector<16x32xbf16> to vector<8x8xbf16>
    "tpu.trace_start"() <{level = 10 : i32, message = "qd,kd->qk"}> : () -> ()
    %cst_26 = arith.constant dense<0.000000e+00> : vector<8x8xf32>
    %51 = tpu.matmul %48, %49, %cst_26 {dimension_numbers = #tpu.dot_dimension_numbers<[1], [1], [0], [0], [0, 0, 1, 0], [], []>} : vector<8x8xbf16>, vector<8x8xbf16>, vector<8x8xf32> -> vector<8x8xf32>
    %cst_27 = arith.constant -1.000000e+09 : f32
    "tpu.trace_stop"() : () -> ()
    %52 = vector.broadcast %cst_27 : f32 to vector<8x8xf32>
    %53 = arith.select %46, %51, %52 : vector<8x8xi1>, vector<8x8xf32>
    %cst_28 = arith.constant dense<0xFF800000> : vector<8xf32>
    %54 = vector.multi_reduction <maximumf>, %53, %cst_28 [1] : vector<8x8xf32> to vector<8xf32>
    %55 = vector.shape_cast %54 : vector<8xf32> to vector<8x1xf32>
    %56 = vector.broadcast %55 : vector<8x1xf32> to vector<8x8xf32>
    %57 = arith.subf %53, %56 : vector<8x8xf32>
    %58 = math.exp %57 : vector<8x8xf32>
    %cst_29 = arith.constant dense<0.000000e+00> : vector<8xf32>
    %59 = vector.multi_reduction <add>, %58, %cst_29 [1] : vector<8x8xf32> to vector<8xf32>
    %60 = vector.shape_cast %59 : vector<8xf32> to vector<8x1xf32>
    %61 = tpu.reciprocal %60 {approx = true} : vector<8x1xf32> -> vector<8x1xf32>
    %62 = vector.broadcast %61 : vector<8x1xf32> to vector<8x8xf32>
    %63 = arith.mulf %58, %62 : vector<8x8xf32>
    %64 = arith.truncf %63 : vector<8x8xf32> to vector<8x8xbf16>
    %cst_30 = arith.constant dense<0.000000e+00> : vector<8x8xf32>
    %65 = tpu.matmul %64, %50, %cst_30 {dimension_numbers = #tpu.dot_dimension_numbers<[1], [0], [0], [1], [0, 0, 1, 1], [], []>} : vector<8x8xbf16>, vector<8x8xbf16>, vector<8x8xf32> -> vector<8x8xf32>
    %66 = arith.truncf %65 : vector<8x8xf32> to vector<8x8xbf16>
    %67 = vector.extract_strided_slice %42 {offsets = [0, 0], sizes = [8, 32], strides = [1, 1]} : vector<32x32xbf16> to vector<8x32xbf16>
    %cst_31 = arith.constant dense<0.000000e+00> : vector<8x32xf32>
    %68 = tpu.matmul %66, %67, %cst_31 {dimension_numbers = #tpu.dot_dimension_numbers<[1], [0], [0], [1], [0, 0, 1, 1], [], []>} : vector<8x8xbf16>, vector<8x32xbf16>, vector<8x32xf32> -> vector<8x32xf32>
    %69 = arith.addf %47, %68 : vector<8x32xf32>
    %70 = vector.extract_strided_slice %36 {offsets = [0, 8], sizes = [8, 8], strides = [1, 1]} : vector<16x32xbf16> to vector<8x8xbf16>
    %71 = vector.extract_strided_slice %38 {offsets = [0, 8], sizes = [8, 8], strides = [1, 1]} : vector<16x32xbf16> to vector<8x8xbf16>
    %72 = vector.extract_strided_slice %40 {offsets = [0, 8], sizes = [8, 8], strides = [1, 1]} : vector<16x32xbf16> to vector<8x8xbf16>
    "tpu.trace_start"() <{level = 10 : i32, message = "qd,kd->qk"}> : () -> ()
    %cst_32 = arith.constant dense<0.000000e+00> : vector<8x8xf32>
    %73 = tpu.matmul %70, %71, %cst_32 {dimension_numbers = #tpu.dot_dimension_numbers<[1], [1], [0], [0], [0, 0, 1, 0], [], []>} : vector<8x8xbf16>, vector<8x8xbf16>, vector<8x8xf32> -> vector<8x8xf32>
    %cst_33 = arith.constant -1.000000e+09 : f32
    "tpu.trace_stop"() : () -> ()
    %74 = vector.broadcast %cst_33 : f32 to vector<8x8xf32>
    %75 = arith.select %46, %73, %74 : vector<8x8xi1>, vector<8x8xf32>
    %cst_34 = arith.constant dense<0xFF800000> : vector<8xf32>
    %76 = vector.multi_reduction <maximumf>, %75, %cst_34 [1] : vector<8x8xf32> to vector<8xf32>
    %77 = vector.shape_cast %76 : vector<8xf32> to vector<8x1xf32>
    %78 = vector.broadcast %77 : vector<8x1xf32> to vector<8x8xf32>
    %79 = arith.subf %75, %78 : vector<8x8xf32>
    %80 = math.exp %79 : vector<8x8xf32>
    %cst_35 = arith.constant dense<0.000000e+00> : vector<8xf32>
    %81 = vector.multi_reduction <add>, %80, %cst_35 [1] : vector<8x8xf32> to vector<8xf32>
    %82 = vector.shape_cast %81 : vector<8xf32> to vector<8x1xf32>
    %83 = tpu.reciprocal %82 {approx = true} : vector<8x1xf32> -> vector<8x1xf32>
    %84 = vector.broadcast %83 : vector<8x1xf32> to vector<8x8xf32>
    %85 = arith.mulf %80, %84 : vector<8x8xf32>
    %86 = arith.truncf %85 : vector<8x8xf32> to vector<8x8xbf16>
    %cst_36 = arith.constant dense<0.000000e+00> : vector<8x8xf32>
    %87 = tpu.matmul %86, %72, %cst_36 {dimension_numbers = #tpu.dot_dimension_numbers<[1], [0], [0], [1], [0, 0, 1, 1], [], []>} : vector<8x8xbf16>, vector<8x8xbf16>, vector<8x8xf32> -> vector<8x8xf32>
    %88 = arith.truncf %87 : vector<8x8xf32> to vector<8x8xbf16>
    %89 = vector.extract_strided_slice %42 {offsets = [8, 0], sizes = [8, 32], strides = [1, 1]} : vector<32x32xbf16> to vector<8x32xbf16>
    %cst_37 = arith.constant dense<0.000000e+00> : vector<8x32xf32>
    %90 = tpu.matmul %88, %89, %cst_37 {dimension_numbers = #tpu.dot_dimension_numbers<[1], [0], [0], [1], [0, 0, 1, 1], [], []>} : vector<8x8xbf16>, vector<8x32xbf16>, vector<8x32xf32> -> vector<8x32xf32>
    %91 = arith.addf %69, %90 : vector<8x32xf32>
    %92 = vector.extract_strided_slice %36 {offsets = [0, 16], sizes = [8, 8], strides = [1, 1]} : vector<16x32xbf16> to vector<8x8xbf16>
    %93 = vector.extract_strided_slice %38 {offsets = [0, 16], sizes = [8, 8], strides = [1, 1]} : vector<16x32xbf16> to vector<8x8xbf16>
    %94 = vector.extract_strided_slice %40 {offsets = [0, 16], sizes = [8, 8], strides = [1, 1]} : vector<16x32xbf16> to vector<8x8xbf16>
    "tpu.trace_start"() <{level = 10 : i32, message = "qd,kd->qk"}> : () -> ()
    %cst_38 = arith.constant dense<0.000000e+00> : vector<8x8xf32>
    %95 = tpu.matmul %92, %93, %cst_38 {dimension_numbers = #tpu.dot_dimension_numbers<[1], [1], [0], [0], [0, 0, 1, 0], [], []>} : vector<8x8xbf16>, vector<8x8xbf16>, vector<8x8xf32> -> vector<8x8xf32>
    %cst_39 = arith.constant -1.000000e+09 : f32
    "tpu.trace_stop"() : () -> ()
    %96 = vector.broadcast %cst_39 : f32 to vector<8x8xf32>
    %97 = arith.select %46, %95, %96 : vector<8x8xi1>, vector<8x8xf32>
    %cst_40 = arith.constant dense<0xFF800000> : vector<8xf32>
    %98 = vector.multi_reduction <maximumf>, %97, %cst_40 [1] : vector<8x8xf32> to vector<8xf32>
    %99 = vector.shape_cast %98 : vector<8xf32> to vector<8x1xf32>
    %100 = vector.broadcast %99 : vector<8x1xf32> to vector<8x8xf32>
    %101 = arith.subf %97, %100 : vector<8x8xf32>
    %102 = math.exp %101 : vector<8x8xf32>
    %cst_41 = arith.constant dense<0.000000e+00> : vector<8xf32>
    %103 = vector.multi_reduction <add>, %102, %cst_41 [1] : vector<8x8xf32> to vector<8xf32>
    %104 = vector.shape_cast %103 : vector<8xf32> to vector<8x1xf32>
    %105 = tpu.reciprocal %104 {approx = true} : vector<8x1xf32> -> vector<8x1xf32>
    %106 = vector.broadcast %105 : vector<8x1xf32> to vector<8x8xf32>
    %107 = arith.mulf %102, %106 : vector<8x8xf32>
    %108 = arith.truncf %107 : vector<8x8xf32> to vector<8x8xbf16>
    %cst_42 = arith.constant dense<0.000000e+00> : vector<8x8xf32>
    %109 = tpu.matmul %108, %94, %cst_42 {dimension_numbers = #tpu.dot_dimension_numbers<[1], [0], [0], [1], [0, 0, 1, 1], [], []>} : vector<8x8xbf16>, vector<8x8xbf16>, vector<8x8xf32> -> vector<8x8xf32>
    %110 = arith.truncf %109 : vector<8x8xf32> to vector<8x8xbf16>
    %111 = vector.extract_strided_slice %42 {offsets = [16, 0], sizes = [8, 32], strides = [1, 1]} : vector<32x32xbf16> to vector<8x32xbf16>
    %cst_43 = arith.constant dense<0.000000e+00> : vector<8x32xf32>
    %112 = tpu.matmul %110, %111, %cst_43 {dimension_numbers = #tpu.dot_dimension_numbers<[1], [0], [0], [1], [0, 0, 1, 1], [], []>} : vector<8x8xbf16>, vector<8x32xbf16>, vector<8x32xf32> -> vector<8x32xf32>
    %113 = arith.addf %91, %112 : vector<8x32xf32>
    %114 = vector.extract_strided_slice %36 {offsets = [0, 24], sizes = [8, 8], strides = [1, 1]} : vector<16x32xbf16> to vector<8x8xbf16>
    %115 = vector.extract_strided_slice %38 {offsets = [0, 24], sizes = [8, 8], strides = [1, 1]} : vector<16x32xbf16> to vector<8x8xbf16>
    %116 = vector.extract_strided_slice %40 {offsets = [0, 24], sizes = [8, 8], strides = [1, 1]} : vector<16x32xbf16> to vector<8x8xbf16>
    "tpu.trace_start"() <{level = 10 : i32, message = "qd,kd->qk"}> : () -> ()
    %cst_44 = arith.constant dense<0.000000e+00> : vector<8x8xf32>
    %117 = tpu.matmul %114, %115, %cst_44 {dimension_numbers = #tpu.dot_dimension_numbers<[1], [1], [0], [0], [0, 0, 1, 0], [], []>} : vector<8x8xbf16>, vector<8x8xbf16>, vector<8x8xf32> -> vector<8x8xf32>
    %cst_45 = arith.constant -1.000000e+09 : f32
    "tpu.trace_stop"() : () -> ()
    %118 = vector.broadcast %cst_45 : f32 to vector<8x8xf32>
    %119 = arith.select %46, %117, %118 : vector<8x8xi1>, vector<8x8xf32>
    %cst_46 = arith.constant dense<0xFF800000> : vector<8xf32>
    %120 = vector.multi_reduction <maximumf>, %119, %cst_46 [1] : vector<8x8xf32> to vector<8xf32>
    %121 = vector.shape_cast %120 : vector<8xf32> to vector<8x1xf32>
    %122 = vector.broadcast %121 : vector<8x1xf32> to vector<8x8xf32>
    %123 = arith.subf %119, %122 : vector<8x8xf32>
    %124 = math.exp %123 : vector<8x8xf32>
    %cst_47 = arith.constant dense<0.000000e+00> : vector<8xf32>
    %125 = vector.multi_reduction <add>, %124, %cst_47 [1] : vector<8x8xf32> to vector<8xf32>
    %126 = vector.shape_cast %125 : vector<8xf32> to vector<8x1xf32>
    %127 = tpu.reciprocal %126 {approx = true} : vector<8x1xf32> -> vector<8x1xf32>
    %128 = vector.broadcast %127 : vector<8x1xf32> to vector<8x8xf32>
    %129 = arith.mulf %124, %128 : vector<8x8xf32>
    %130 = arith.truncf %129 : vector<8x8xf32> to vector<8x8xbf16>
    %cst_48 = arith.constant dense<0.000000e+00> : vector<8x8xf32>
    %131 = tpu.matmul %130, %116, %cst_48 {dimension_numbers = #tpu.dot_dimension_numbers<[1], [0], [0], [1], [0, 0, 1, 1], [], []>} : vector<8x8xbf16>, vector<8x8xbf16>, vector<8x8xf32> -> vector<8x8xf32>
    %132 = arith.truncf %131 : vector<8x8xf32> to vector<8x8xbf16>
    %133 = vector.extract_strided_slice %42 {offsets = [24, 0], sizes = [8, 32], strides = [1, 1]} : vector<32x32xbf16> to vector<8x32xbf16>
    %cst_49 = arith.constant dense<0.000000e+00> : vector<8x32xf32>
    %134 = tpu.matmul %132, %133, %cst_49 {dimension_numbers = #tpu.dot_dimension_numbers<[1], [0], [0], [1], [0, 0, 1, 1], [], []>} : vector<8x8xbf16>, vector<8x32xbf16>, vector<8x32xf32> -> vector<8x32xf32>
    %135 = arith.addf %113, %134 : vector<8x32xf32>
    %c1 = arith.constant 1 : index
    %c0_50 = arith.constant 0 : index
    %c0_51 = arith.constant 0 : index
    %136 = vector.load %arg1[%c1, %c0_50, %c0_51] : memref<2x8x8xf32, #tpu.memory_space<vmem>>, vector<1x8x8xf32>
    %137 = vector.shape_cast %136 : vector<1x8x8xf32> to vector<8x8xf32>
    %cst_52 = arith.constant 0.000000e+00 : f32
    %138 = vector.broadcast %cst_52 : f32 to vector<8x8xf32>
    %139 = arith.cmpf ogt, %137, %138 : vector<8x8xf32>
    %cst_53 = arith.constant 0.000000e+00 : f32
    %140 = vector.broadcast %cst_53 : f32 to vector<8x32xf32>
    %141 = vector.extract_strided_slice %36 {offsets = [8, 0], sizes = [8, 8], strides = [1, 1]} : vector<16x32xbf16> to vector<8x8xbf16>
    %142 = vector.extract_strided_slice %38 {offsets = [8, 0], sizes = [8, 8], strides = [1, 1]} : vector<16x32xbf16> to vector<8x8xbf16>
    %143 = vector.extract_strided_slice %40 {offsets = [8, 0], sizes = [8, 8], strides = [1, 1]} : vector<16x32xbf16> to vector<8x8xbf16>
    "tpu.trace_start"() <{level = 10 : i32, message = "qd,kd->qk"}> : () -> ()
    %cst_54 = arith.constant dense<0.000000e+00> : vector<8x8xf32>
    %144 = tpu.matmul %141, %142, %cst_54 {dimension_numbers = #tpu.dot_dimension_numbers<[1], [1], [0], [0], [0, 0, 1, 0], [], []>} : vector<8x8xbf16>, vector<8x8xbf16>, vector<8x8xf32> -> vector<8x8xf32>
    %cst_55 = arith.constant -1.000000e+09 : f32
    "tpu.trace_stop"() : () -> ()
    %145 = vector.broadcast %cst_55 : f32 to vector<8x8xf32>
    %146 = arith.select %139, %144, %145 : vector<8x8xi1>, vector<8x8xf32>
    %cst_56 = arith.constant dense<0xFF800000> : vector<8xf32>
    %147 = vector.multi_reduction <maximumf>, %146, %cst_56 [1] : vector<8x8xf32> to vector<8xf32>
    %148 = vector.shape_cast %147 : vector<8xf32> to vector<8x1xf32>
    %149 = vector.broadcast %148 : vector<8x1xf32> to vector<8x8xf32>
    %150 = arith.subf %146, %149 : vector<8x8xf32>
    %151 = math.exp %150 : vector<8x8xf32>
    %cst_57 = arith.constant dense<0.000000e+00> : vector<8xf32>
    %152 = vector.multi_reduction <add>, %151, %cst_57 [1] : vector<8x8xf32> to vector<8xf32>
    %153 = vector.shape_cast %152 : vector<8xf32> to vector<8x1xf32>
    %154 = tpu.reciprocal %153 {approx = true} : vector<8x1xf32> -> vector<8x1xf32>
    %155 = vector.broadcast %154 : vector<8x1xf32> to vector<8x8xf32>
    %156 = arith.mulf %151, %155 : vector<8x8xf32>
    %157 = arith.truncf %156 : vector<8x8xf32> to vector<8x8xbf16>
    %cst_58 = arith.constant dense<0.000000e+00> : vector<8x8xf32>
    %158 = tpu.matmul %157, %143, %cst_58 {dimension_numbers = #tpu.dot_dimension_numbers<[1], [0], [0], [1], [0, 0, 1, 1], [], []>} : vector<8x8xbf16>, vector<8x8xbf16>, vector<8x8xf32> -> vector<8x8xf32>
    %159 = arith.truncf %158 : vector<8x8xf32> to vector<8x8xbf16>
    %160 = vector.extract_strided_slice %42 {offsets = [0, 0], sizes = [8, 32], strides = [1, 1]} : vector<32x32xbf16> to vector<8x32xbf16>
    %cst_59 = arith.constant dense<0.000000e+00> : vector<8x32xf32>
    %161 = tpu.matmul %159, %160, %cst_59 {dimension_numbers = #tpu.dot_dimension_numbers<[1], [0], [0], [1], [0, 0, 1, 1], [], []>} : vector<8x8xbf16>, vector<8x32xbf16>, vector<8x32xf32> -> vector<8x32xf32>
    %162 = arith.addf %140, %161 : vector<8x32xf32>
    %163 = vector.extract_strided_slice %36 {offsets = [8, 8], sizes = [8, 8], strides = [1, 1]} : vector<16x32xbf16> to vector<8x8xbf16>
    %164 = vector.extract_strided_slice %38 {offsets = [8, 8], sizes = [8, 8], strides = [1, 1]} : vector<16x32xbf16> to vector<8x8xbf16>
    %165 = vector.extract_strided_slice %40 {offsets = [8, 8], sizes = [8, 8], strides = [1, 1]} : vector<16x32xbf16> to vector<8x8xbf16>
    "tpu.trace_start"() <{level = 10 : i32, message = "qd,kd->qk"}> : () -> ()
    %cst_60 = arith.constant dense<0.000000e+00> : vector<8x8xf32>
    %166 = tpu.matmul %163, %164, %cst_60 {dimension_numbers = #tpu.dot_dimension_numbers<[1], [1], [0], [0], [0, 0, 1, 0], [], []>} : vector<8x8xbf16>, vector<8x8xbf16>, vector<8x8xf32> -> vector<8x8xf32>
    %cst_61 = arith.constant -1.000000e+09 : f32
    "tpu.trace_stop"() : () -> ()
    %167 = vector.broadcast %cst_61 : f32 to vector<8x8xf32>
    %168 = arith.select %139, %166, %167 : vector<8x8xi1>, vector<8x8xf32>
    %cst_62 = arith.constant dense<0xFF800000> : vector<8xf32>
    %169 = vector.multi_reduction <maximumf>, %168, %cst_62 [1] : vector<8x8xf32> to vector<8xf32>
    %170 = vector.shape_cast %169 : vector<8xf32> to vector<8x1xf32>
    %171 = vector.broadcast %170 : vector<8x1xf32> to vector<8x8xf32>
    %172 = arith.subf %168, %171 : vector<8x8xf32>
    %173 = math.exp %172 : vector<8x8xf32>
    %cst_63 = arith.constant dense<0.000000e+00> : vector<8xf32>
    %174 = vector.multi_reduction <add>, %173, %cst_63 [1] : vector<8x8xf32> to vector<8xf32>
    %175 = vector.shape_cast %174 : vector<8xf32> to vector<8x1xf32>
    %176 = tpu.reciprocal %175 {approx = true} : vector<8x1xf32> -> vector<8x1xf32>
    %177 = vector.broadcast %176 : vector<8x1xf32> to vector<8x8xf32>
    %178 = arith.mulf %173, %177 : vector<8x8xf32>
    %179 = arith.truncf %178 : vector<8x8xf32> to vector<8x8xbf16>
    %cst_64 = arith.constant dense<0.000000e+00> : vector<8x8xf32>
    %180 = tpu.matmul %179, %165, %cst_64 {dimension_numbers = #tpu.dot_dimension_numbers<[1], [0], [0], [1], [0, 0, 1, 1], [], []>} : vector<8x8xbf16>, vector<8x8xbf16>, vector<8x8xf32> -> vector<8x8xf32>
    %181 = arith.truncf %180 : vector<8x8xf32> to vector<8x8xbf16>
    %182 = vector.extract_strided_slice %42 {offsets = [8, 0], sizes = [8, 32], strides = [1, 1]} : vector<32x32xbf16> to vector<8x32xbf16>
    %cst_65 = arith.constant dense<0.000000e+00> : vector<8x32xf32>
    %183 = tpu.matmul %181, %182, %cst_65 {dimension_numbers = #tpu.dot_dimension_numbers<[1], [0], [0], [1], [0, 0, 1, 1], [], []>} : vector<8x8xbf16>, vector<8x32xbf16>, vector<8x32xf32> -> vector<8x32xf32>
    %184 = arith.addf %162, %183 : vector<8x32xf32>
    %185 = vector.extract_strided_slice %36 {offsets = [8, 16], sizes = [8, 8], strides = [1, 1]} : vector<16x32xbf16> to vector<8x8xbf16>
    %186 = vector.extract_strided_slice %38 {offsets = [8, 16], sizes = [8, 8], strides = [1, 1]} : vector<16x32xbf16> to vector<8x8xbf16>
    %187 = vector.extract_strided_slice %40 {offsets = [8, 16], sizes = [8, 8], strides = [1, 1]} : vector<16x32xbf16> to vector<8x8xbf16>
    "tpu.trace_start"() <{level = 10 : i32, message = "qd,kd->qk"}> : () -> ()
    %cst_66 = arith.constant dense<0.000000e+00> : vector<8x8xf32>
    %188 = tpu.matmul %185, %186, %cst_66 {dimension_numbers = #tpu.dot_dimension_numbers<[1], [1], [0], [0], [0, 0, 1, 0], [], []>} : vector<8x8xbf16>, vector<8x8xbf16>, vector<8x8xf32> -> vector<8x8xf32>
    %cst_67 = arith.constant -1.000000e+09 : f32
    "tpu.trace_stop"() : () -> ()
    %189 = vector.broadcast %cst_67 : f32 to vector<8x8xf32>
    %190 = arith.select %139, %188, %189 : vector<8x8xi1>, vector<8x8xf32>
    %cst_68 = arith.constant dense<0xFF800000> : vector<8xf32>
    %191 = vector.multi_reduction <maximumf>, %190, %cst_68 [1] : vector<8x8xf32> to vector<8xf32>
    %192 = vector.shape_cast %191 : vector<8xf32> to vector<8x1xf32>
    %193 = vector.broadcast %192 : vector<8x1xf32> to vector<8x8xf32>
    %194 = arith.subf %190, %193 : vector<8x8xf32>
    %195 = math.exp %194 : vector<8x8xf32>
    %cst_69 = arith.constant dense<0.000000e+00> : vector<8xf32>
    %196 = vector.multi_reduction <add>, %195, %cst_69 [1] : vector<8x8xf32> to vector<8xf32>
    %197 = vector.shape_cast %196 : vector<8xf32> to vector<8x1xf32>
    %198 = tpu.reciprocal %197 {approx = true} : vector<8x1xf32> -> vector<8x1xf32>
    %199 = vector.broadcast %198 : vector<8x1xf32> to vector<8x8xf32>
    %200 = arith.mulf %195, %199 : vector<8x8xf32>
    %201 = arith.truncf %200 : vector<8x8xf32> to vector<8x8xbf16>
    %cst_70 = arith.constant dense<0.000000e+00> : vector<8x8xf32>
    %202 = tpu.matmul %201, %187, %cst_70 {dimension_numbers = #tpu.dot_dimension_numbers<[1], [0], [0], [1], [0, 0, 1, 1], [], []>} : vector<8x8xbf16>, vector<8x8xbf16>, vector<8x8xf32> -> vector<8x8xf32>
    %203 = arith.truncf %202 : vector<8x8xf32> to vector<8x8xbf16>
    %204 = vector.extract_strided_slice %42 {offsets = [16, 0], sizes = [8, 32], strides = [1, 1]} : vector<32x32xbf16> to vector<8x32xbf16>
    %cst_71 = arith.constant dense<0.000000e+00> : vector<8x32xf32>
    %205 = tpu.matmul %203, %204, %cst_71 {dimension_numbers = #tpu.dot_dimension_numbers<[1], [0], [0], [1], [0, 0, 1, 1], [], []>} : vector<8x8xbf16>, vector<8x32xbf16>, vector<8x32xf32> -> vector<8x32xf32>
    %206 = arith.addf %184, %205 : vector<8x32xf32>
    %207 = vector.extract_strided_slice %36 {offsets = [8, 24], sizes = [8, 8], strides = [1, 1]} : vector<16x32xbf16> to vector<8x8xbf16>
    %208 = vector.extract_strided_slice %38 {offsets = [8, 24], sizes = [8, 8], strides = [1, 1]} : vector<16x32xbf16> to vector<8x8xbf16>
    %209 = vector.extract_strided_slice %40 {offsets = [8, 24], sizes = [8, 8], strides = [1, 1]} : vector<16x32xbf16> to vector<8x8xbf16>
    "tpu.trace_start"() <{level = 10 : i32, message = "qd,kd->qk"}> : () -> ()
    %cst_72 = arith.constant dense<0.000000e+00> : vector<8x8xf32>
    %210 = tpu.matmul %207, %208, %cst_72 {dimension_numbers = #tpu.dot_dimension_numbers<[1], [1], [0], [0], [0, 0, 1, 0], [], []>} : vector<8x8xbf16>, vector<8x8xbf16>, vector<8x8xf32> -> vector<8x8xf32>
    %cst_73 = arith.constant -1.000000e+09 : f32
    "tpu.trace_stop"() : () -> ()
    %211 = vector.broadcast %cst_73 : f32 to vector<8x8xf32>
    %212 = arith.select %139, %210, %211 : vector<8x8xi1>, vector<8x8xf32>
    %cst_74 = arith.constant dense<0xFF800000> : vector<8xf32>
    %213 = vector.multi_reduction <maximumf>, %212, %cst_74 [1] : vector<8x8xf32> to vector<8xf32>
    %214 = vector.shape_cast %213 : vector<8xf32> to vector<8x1xf32>
    %215 = vector.broadcast %214 : vector<8x1xf32> to vector<8x8xf32>
    %216 = arith.subf %212, %215 : vector<8x8xf32>
    %217 = math.exp %216 : vector<8x8xf32>
    %cst_75 = arith.constant dense<0.000000e+00> : vector<8xf32>
    %218 = vector.multi_reduction <add>, %217, %cst_75 [1] : vector<8x8xf32> to vector<8xf32>
    %219 = vector.shape_cast %218 : vector<8xf32> to vector<8x1xf32>
    %220 = tpu.reciprocal %219 {approx = true} : vector<8x1xf32> -> vector<8x1xf32>
    %221 = vector.broadcast %220 : vector<8x1xf32> to vector<8x8xf32>
    %222 = arith.mulf %217, %221 : vector<8x8xf32>
    %223 = arith.truncf %222 : vector<8x8xf32> to vector<8x8xbf16>
    %cst_76 = arith.constant dense<0.000000e+00> : vector<8x8xf32>
    %224 = tpu.matmul %223, %209, %cst_76 {dimension_numbers = #tpu.dot_dimension_numbers<[1], [0], [0], [1], [0, 0, 1, 1], [], []>} : vector<8x8xbf16>, vector<8x8xbf16>, vector<8x8xf32> -> vector<8x8xf32>
    %225 = arith.truncf %224 : vector<8x8xf32> to vector<8x8xbf16>
    %226 = vector.extract_strided_slice %42 {offsets = [24, 0], sizes = [8, 32], strides = [1, 1]} : vector<32x32xbf16> to vector<8x32xbf16>
    %cst_77 = arith.constant dense<0.000000e+00> : vector<8x32xf32>
    %227 = tpu.matmul %225, %226, %cst_77 {dimension_numbers = #tpu.dot_dimension_numbers<[1], [0], [0], [1], [0, 0, 1, 1], [], []>} : vector<8x8xbf16>, vector<8x32xbf16>, vector<8x32xf32> -> vector<8x32xf32>
    %228 = arith.addf %206, %227 : vector<8x32xf32>
    %229 = tpu.concatenate %135, %228 in 0 : vector<8x32xf32>, vector<8x32xf32> -> vector<16x32xf32>
    %230 = arith.addf %0, %229 : vector<16x32xf32>
    %c0_78 = arith.constant 0 : index
    %c0_79 = arith.constant 0 : index
    %c0_80 = arith.constant 0 : index
    %231 = vector.load %arg7[%c0_78, %c0_79, %c0_80] : memref<2x1x32xf32, #tpu.memory_space<vmem>>, vector<1x1x32xf32>
    %232 = vector.shape_cast %231 : vector<1x1x32xf32> to vector<1x32xf32>
    %233 = vector.broadcast %232 : vector<1x32xf32> to vector<16x32xf32>
    %234 = arith.addf %230, %233 : vector<16x32xf32>
    %c0_81 = arith.constant 0 : index
    %c0_82 = arith.constant 0 : index
    %c0_83 = arith.constant 0 : index
    %235 = vector.load %arg8[%c0_81, %c0_82, %c0_83] : memref<2x1x32xf32, #tpu.memory_space<vmem>>, vector<1x1x32xf32>
    %236 = vector.shape_cast %235 : vector<1x1x32xf32> to vector<1x32xf32>
    %c0_84 = arith.constant 0 : index
    %c0_85 = arith.constant 0 : index
    %c0_86 = arith.constant 0 : index
    %237 = vector.load %arg9[%c0_84, %c0_85, %c0_86] : memref<2x1x32xf32, #tpu.memory_space<vmem>>, vector<1x1x32xf32>
    %238 = vector.shape_cast %237 : vector<1x1x32xf32> to vector<1x32xf32>
    %cst_87 = arith.constant dense<0.000000e+00> : vector<16xf32>
    %239 = vector.multi_reduction <add>, %234, %cst_87 [1] : vector<16x32xf32> to vector<16xf32>
    %240 = vector.shape_cast %239 : vector<16xf32> to vector<16x1xf32>
    %cst_88 = arith.constant 3.200000e+01 : f32
    %241 = vector.broadcast %cst_88 : f32 to vector<16x1xf32>
    %242 = arith.divf %240, %241 : vector<16x1xf32>
    %243 = vector.broadcast %242 : vector<16x1xf32> to vector<16x32xf32>
    %244 = arith.subf %234, %243 : vector<16x32xf32>
    %245 = arith.mulf %244, %244 : vector<16x32xf32>
    %cst_89 = arith.constant dense<0.000000e+00> : vector<16xf32>
    %246 = vector.multi_reduction <add>, %245, %cst_89 [1] : vector<16x32xf32> to vector<16xf32>
    %247 = vector.shape_cast %246 : vector<16xf32> to vector<16x1xf32>
    %cst_90 = arith.constant 3.200000e+01 : f32
    %248 = vector.broadcast %cst_90 : f32 to vector<16x1xf32>
    %249 = arith.divf %247, %248 : vector<16x1xf32>
    %250 = vector.broadcast %242 : vector<16x1xf32> to vector<16x32xf32>
    %251 = arith.subf %234, %250 : vector<16x32xf32>
    %cst_91 = arith.constant 9.99999997E-7 : f32
    %252 = vector.broadcast %cst_91 : f32 to vector<16x1xf32>
    %253 = arith.addf %249, %252 : vector<16x1xf32>
    %254 = math.rsqrt %253 : vector<16x1xf32>
    %255 = vector.broadcast %254 : vector<16x1xf32> to vector<16x32xf32>
    %256 = arith.mulf %251, %255 : vector<16x32xf32>
    %257 = vector.broadcast %236 : vector<1x32xf32> to vector<16x32xf32>
    %258 = arith.mulf %256, %257 : vector<16x32xf32>
    %259 = vector.broadcast %238 : vector<1x32xf32> to vector<16x32xf32>
    %260 = arith.addf %258, %259 : vector<16x32xf32>
    %261 = arith.truncf %260 : vector<16x32xf32> to vector<16x32xbf16>
    %c0_92 = arith.constant 0 : index
    %c0_93 = arith.constant 0 : index
    %c0_94 = arith.constant 0 : index
    %262 = vector.load %arg10[%c0_92, %c0_93, %c0_94] : memref<2x32x64xbf16, #tpu.memory_space<vmem>>, vector<1x32x64xbf16>
    %263 = vector.shape_cast %262 : vector<1x32x64xbf16> to vector<32x64xbf16>
    %cst_95 = arith.constant dense<0.000000e+00> : vector<16x64xf32>
    %264 = tpu.matmul %261, %263, %cst_95 {dimension_numbers = #tpu.dot_dimension_numbers<[1], [0], [0], [1], [0, 0, 1, 1], [], []>} : vector<16x32xbf16>, vector<32x64xbf16>, vector<16x64xf32> -> vector<16x64xf32>
    %c0_96 = arith.constant 0 : index
    %c0_97 = arith.constant 0 : index
    %c0_98 = arith.constant 0 : index
    %265 = vector.load %arg11[%c0_96, %c0_97, %c0_98] : memref<2x1x64xf32, #tpu.memory_space<vmem>>, vector<1x1x64xf32>
    %266 = vector.shape_cast %265 : vector<1x1x64xf32> to vector<1x64xf32>
    %267 = vector.broadcast %266 : vector<1x64xf32> to vector<16x64xf32>
    %268 = arith.addf %264, %267 : vector<16x64xf32>
    %cst_99 = arith.constant 0.000000e+00 : f32
    %269 = vector.broadcast %cst_99 : f32 to vector<16x64xf32>
    %270 = arith.maximumf %268, %269 : vector<16x64xf32>
    %271 = arith.truncf %270 : vector<16x64xf32> to vector<16x64xbf16>
    %c0_100 = arith.constant 0 : index
    %c0_101 = arith.constant 0 : index
    %c0_102 = arith.constant 0 : index
    %272 = vector.load %arg12[%c0_100, %c0_101, %c0_102] : memref<2x64x32xbf16, #tpu.memory_space<vmem>>, vector<1x64x32xbf16>
    %273 = vector.shape_cast %272 : vector<1x64x32xbf16> to vector<64x32xbf16>
    %cst_103 = arith.constant dense<0.000000e+00> : vector<16x32xf32>
    %274 = tpu.matmul %271, %273, %cst_103 {dimension_numbers = #tpu.dot_dimension_numbers<[1], [0], [0], [1], [0, 0, 1, 1], [], []>} : vector<16x64xbf16>, vector<64x32xbf16>, vector<16x32xf32> -> vector<16x32xf32>
    %275 = arith.addf %234, %274 : vector<16x32xf32>
    %c0_104 = arith.constant 0 : index
    %c0_105 = arith.constant 0 : index
    %c0_106 = arith.constant 0 : index
    %276 = vector.load %arg13[%c0_104, %c0_105, %c0_106] : memref<2x1x32xf32, #tpu.memory_space<vmem>>, vector<1x1x32xf32>
    %277 = vector.shape_cast %276 : vector<1x1x32xf32> to vector<1x32xf32>
    %278 = vector.broadcast %277 : vector<1x32xf32> to vector<16x32xf32>
    %279 = arith.addf %275, %278 : vector<16x32xf32>
    %c1_107 = arith.constant 1 : index
    %c0_108 = arith.constant 0 : index
    %c0_109 = arith.constant 0 : index
    %280 = vector.load %arg2[%c1_107, %c0_108, %c0_109] : memref<2x1x32xf32, #tpu.memory_space<vmem>>, vector<1x1x32xf32>
    %281 = vector.shape_cast %280 : vector<1x1x32xf32> to vector<1x32xf32>
    %c1_110 = arith.constant 1 : index
    %c0_111 = arith.constant 0 : index
    %c0_112 = arith.constant 0 : index
    %282 = vector.load %arg3[%c1_110, %c0_111, %c0_112] : memref<2x1x32xf32, #tpu.memory_space<vmem>>, vector<1x1x32xf32>
    %283 = vector.shape_cast %282 : vector<1x1x32xf32> to vector<1x32xf32>
    %cst_113 = arith.constant dense<0.000000e+00> : vector<16xf32>
    %284 = vector.multi_reduction <add>, %279, %cst_113 [1] : vector<16x32xf32> to vector<16xf32>
    %285 = vector.shape_cast %284 : vector<16xf32> to vector<16x1xf32>
    %cst_114 = arith.constant 3.200000e+01 : f32
    %286 = vector.broadcast %cst_114 : f32 to vector<16x1xf32>
    %287 = arith.divf %285, %286 : vector<16x1xf32>
    %288 = vector.broadcast %287 : vector<16x1xf32> to vector<16x32xf32>
    %289 = arith.subf %279, %288 : vector<16x32xf32>
    %290 = arith.mulf %289, %289 : vector<16x32xf32>
    %cst_115 = arith.constant dense<0.000000e+00> : vector<16xf32>
    %291 = vector.multi_reduction <add>, %290, %cst_115 [1] : vector<16x32xf32> to vector<16xf32>
    %292 = vector.shape_cast %291 : vector<16xf32> to vector<16x1xf32>
    %cst_116 = arith.constant 3.200000e+01 : f32
    %293 = vector.broadcast %cst_116 : f32 to vector<16x1xf32>
    %294 = arith.divf %292, %293 : vector<16x1xf32>
    %295 = vector.broadcast %287 : vector<16x1xf32> to vector<16x32xf32>
    %296 = arith.subf %279, %295 : vector<16x32xf32>
    %cst_117 = arith.constant 9.99999997E-7 : f32
    %297 = vector.broadcast %cst_117 : f32 to vector<16x1xf32>
    %298 = arith.addf %294, %297 : vector<16x1xf32>
    %299 = math.rsqrt %298 : vector<16x1xf32>
    %300 = vector.broadcast %299 : vector<16x1xf32> to vector<16x32xf32>
    %301 = arith.mulf %296, %300 : vector<16x32xf32>
    %302 = vector.broadcast %281 : vector<1x32xf32> to vector<16x32xf32>
    %303 = arith.mulf %301, %302 : vector<16x32xf32>
    %304 = vector.broadcast %283 : vector<1x32xf32> to vector<16x32xf32>
    %305 = arith.addf %303, %304 : vector<16x32xf32>
    %306 = arith.truncf %305 : vector<16x32xf32> to vector<16x32xbf16>
    %c1_118 = arith.constant 1 : index
    %c0_119 = arith.constant 0 : index
    %c0_120 = arith.constant 0 : index
    %307 = vector.load %arg4[%c1_118, %c0_119, %c0_120] : memref<2x32x96xbf16, #tpu.memory_space<vmem>>, vector<1x32x96xbf16>
    %308 = vector.shape_cast %307 : vector<1x32x96xbf16> to vector<32x96xbf16>
    %cst_121 = arith.constant dense<0.000000e+00> : vector<16x96xf32>
    %309 = tpu.matmul %306, %308, %cst_121 {dimension_numbers = #tpu.dot_dimension_numbers<[1], [0], [0], [1], [0, 0, 1, 1], [], []>} : vector<16x32xbf16>, vector<32x96xbf16>, vector<16x96xf32> -> vector<16x96xf32>
    %c1_122 = arith.constant 1 : index
    %c0_123 = arith.constant 0 : index
    %c0_124 = arith.constant 0 : index
    %310 = vector.load %arg5[%c1_122, %c0_123, %c0_124] : memref<2x1x96xf32, #tpu.memory_space<vmem>>, vector<1x1x96xf32>
    %311 = vector.shape_cast %310 : vector<1x1x96xf32> to vector<1x96xf32>
    %312 = vector.broadcast %311 : vector<1x96xf32> to vector<16x96xf32>
    %313 = arith.addf %309, %312 : vector<16x96xf32>
    %314 = vector.extract_strided_slice %313 {offsets = [0, 0], sizes = [16, 32], strides = [1, 1]} : vector<16x96xf32> to vector<16x32xf32>
    %315 = arith.truncf %314 : vector<16x32xf32> to vector<16x32xbf16>
    %316 = vector.extract_strided_slice %313 {offsets = [0, 32], sizes = [16, 32], strides = [1, 1]} : vector<16x96xf32> to vector<16x32xf32>
    %317 = arith.truncf %316 : vector<16x32xf32> to vector<16x32xbf16>
    %318 = vector.extract_strided_slice %313 {offsets = [0, 64], sizes = [16, 32], strides = [1, 1]} : vector<16x96xf32> to vector<16x32xf32>
    %319 = arith.truncf %318 : vector<16x32xf32> to vector<16x32xbf16>
    %c1_125 = arith.constant 1 : index
    %c0_126 = arith.constant 0 : index
    %c0_127 = arith.constant 0 : index
    %320 = vector.load %arg6[%c1_125, %c0_126, %c0_127] : memref<2x32x32xbf16, #tpu.memory_space<vmem>>, vector<1x32x32xbf16>
    %321 = vector.shape_cast %320 : vector<1x32x32xbf16> to vector<32x32xbf16>
    %c0_128 = arith.constant 0 : index
    %c0_129 = arith.constant 0 : index
    %c0_130 = arith.constant 0 : index
    %322 = vector.load %arg1[%c0_128, %c0_129, %c0_130] : memref<2x8x8xf32, #tpu.memory_space<vmem>>, vector<1x8x8xf32>
    %323 = vector.shape_cast %322 : vector<1x8x8xf32> to vector<8x8xf32>
    %cst_131 = arith.constant 0.000000e+00 : f32
    %324 = vector.broadcast %cst_131 : f32 to vector<8x8xf32>
    %325 = arith.cmpf ogt, %323, %324 : vector<8x8xf32>
    %cst_132 = arith.constant 0.000000e+00 : f32
    %326 = vector.broadcast %cst_132 : f32 to vector<8x32xf32>
    %327 = vector.extract_strided_slice %315 {offsets = [0, 0], sizes = [8, 8], strides = [1, 1]} : vector<16x32xbf16> to vector<8x8xbf16>
    %328 = vector.extract_strided_slice %317 {offsets = [0, 0], sizes = [8, 8], strides = [1, 1]} : vector<16x32xbf16> to vector<8x8xbf16>
    %329 = vector.extract_strided_slice %319 {offsets = [0, 0], sizes = [8, 8], strides = [1, 1]} : vector<16x32xbf16> to vector<8x8xbf16>
    "tpu.trace_start"() <{level = 10 : i32, message = "qd,kd->qk"}> : () -> ()
    %cst_133 = arith.constant dense<0.000000e+00> : vector<8x8xf32>
    %330 = tpu.matmul %327, %328, %cst_133 {dimension_numbers = #tpu.dot_dimension_numbers<[1], [1], [0], [0], [0, 0, 1, 0], [], []>} : vector<8x8xbf16>, vector<8x8xbf16>, vector<8x8xf32> -> vector<8x8xf32>
    %cst_134 = arith.constant -1.000000e+09 : f32
    "tpu.trace_stop"() : () -> ()
    %331 = vector.broadcast %cst_134 : f32 to vector<8x8xf32>
    %332 = arith.select %325, %330, %331 : vector<8x8xi1>, vector<8x8xf32>
    %cst_135 = arith.constant dense<0xFF800000> : vector<8xf32>
    %333 = vector.multi_reduction <maximumf>, %332, %cst_135 [1] : vector<8x8xf32> to vector<8xf32>
    %334 = vector.shape_cast %333 : vector<8xf32> to vector<8x1xf32>
    %335 = vector.broadcast %334 : vector<8x1xf32> to vector<8x8xf32>
    %336 = arith.subf %332, %335 : vector<8x8xf32>
    %337 = math.exp %336 : vector<8x8xf32>
    %cst_136 = arith.constant dense<0.000000e+00> : vector<8xf32>
    %338 = vector.multi_reduction <add>, %337, %cst_136 [1] : vector<8x8xf32> to vector<8xf32>
    %339 = vector.shape_cast %338 : vector<8xf32> to vector<8x1xf32>
    %340 = tpu.reciprocal %339 {approx = true} : vector<8x1xf32> -> vector<8x1xf32>
    %341 = vector.broadcast %340 : vector<8x1xf32> to vector<8x8xf32>
    %342 = arith.mulf %337, %341 : vector<8x8xf32>
    %343 = arith.truncf %342 : vector<8x8xf32> to vector<8x8xbf16>
    %cst_137 = arith.constant dense<0.000000e+00> : vector<8x8xf32>
    %344 = tpu.matmul %343, %329, %cst_137 {dimension_numbers = #tpu.dot_dimension_numbers<[1], [0], [0], [1], [0, 0, 1, 1], [], []>} : vector<8x8xbf16>, vector<8x8xbf16>, vector<8x8xf32> -> vector<8x8xf32>
    %345 = arith.truncf %344 : vector<8x8xf32> to vector<8x8xbf16>
    %346 = vector.extract_strided_slice %321 {offsets = [0, 0], sizes = [8, 32], strides = [1, 1]} : vector<32x32xbf16> to vector<8x32xbf16>
    %cst_138 = arith.constant dense<0.000000e+00> : vector<8x32xf32>
    %347 = tpu.matmul %345, %346, %cst_138 {dimension_numbers = #tpu.dot_dimension_numbers<[1], [0], [0], [1], [0, 0, 1, 1], [], []>} : vector<8x8xbf16>, vector<8x32xbf16>, vector<8x32xf32> -> vector<8x32xf32>
    %348 = arith.addf %326, %347 : vector<8x32xf32>
    %349 = vector.extract_strided_slice %315 {offsets = [0, 8], sizes = [8, 8], strides = [1, 1]} : vector<16x32xbf16> to vector<8x8xbf16>
    %350 = vector.extract_strided_slice %317 {offsets = [0, 8], sizes = [8, 8], strides = [1, 1]} : vector<16x32xbf16> to vector<8x8xbf16>
    %351 = vector.extract_strided_slice %319 {offsets = [0, 8], sizes = [8, 8], strides = [1, 1]} : vector<16x32xbf16> to vector<8x8xbf16>
    "tpu.trace_start"() <{level = 10 : i32, message = "qd,kd->qk"}> : () -> ()
    %cst_139 = arith.constant dense<0.000000e+00> : vector<8x8xf32>
    %352 = tpu.matmul %349, %350, %cst_139 {dimension_numbers = #tpu.dot_dimension_numbers<[1], [1], [0], [0], [0, 0, 1, 0], [], []>} : vector<8x8xbf16>, vector<8x8xbf16>, vector<8x8xf32> -> vector<8x8xf32>
    %cst_140 = arith.constant -1.000000e+09 : f32
    "tpu.trace_stop"() : () -> ()
    %353 = vector.broadcast %cst_140 : f32 to vector<8x8xf32>
    %354 = arith.select %325, %352, %353 : vector<8x8xi1>, vector<8x8xf32>
    %cst_141 = arith.constant dense<0xFF800000> : vector<8xf32>
    %355 = vector.multi_reduction <maximumf>, %354, %cst_141 [1] : vector<8x8xf32> to vector<8xf32>
    %356 = vector.shape_cast %355 : vector<8xf32> to vector<8x1xf32>
    %357 = vector.broadcast %356 : vector<8x1xf32> to vector<8x8xf32>
    %358 = arith.subf %354, %357 : vector<8x8xf32>
    %359 = math.exp %358 : vector<8x8xf32>
    %cst_142 = arith.constant dense<0.000000e+00> : vector<8xf32>
    %360 = vector.multi_reduction <add>, %359, %cst_142 [1] : vector<8x8xf32> to vector<8xf32>
    %361 = vector.shape_cast %360 : vector<8xf32> to vector<8x1xf32>
    %362 = tpu.reciprocal %361 {approx = true} : vector<8x1xf32> -> vector<8x1xf32>
    %363 = vector.broadcast %362 : vector<8x1xf32> to vector<8x8xf32>
    %364 = arith.mulf %359, %363 : vector<8x8xf32>
    %365 = arith.truncf %364 : vector<8x8xf32> to vector<8x8xbf16>
    %cst_143 = arith.constant dense<0.000000e+00> : vector<8x8xf32>
    %366 = tpu.matmul %365, %351, %cst_143 {dimension_numbers = #tpu.dot_dimension_numbers<[1], [0], [0], [1], [0, 0, 1, 1], [], []>} : vector<8x8xbf16>, vector<8x8xbf16>, vector<8x8xf32> -> vector<8x8xf32>
    %367 = arith.truncf %366 : vector<8x8xf32> to vector<8x8xbf16>
    %368 = vector.extract_strided_slice %321 {offsets = [8, 0], sizes = [8, 32], strides = [1, 1]} : vector<32x32xbf16> to vector<8x32xbf16>
    %cst_144 = arith.constant dense<0.000000e+00> : vector<8x32xf32>
    %369 = tpu.matmul %367, %368, %cst_144 {dimension_numbers = #tpu.dot_dimension_numbers<[1], [0], [0], [1], [0, 0, 1, 1], [], []>} : vector<8x8xbf16>, vector<8x32xbf16>, vector<8x32xf32> -> vector<8x32xf32>
    %370 = arith.addf %348, %369 : vector<8x32xf32>
    %371 = vector.extract_strided_slice %315 {offsets = [0, 16], sizes = [8, 8], strides = [1, 1]} : vector<16x32xbf16> to vector<8x8xbf16>
    %372 = vector.extract_strided_slice %317 {offsets = [0, 16], sizes = [8, 8], strides = [1, 1]} : vector<16x32xbf16> to vector<8x8xbf16>
    %373 = vector.extract_strided_slice %319 {offsets = [0, 16], sizes = [8, 8], strides = [1, 1]} : vector<16x32xbf16> to vector<8x8xbf16>
    "tpu.trace_start"() <{level = 10 : i32, message = "qd,kd->qk"}> : () -> ()
    %cst_145 = arith.constant dense<0.000000e+00> : vector<8x8xf32>
    %374 = tpu.matmul %371, %372, %cst_145 {dimension_numbers = #tpu.dot_dimension_numbers<[1], [1], [0], [0], [0, 0, 1, 0], [], []>} : vector<8x8xbf16>, vector<8x8xbf16>, vector<8x8xf32> -> vector<8x8xf32>
    %cst_146 = arith.constant -1.000000e+09 : f32
    "tpu.trace_stop"() : () -> ()
    %375 = vector.broadcast %cst_146 : f32 to vector<8x8xf32>
    %376 = arith.select %325, %374, %375 : vector<8x8xi1>, vector<8x8xf32>
    %cst_147 = arith.constant dense<0xFF800000> : vector<8xf32>
    %377 = vector.multi_reduction <maximumf>, %376, %cst_147 [1] : vector<8x8xf32> to vector<8xf32>
    %378 = vector.shape_cast %377 : vector<8xf32> to vector<8x1xf32>
    %379 = vector.broadcast %378 : vector<8x1xf32> to vector<8x8xf32>
    %380 = arith.subf %376, %379 : vector<8x8xf32>
    %381 = math.exp %380 : vector<8x8xf32>
    %cst_148 = arith.constant dense<0.000000e+00> : vector<8xf32>
    %382 = vector.multi_reduction <add>, %381, %cst_148 [1] : vector<8x8xf32> to vector<8xf32>
    %383 = vector.shape_cast %382 : vector<8xf32> to vector<8x1xf32>
    %384 = tpu.reciprocal %383 {approx = true} : vector<8x1xf32> -> vector<8x1xf32>
    %385 = vector.broadcast %384 : vector<8x1xf32> to vector<8x8xf32>
    %386 = arith.mulf %381, %385 : vector<8x8xf32>
    %387 = arith.truncf %386 : vector<8x8xf32> to vector<8x8xbf16>
    %cst_149 = arith.constant dense<0.000000e+00> : vector<8x8xf32>
    %388 = tpu.matmul %387, %373, %cst_149 {dimension_numbers = #tpu.dot_dimension_numbers<[1], [0], [0], [1], [0, 0, 1, 1], [], []>} : vector<8x8xbf16>, vector<8x8xbf16>, vector<8x8xf32> -> vector<8x8xf32>
    %389 = arith.truncf %388 : vector<8x8xf32> to vector<8x8xbf16>
    %390 = vector.extract_strided_slice %321 {offsets = [16, 0], sizes = [8, 32], strides = [1, 1]} : vector<32x32xbf16> to vector<8x32xbf16>
    %cst_150 = arith.constant dense<0.000000e+00> : vector<8x32xf32>
    %391 = tpu.matmul %389, %390, %cst_150 {dimension_numbers = #tpu.dot_dimension_numbers<[1], [0], [0], [1], [0, 0, 1, 1], [], []>} : vector<8x8xbf16>, vector<8x32xbf16>, vector<8x32xf32> -> vector<8x32xf32>
    %392 = arith.addf %370, %391 : vector<8x32xf32>
    %393 = vector.extract_strided_slice %315 {offsets = [0, 24], sizes = [8, 8], strides = [1, 1]} : vector<16x32xbf16> to vector<8x8xbf16>
    %394 = vector.extract_strided_slice %317 {offsets = [0, 24], sizes = [8, 8], strides = [1, 1]} : vector<16x32xbf16> to vector<8x8xbf16>
    %395 = vector.extract_strided_slice %319 {offsets = [0, 24], sizes = [8, 8], strides = [1, 1]} : vector<16x32xbf16> to vector<8x8xbf16>
    "tpu.trace_start"() <{level = 10 : i32, message = "qd,kd->qk"}> : () -> ()
    %cst_151 = arith.constant dense<0.000000e+00> : vector<8x8xf32>
    %396 = tpu.matmul %393, %394, %cst_151 {dimension_numbers = #tpu.dot_dimension_numbers<[1], [1], [0], [0], [0, 0, 1, 0], [], []>} : vector<8x8xbf16>, vector<8x8xbf16>, vector<8x8xf32> -> vector<8x8xf32>
    %cst_152 = arith.constant -1.000000e+09 : f32
    "tpu.trace_stop"() : () -> ()
    %397 = vector.broadcast %cst_152 : f32 to vector<8x8xf32>
    %398 = arith.select %325, %396, %397 : vector<8x8xi1>, vector<8x8xf32>
    %cst_153 = arith.constant dense<0xFF800000> : vector<8xf32>
    %399 = vector.multi_reduction <maximumf>, %398, %cst_153 [1] : vector<8x8xf32> to vector<8xf32>
    %400 = vector.shape_cast %399 : vector<8xf32> to vector<8x1xf32>
    %401 = vector.broadcast %400 : vector<8x1xf32> to vector<8x8xf32>
    %402 = arith.subf %398, %401 : vector<8x8xf32>
    %403 = math.exp %402 : vector<8x8xf32>
    %cst_154 = arith.constant dense<0.000000e+00> : vector<8xf32>
    %404 = vector.multi_reduction <add>, %403, %cst_154 [1] : vector<8x8xf32> to vector<8xf32>
    %405 = vector.shape_cast %404 : vector<8xf32> to vector<8x1xf32>
    %406 = tpu.reciprocal %405 {approx = true} : vector<8x1xf32> -> vector<8x1xf32>
    %407 = vector.broadcast %406 : vector<8x1xf32> to vector<8x8xf32>
    %408 = arith.mulf %403, %407 : vector<8x8xf32>
    %409 = arith.truncf %408 : vector<8x8xf32> to vector<8x8xbf16>
    %cst_155 = arith.constant dense<0.000000e+00> : vector<8x8xf32>
    %410 = tpu.matmul %409, %395, %cst_155 {dimension_numbers = #tpu.dot_dimension_numbers<[1], [0], [0], [1], [0, 0, 1, 1], [], []>} : vector<8x8xbf16>, vector<8x8xbf16>, vector<8x8xf32> -> vector<8x8xf32>
    %411 = arith.truncf %410 : vector<8x8xf32> to vector<8x8xbf16>
    %412 = vector.extract_strided_slice %321 {offsets = [24, 0], sizes = [8, 32], strides = [1, 1]} : vector<32x32xbf16> to vector<8x32xbf16>
    %cst_156 = arith.constant dense<0.000000e+00> : vector<8x32xf32>
    %413 = tpu.matmul %411, %412, %cst_156 {dimension_numbers = #tpu.dot_dimension_numbers<[1], [0], [0], [1], [0, 0, 1, 1], [], []>} : vector<8x8xbf16>, vector<8x32xbf16>, vector<8x32xf32> -> vector<8x32xf32>
    %414 = arith.addf %392, %413 : vector<8x32xf32>
    %c1_157 = arith.constant 1 : index
    %c0_158 = arith.constant 0 : index
    %c0_159 = arith.constant 0 : index
    %415 = vector.load %arg1[%c1_157, %c0_158, %c0_159] : memref<2x8x8xf32, #tpu.memory_space<vmem>>, vector<1x8x8xf32>
    %416 = vector.shape_cast %415 : vector<1x8x8xf32> to vector<8x8xf32>
    %cst_160 = arith.constant 0.000000e+00 : f32
    %417 = vector.broadcast %cst_160 : f32 to vector<8x8xf32>
    %418 = arith.cmpf ogt, %416, %417 : vector<8x8xf32>
    %cst_161 = arith.constant 0.000000e+00 : f32
    %419 = vector.broadcast %cst_161 : f32 to vector<8x32xf32>
    %420 = vector.extract_strided_slice %315 {offsets = [8, 0], sizes = [8, 8], strides = [1, 1]} : vector<16x32xbf16> to vector<8x8xbf16>
    %421 = vector.extract_strided_slice %317 {offsets = [8, 0], sizes = [8, 8], strides = [1, 1]} : vector<16x32xbf16> to vector<8x8xbf16>
    %422 = vector.extract_strided_slice %319 {offsets = [8, 0], sizes = [8, 8], strides = [1, 1]} : vector<16x32xbf16> to vector<8x8xbf16>
    "tpu.trace_start"() <{level = 10 : i32, message = "qd,kd->qk"}> : () -> ()
    %cst_162 = arith.constant dense<0.000000e+00> : vector<8x8xf32>
    %423 = tpu.matmul %420, %421, %cst_162 {dimension_numbers = #tpu.dot_dimension_numbers<[1], [1], [0], [0], [0, 0, 1, 0], [], []>} : vector<8x8xbf16>, vector<8x8xbf16>, vector<8x8xf32> -> vector<8x8xf32>
    %cst_163 = arith.constant -1.000000e+09 : f32
    "tpu.trace_stop"() : () -> ()
    %424 = vector.broadcast %cst_163 : f32 to vector<8x8xf32>
    %425 = arith.select %418, %423, %424 : vector<8x8xi1>, vector<8x8xf32>
    %cst_164 = arith.constant dense<0xFF800000> : vector<8xf32>
    %426 = vector.multi_reduction <maximumf>, %425, %cst_164 [1] : vector<8x8xf32> to vector<8xf32>
    %427 = vector.shape_cast %426 : vector<8xf32> to vector<8x1xf32>
    %428 = vector.broadcast %427 : vector<8x1xf32> to vector<8x8xf32>
    %429 = arith.subf %425, %428 : vector<8x8xf32>
    %430 = math.exp %429 : vector<8x8xf32>
    %cst_165 = arith.constant dense<0.000000e+00> : vector<8xf32>
    %431 = vector.multi_reduction <add>, %430, %cst_165 [1] : vector<8x8xf32> to vector<8xf32>
    %432 = vector.shape_cast %431 : vector<8xf32> to vector<8x1xf32>
    %433 = tpu.reciprocal %432 {approx = true} : vector<8x1xf32> -> vector<8x1xf32>
    %434 = vector.broadcast %433 : vector<8x1xf32> to vector<8x8xf32>
    %435 = arith.mulf %430, %434 : vector<8x8xf32>
    %436 = arith.truncf %435 : vector<8x8xf32> to vector<8x8xbf16>
    %cst_166 = arith.constant dense<0.000000e+00> : vector<8x8xf32>
    %437 = tpu.matmul %436, %422, %cst_166 {dimension_numbers = #tpu.dot_dimension_numbers<[1], [0], [0], [1], [0, 0, 1, 1], [], []>} : vector<8x8xbf16>, vector<8x8xbf16>, vector<8x8xf32> -> vector<8x8xf32>
    %438 = arith.truncf %437 : vector<8x8xf32> to vector<8x8xbf16>
    %439 = vector.extract_strided_slice %321 {offsets = [0, 0], sizes = [8, 32], strides = [1, 1]} : vector<32x32xbf16> to vector<8x32xbf16>
    %cst_167 = arith.constant dense<0.000000e+00> : vector<8x32xf32>
    %440 = tpu.matmul %438, %439, %cst_167 {dimension_numbers = #tpu.dot_dimension_numbers<[1], [0], [0], [1], [0, 0, 1, 1], [], []>} : vector<8x8xbf16>, vector<8x32xbf16>, vector<8x32xf32> -> vector<8x32xf32>
    %441 = arith.addf %419, %440 : vector<8x32xf32>
    %442 = vector.extract_strided_slice %315 {offsets = [8, 8], sizes = [8, 8], strides = [1, 1]} : vector<16x32xbf16> to vector<8x8xbf16>
    %443 = vector.extract_strided_slice %317 {offsets = [8, 8], sizes = [8, 8], strides = [1, 1]} : vector<16x32xbf16> to vector<8x8xbf16>
    %444 = vector.extract_strided_slice %319 {offsets = [8, 8], sizes = [8, 8], strides = [1, 1]} : vector<16x32xbf16> to vector<8x8xbf16>
    "tpu.trace_start"() <{level = 10 : i32, message = "qd,kd->qk"}> : () -> ()
    %cst_168 = arith.constant dense<0.000000e+00> : vector<8x8xf32>
    %445 = tpu.matmul %442, %443, %cst_168 {dimension_numbers = #tpu.dot_dimension_numbers<[1], [1], [0], [0], [0, 0, 1, 0], [], []>} : vector<8x8xbf16>, vector<8x8xbf16>, vector<8x8xf32> -> vector<8x8xf32>
    %cst_169 = arith.constant -1.000000e+09 : f32
    "tpu.trace_stop"() : () -> ()
    %446 = vector.broadcast %cst_169 : f32 to vector<8x8xf32>
    %447 = arith.select %418, %445, %446 : vector<8x8xi1>, vector<8x8xf32>
    %cst_170 = arith.constant dense<0xFF800000> : vector<8xf32>
    %448 = vector.multi_reduction <maximumf>, %447, %cst_170 [1] : vector<8x8xf32> to vector<8xf32>
    %449 = vector.shape_cast %448 : vector<8xf32> to vector<8x1xf32>
    %450 = vector.broadcast %449 : vector<8x1xf32> to vector<8x8xf32>
    %451 = arith.subf %447, %450 : vector<8x8xf32>
    %452 = math.exp %451 : vector<8x8xf32>
    %cst_171 = arith.constant dense<0.000000e+00> : vector<8xf32>
    %453 = vector.multi_reduction <add>, %452, %cst_171 [1] : vector<8x8xf32> to vector<8xf32>
    %454 = vector.shape_cast %453 : vector<8xf32> to vector<8x1xf32>
    %455 = tpu.reciprocal %454 {approx = true} : vector<8x1xf32> -> vector<8x1xf32>
    %456 = vector.broadcast %455 : vector<8x1xf32> to vector<8x8xf32>
    %457 = arith.mulf %452, %456 : vector<8x8xf32>
    %458 = arith.truncf %457 : vector<8x8xf32> to vector<8x8xbf16>
    %cst_172 = arith.constant dense<0.000000e+00> : vector<8x8xf32>
    %459 = tpu.matmul %458, %444, %cst_172 {dimension_numbers = #tpu.dot_dimension_numbers<[1], [0], [0], [1], [0, 0, 1, 1], [], []>} : vector<8x8xbf16>, vector<8x8xbf16>, vector<8x8xf32> -> vector<8x8xf32>
    %460 = arith.truncf %459 : vector<8x8xf32> to vector<8x8xbf16>
    %461 = vector.extract_strided_slice %321 {offsets = [8, 0], sizes = [8, 32], strides = [1, 1]} : vector<32x32xbf16> to vector<8x32xbf16>
    %cst_173 = arith.constant dense<0.000000e+00> : vector<8x32xf32>
    %462 = tpu.matmul %460, %461, %cst_173 {dimension_numbers = #tpu.dot_dimension_numbers<[1], [0], [0], [1], [0, 0, 1, 1], [], []>} : vector<8x8xbf16>, vector<8x32xbf16>, vector<8x32xf32> -> vector<8x32xf32>
    %463 = arith.addf %441, %462 : vector<8x32xf32>
    %464 = vector.extract_strided_slice %315 {offsets = [8, 16], sizes = [8, 8], strides = [1, 1]} : vector<16x32xbf16> to vector<8x8xbf16>
    %465 = vector.extract_strided_slice %317 {offsets = [8, 16], sizes = [8, 8], strides = [1, 1]} : vector<16x32xbf16> to vector<8x8xbf16>
    %466 = vector.extract_strided_slice %319 {offsets = [8, 16], sizes = [8, 8], strides = [1, 1]} : vector<16x32xbf16> to vector<8x8xbf16>
    "tpu.trace_start"() <{level = 10 : i32, message = "qd,kd->qk"}> : () -> ()
    %cst_174 = arith.constant dense<0.000000e+00> : vector<8x8xf32>
    %467 = tpu.matmul %464, %465, %cst_174 {dimension_numbers = #tpu.dot_dimension_numbers<[1], [1], [0], [0], [0, 0, 1, 0], [], []>} : vector<8x8xbf16>, vector<8x8xbf16>, vector<8x8xf32> -> vector<8x8xf32>
    %cst_175 = arith.constant -1.000000e+09 : f32
    "tpu.trace_stop"() : () -> ()
    %468 = vector.broadcast %cst_175 : f32 to vector<8x8xf32>
    %469 = arith.select %418, %467, %468 : vector<8x8xi1>, vector<8x8xf32>
    %cst_176 = arith.constant dense<0xFF800000> : vector<8xf32>
    %470 = vector.multi_reduction <maximumf>, %469, %cst_176 [1] : vector<8x8xf32> to vector<8xf32>
    %471 = vector.shape_cast %470 : vector<8xf32> to vector<8x1xf32>
    %472 = vector.broadcast %471 : vector<8x1xf32> to vector<8x8xf32>
    %473 = arith.subf %469, %472 : vector<8x8xf32>
    %474 = math.exp %473 : vector<8x8xf32>
    %cst_177 = arith.constant dense<0.000000e+00> : vector<8xf32>
    %475 = vector.multi_reduction <add>, %474, %cst_177 [1] : vector<8x8xf32> to vector<8xf32>
    %476 = vector.shape_cast %475 : vector<8xf32> to vector<8x1xf32>
    %477 = tpu.reciprocal %476 {approx = true} : vector<8x1xf32> -> vector<8x1xf32>
    %478 = vector.broadcast %477 : vector<8x1xf32> to vector<8x8xf32>
    %479 = arith.mulf %474, %478 : vector<8x8xf32>
    %480 = arith.truncf %479 : vector<8x8xf32> to vector<8x8xbf16>
    %cst_178 = arith.constant dense<0.000000e+00> : vector<8x8xf32>
    %481 = tpu.matmul %480, %466, %cst_178 {dimension_numbers = #tpu.dot_dimension_numbers<[1], [0], [0], [1], [0, 0, 1, 1], [], []>} : vector<8x8xbf16>, vector<8x8xbf16>, vector<8x8xf32> -> vector<8x8xf32>
    %482 = arith.truncf %481 : vector<8x8xf32> to vector<8x8xbf16>
    %483 = vector.extract_strided_slice %321 {offsets = [16, 0], sizes = [8, 32], strides = [1, 1]} : vector<32x32xbf16> to vector<8x32xbf16>
    %cst_179 = arith.constant dense<0.000000e+00> : vector<8x32xf32>
    %484 = tpu.matmul %482, %483, %cst_179 {dimension_numbers = #tpu.dot_dimension_numbers<[1], [0], [0], [1], [0, 0, 1, 1], [], []>} : vector<8x8xbf16>, vector<8x32xbf16>, vector<8x32xf32> -> vector<8x32xf32>
    %485 = arith.addf %463, %484 : vector<8x32xf32>
    %486 = vector.extract_strided_slice %315 {offsets = [8, 24], sizes = [8, 8], strides = [1, 1]} : vector<16x32xbf16> to vector<8x8xbf16>
    %487 = vector.extract_strided_slice %317 {offsets = [8, 24], sizes = [8, 8], strides = [1, 1]} : vector<16x32xbf16> to vector<8x8xbf16>
    %488 = vector.extract_strided_slice %319 {offsets = [8, 24], sizes = [8, 8], strides = [1, 1]} : vector<16x32xbf16> to vector<8x8xbf16>
    "tpu.trace_start"() <{level = 10 : i32, message = "qd,kd->qk"}> : () -> ()
    %cst_180 = arith.constant dense<0.000000e+00> : vector<8x8xf32>
    %489 = tpu.matmul %486, %487, %cst_180 {dimension_numbers = #tpu.dot_dimension_numbers<[1], [1], [0], [0], [0, 0, 1, 0], [], []>} : vector<8x8xbf16>, vector<8x8xbf16>, vector<8x8xf32> -> vector<8x8xf32>
    %cst_181 = arith.constant -1.000000e+09 : f32
    "tpu.trace_stop"() : () -> ()
    %490 = vector.broadcast %cst_181 : f32 to vector<8x8xf32>
    %491 = arith.select %418, %489, %490 : vector<8x8xi1>, vector<8x8xf32>
    %cst_182 = arith.constant dense<0xFF800000> : vector<8xf32>
    %492 = vector.multi_reduction <maximumf>, %491, %cst_182 [1] : vector<8x8xf32> to vector<8xf32>
    %493 = vector.shape_cast %492 : vector<8xf32> to vector<8x1xf32>
    %494 = vector.broadcast %493 : vector<8x1xf32> to vector<8x8xf32>
    %495 = arith.subf %491, %494 : vector<8x8xf32>
    %496 = math.exp %495 : vector<8x8xf32>
    %cst_183 = arith.constant dense<0.000000e+00> : vector<8xf32>
    %497 = vector.multi_reduction <add>, %496, %cst_183 [1] : vector<8x8xf32> to vector<8xf32>
    %498 = vector.shape_cast %497 : vector<8xf32> to vector<8x1xf32>
    %499 = tpu.reciprocal %498 {approx = true} : vector<8x1xf32> -> vector<8x1xf32>
    %500 = vector.broadcast %499 : vector<8x1xf32> to vector<8x8xf32>
    %501 = arith.mulf %496, %500 : vector<8x8xf32>
    %502 = arith.truncf %501 : vector<8x8xf32> to vector<8x8xbf16>
    %cst_184 = arith.constant dense<0.000000e+00> : vector<8x8xf32>
    %503 = tpu.matmul %502, %488, %cst_184 {dimension_numbers = #tpu.dot_dimension_numbers<[1], [0], [0], [1], [0, 0, 1, 1], [], []>} : vector<8x8xbf16>, vector<8x8xbf16>, vector<8x8xf32> -> vector<8x8xf32>
    %504 = arith.truncf %503 : vector<8x8xf32> to vector<8x8xbf16>
    %505 = vector.extract_strided_slice %321 {offsets = [24, 0], sizes = [8, 32], strides = [1, 1]} : vector<32x32xbf16> to vector<8x32xbf16>
    %cst_185 = arith.constant dense<0.000000e+00> : vector<8x32xf32>
    %506 = tpu.matmul %504, %505, %cst_185 {dimension_numbers = #tpu.dot_dimension_numbers<[1], [0], [0], [1], [0, 0, 1, 1], [], []>} : vector<8x8xbf16>, vector<8x32xbf16>, vector<8x32xf32> -> vector<8x32xf32>
    %507 = arith.addf %485, %506 : vector<8x32xf32>
    %508 = tpu.concatenate %414, %507 in 0 : vector<8x32xf32>, vector<8x32xf32> -> vector<16x32xf32>
    %509 = arith.addf %279, %508 : vector<16x32xf32>
    %c1_186 = arith.constant 1 : index
    %c0_187 = arith.constant 0 : index
    %c0_188 = arith.constant 0 : index
    %510 = vector.load %arg7[%c1_186, %c0_187, %c0_188] : memref<2x1x32xf32, #tpu.memory_space<vmem>>, vector<1x1x32xf32>
    %511 = vector.shape_cast %510 : vector<1x1x32xf32> to vector<1x32xf32>
    %512 = vector.broadcast %511 : vector<1x32xf32> to vector<16x32xf32>
    %513 = arith.addf %509, %512 : vector<16x32xf32>
    %c1_189 = arith.constant 1 : index
    %c0_190 = arith.constant 0 : index
    %c0_191 = arith.constant 0 : index
    %514 = vector.load %arg8[%c1_189, %c0_190, %c0_191] : memref<2x1x32xf32, #tpu.memory_space<vmem>>, vector<1x1x32xf32>
    %515 = vector.shape_cast %514 : vector<1x1x32xf32> to vector<1x32xf32>
    %c1_192 = arith.constant 1 : index
    %c0_193 = arith.constant 0 : index
    %c0_194 = arith.constant 0 : index
    %516 = vector.load %arg9[%c1_192, %c0_193, %c0_194] : memref<2x1x32xf32, #tpu.memory_space<vmem>>, vector<1x1x32xf32>
    %517 = vector.shape_cast %516 : vector<1x1x32xf32> to vector<1x32xf32>
    %cst_195 = arith.constant dense<0.000000e+00> : vector<16xf32>
    %518 = vector.multi_reduction <add>, %513, %cst_195 [1] : vector<16x32xf32> to vector<16xf32>
    %519 = vector.shape_cast %518 : vector<16xf32> to vector<16x1xf32>
    %cst_196 = arith.constant 3.200000e+01 : f32
    %520 = vector.broadcast %cst_196 : f32 to vector<16x1xf32>
    %521 = arith.divf %519, %520 : vector<16x1xf32>
    %522 = vector.broadcast %521 : vector<16x1xf32> to vector<16x32xf32>
    %523 = arith.subf %513, %522 : vector<16x32xf32>
    %524 = arith.mulf %523, %523 : vector<16x32xf32>
    %cst_197 = arith.constant dense<0.000000e+00> : vector<16xf32>
    %525 = vector.multi_reduction <add>, %524, %cst_197 [1] : vector<16x32xf32> to vector<16xf32>
    %526 = vector.shape_cast %525 : vector<16xf32> to vector<16x1xf32>
    %cst_198 = arith.constant 3.200000e+01 : f32
    %527 = vector.broadcast %cst_198 : f32 to vector<16x1xf32>
    %528 = arith.divf %526, %527 : vector<16x1xf32>
    %529 = vector.broadcast %521 : vector<16x1xf32> to vector<16x32xf32>
    %530 = arith.subf %513, %529 : vector<16x32xf32>
    %cst_199 = arith.constant 9.99999997E-7 : f32
    %531 = vector.broadcast %cst_199 : f32 to vector<16x1xf32>
    %532 = arith.addf %528, %531 : vector<16x1xf32>
    %533 = math.rsqrt %532 : vector<16x1xf32>
    %534 = vector.broadcast %533 : vector<16x1xf32> to vector<16x32xf32>
    %535 = arith.mulf %530, %534 : vector<16x32xf32>
    %536 = vector.broadcast %515 : vector<1x32xf32> to vector<16x32xf32>
    %537 = arith.mulf %535, %536 : vector<16x32xf32>
    %538 = vector.broadcast %517 : vector<1x32xf32> to vector<16x32xf32>
    %539 = arith.addf %537, %538 : vector<16x32xf32>
    %540 = arith.truncf %539 : vector<16x32xf32> to vector<16x32xbf16>
    %c1_200 = arith.constant 1 : index
    %c0_201 = arith.constant 0 : index
    %c0_202 = arith.constant 0 : index
    %541 = vector.load %arg10[%c1_200, %c0_201, %c0_202] : memref<2x32x64xbf16, #tpu.memory_space<vmem>>, vector<1x32x64xbf16>
    %542 = vector.shape_cast %541 : vector<1x32x64xbf16> to vector<32x64xbf16>
    %cst_203 = arith.constant dense<0.000000e+00> : vector<16x64xf32>
    %543 = tpu.matmul %540, %542, %cst_203 {dimension_numbers = #tpu.dot_dimension_numbers<[1], [0], [0], [1], [0, 0, 1, 1], [], []>} : vector<16x32xbf16>, vector<32x64xbf16>, vector<16x64xf32> -> vector<16x64xf32>
    %c1_204 = arith.constant 1 : index
    %c0_205 = arith.constant 0 : index
    %c0_206 = arith.constant 0 : index
    %544 = vector.load %arg11[%c1_204, %c0_205, %c0_206] : memref<2x1x64xf32, #tpu.memory_space<vmem>>, vector<1x1x64xf32>
    %545 = vector.shape_cast %544 : vector<1x1x64xf32> to vector<1x64xf32>
    %546 = vector.broadcast %545 : vector<1x64xf32> to vector<16x64xf32>
    %547 = arith.addf %543, %546 : vector<16x64xf32>
    %cst_207 = arith.constant 0.000000e+00 : f32
    %548 = vector.broadcast %cst_207 : f32 to vector<16x64xf32>
    %549 = arith.maximumf %547, %548 : vector<16x64xf32>
    %550 = arith.truncf %549 : vector<16x64xf32> to vector<16x64xbf16>
    %c1_208 = arith.constant 1 : index
    %c0_209 = arith.constant 0 : index
    %c0_210 = arith.constant 0 : index
    %551 = vector.load %arg12[%c1_208, %c0_209, %c0_210] : memref<2x64x32xbf16, #tpu.memory_space<vmem>>, vector<1x64x32xbf16>
    %552 = vector.shape_cast %551 : vector<1x64x32xbf16> to vector<64x32xbf16>
    %cst_211 = arith.constant dense<0.000000e+00> : vector<16x32xf32>
    %553 = tpu.matmul %550, %552, %cst_211 {dimension_numbers = #tpu.dot_dimension_numbers<[1], [0], [0], [1], [0, 0, 1, 1], [], []>} : vector<16x64xbf16>, vector<64x32xbf16>, vector<16x32xf32> -> vector<16x32xf32>
    %554 = arith.addf %513, %553 : vector<16x32xf32>
    %c1_212 = arith.constant 1 : index
    %c0_213 = arith.constant 0 : index
    %c0_214 = arith.constant 0 : index
    %555 = vector.load %arg13[%c1_212, %c0_213, %c0_214] : memref<2x1x32xf32, #tpu.memory_space<vmem>>, vector<1x1x32xf32>
    %556 = vector.shape_cast %555 : vector<1x1x32xf32> to vector<1x32xf32>
    %557 = vector.broadcast %556 : vector<1x32xf32> to vector<16x32xf32>
    %558 = arith.addf %554, %557 : vector<16x32xf32>
    %c0_215 = arith.constant 0 : index
    %c0_216 = arith.constant 0 : index
    %559 = vector.load %arg14[%c0_215, %c0_216] : memref<1x32xf32, #tpu.memory_space<vmem>>, vector<1x32xf32>
    %c0_217 = arith.constant 0 : index
    %c0_218 = arith.constant 0 : index
    %560 = vector.load %arg15[%c0_217, %c0_218] : memref<1x32xf32, #tpu.memory_space<vmem>>, vector<1x32xf32>
    %cst_219 = arith.constant dense<0.000000e+00> : vector<16xf32>
    %561 = vector.multi_reduction <add>, %558, %cst_219 [1] : vector<16x32xf32> to vector<16xf32>
    %562 = vector.shape_cast %561 : vector<16xf32> to vector<16x1xf32>
    %cst_220 = arith.constant 3.200000e+01 : f32
    %563 = vector.broadcast %cst_220 : f32 to vector<16x1xf32>
    %564 = arith.divf %562, %563 : vector<16x1xf32>
    %565 = vector.broadcast %564 : vector<16x1xf32> to vector<16x32xf32>
    %566 = arith.subf %558, %565 : vector<16x32xf32>
    %567 = arith.mulf %566, %566 : vector<16x32xf32>
    %cst_221 = arith.constant dense<0.000000e+00> : vector<16xf32>
    %568 = vector.multi_reduction <add>, %567, %cst_221 [1] : vector<16x32xf32> to vector<16xf32>
    %569 = vector.shape_cast %568 : vector<16xf32> to vector<16x1xf32>
    %cst_222 = arith.constant 3.200000e+01 : f32
    %570 = vector.broadcast %cst_222 : f32 to vector<16x1xf32>
    %571 = arith.divf %569, %570 : vector<16x1xf32>
    %572 = vector.broadcast %564 : vector<16x1xf32> to vector<16x32xf32>
    %573 = arith.subf %558, %572 : vector<16x32xf32>
    %cst_223 = arith.constant 9.99999997E-7 : f32
    %574 = vector.broadcast %cst_223 : f32 to vector<16x1xf32>
    %575 = arith.addf %571, %574 : vector<16x1xf32>
    %576 = math.rsqrt %575 : vector<16x1xf32>
    %577 = vector.broadcast %576 : vector<16x1xf32> to vector<16x32xf32>
    %578 = arith.mulf %573, %577 : vector<16x32xf32>
    %579 = vector.broadcast %559 : vector<1x32xf32> to vector<16x32xf32>
    %580 = arith.mulf %578, %579 : vector<16x32xf32>
    %581 = vector.broadcast %560 : vector<1x32xf32> to vector<16x32xf32>
    %582 = arith.addf %580, %581 : vector<16x32xf32>
    %c0_224 = arith.constant 0 : index
    %c0_225 = arith.constant 0 : index
    %583 = vector.load %arg16[%c0_224, %c0_225] : memref<16x32xf32, #tpu.memory_space<vmem>>, vector<16x32xf32>
    tpu.vector_store %arg16[%c0_224, %c0_225], %582 {strides = array<i32>} : memref<16x32xf32, #tpu.memory_space<vmem>>, vector<16x32xf32>,
    return
  }
}

</mosaic_0001>

<llo_original>
// kernel: encoder_forward.1
$region0: #{encoder_forward.1}
  #allocation0 [shape = 'u32[]', space=smem, size = 0x4, offset = 0x4, fixed_abs, tag = 'smem constant byte address 0x4 - core index']
  #allocation1 [shape = 'u32[72,128]{1,0:T(1,128)}', space=vmem, size = 0x9000, scoped, tag = 'internal scratch']
  %s0 = inlined_call_operand.hbm [shape: f32[16,32], index: 0, kind: input, shape index: {}]
  %s1 = inlined_call_operand.hbm [shape: f32[2,8,8], index: 1, kind: input, shape index: {}]
  %s2 = inlined_call_operand.hbm [shape: f32[2,1,32], index: 2, kind: input, shape index: {}]
  %s3 = inlined_call_operand.vmem [shape: f32[2,1,32], index: 3, kind: input, shape index: {}]
  %s4 = inlined_call_operand.vmem [shape: bf16[2,32,96], index: 4, kind: input, shape index: {}]
  %s5 = inlined_call_operand.vmem [shape: f32[2,1,96], index: 5, kind: input, shape index: {}]
  %s6 = inlined_call_operand.vmem [shape: bf16[2,32,32], index: 6, kind: input, shape index: {}]
  %s7 = inlined_call_operand.vmem [shape: f32[2,1,32], index: 7, kind: input, shape index: {}]
  %s8 = inlined_call_operand.hbm [shape: f32[2,1,32], index: 8, kind: input, shape index: {}]
  %s9 = inlined_call_operand.vmem [shape: f32[2,1,32], index: 9, kind: input, shape index: {}]
  %s10 = inlined_call_operand.vmem [shape: bf16[2,32,64], index: 10, kind: input, shape index: {}]
  %s11 = inlined_call_operand.vmem [shape: f32[2,1,64], index: 11, kind: input, shape index: {}]
  %s12 = inlined_call_operand.vmem [shape: bf16[2,64,32], index: 12, kind: input, shape index: {}]
  %s13 = inlined_call_operand.vmem [shape: f32[2,1,32], index: 13, kind: input, shape index: {}]
  %s14 = inlined_call_operand.vmem [shape: f32[1,32], index: 14, kind: input, shape index: {}]
  %s15 = inlined_call_operand.vmem [shape: f32[1,32], index: 15, kind: input, shape index: {}]
  %s16 = inlined_call_operand.hbm [shape: f32[16,32], index: 16, kind: output, shape index: {}]
  %s17 = sld [smem:[#allocation0]]
  $region90: #{encoder_forward.1} parent=0
    _
  %s19 = ssub.s32 1, %s17
  %s20 = scalar_select 0, %s19, %s17
  $region1: #{encoder_forward.1} parent=0
    #allocation2 [shape = 'u8[8192]{0}', space=vmem, size = 0x2000, scoped, tag = 'input window, operand 0, single buffered']
    #allocation3 [shape = 's32[1]{0}', space=sflag, size = 0x4, scoped, tag = 'scoped memory for encoder_forward.1']
    #allocation4 [shape = 's32[1]{0}', space=sflag, size = 0x4, scoped, tag = 'scoped memory for encoder_forward.1']
    #allocation5 [shape = 'u8[8192]{0}', space=vmem, size = 0x2000, scoped, tag = 'input window, operand 1, single buffered']
    #allocation6 [shape = 's32[1]{0}', space=sflag, size = 0x4, scoped, tag = 'scoped memory for encoder_forward.1']
    #allocation7 [shape = 'u8[1024]{0}', space=vmem, size = 0x400, scoped, tag = 'input window, operand 2, single buffered']
    #allocation8 [shape = 'u8[1024]{0}', space=vmem, size = 0x400, scoped, tag = 'input window, operand 8, single buffered']
    #allocation9 [shape = 's32[1]{0}', space=sflag, size = 0x4, scoped, tag = 'scoped memory for encoder_forward.1']
    #allocation10 [shape = 'u8[8192]{0}', space=vmem, size = 0x2000, scoped, tag = 'output window, operand 0, single buffered']
    %21 = vsyncpa [#allocation3], 0
    %22 = vsyncpa [#allocation6], 0
    %23 = vsyncpa [#allocation9], 0
    %24 = vsyncpa [#allocation4], 0
    // Predicated region
    $region2: #{encoder_forward.1} parent=1 // pred_check
      _
    $region3: #{encoder_forward.1} parent=1 // pred_check_branch
      %26 = sbr.rel (0) target = $region5
    $region4: #{encoder_forward.1} parent=1 // pred_region
      %28 = vsyncadd [#allocation3], 0
      %s29 = sshll.u32 %s0, 4
      %s30 = int_to_ptr.hbm [resolvable:$true] %s29
      %s31 = sshll.u32 [#allocation2], 4
      %s32 = int_to_ptr.vmem [resolvable:$true] %s31
      %37 = dma.hbm_to_vmem [thread:$0]  %s30, 256, %s32, [#allocation3], 128, 128, 8
    $region5: #{encoder_forward.1} parent=1 // pred_fallthru
      _
    // Predicated region
    $region6: #{encoder_forward.1} parent=1 // pred_check
      _
    $region7: #{encoder_forward.1} parent=1 // pred_check_branch
      %39 = sbr.rel (0) target = $region9
    $region8: #{encoder_forward.1} parent=1 // pred_region
      %41 = vsyncadd [#allocation6], 0
      %s42 = sshll.u32 %s1, 4
      %s43 = int_to_ptr.hbm [resolvable:$true] %s42
      %s44 = sshll.u32 [#allocation5], 4
      %s45 = int_to_ptr.vmem [resolvable:$true] %s44
      %50 = dma.hbm_to_vmem [thread:$0]  %s43, 256, %s45, [#allocation6], 128, 128, 8
    $region9: #{encoder_forward.1} parent=1 // pred_fallthru
      _
    // Predicated region
    $region10: #{encoder_forward.1} parent=1 // pred_check
      _
    $region11: #{encoder_forward.1} parent=1 // pred_check_branch
      %52 = sbr.rel (0) target = $region13
    $region12: #{encoder_forward.1} parent=1 // pred_region
      %54 = vsyncadd [#allocation6], 0
      %s55 = sshll.u32 %s2, 4
      %s56 = int_to_ptr.hbm [resolvable:$true] %s55
      %s57 = sshll.u32 [#allocation7], 4
      %s58 = int_to_ptr.vmem [resolvable:$true] %s57
      %63 = dma.hbm_to_vmem [thread:$0]  %s56, 32, %s58, [#allocation6], 16, 16, 1
    $region13: #{encoder_forward.1} parent=1 // pred_fallthru
      _
    // Predicated region
    $region14: #{encoder_forward.1} parent=1 // pred_check
      _
    $region15: #{encoder_forward.1} parent=1 // pred_check_branch
      %65 = sbr.rel (0) target = $region17
    $region16: #{encoder_forward.1} parent=1 // pred_region
      _
    $region17: #{encoder_forward.1} parent=1 // pred_fallthru
      _
    // Predicated region
    $region18: #{encoder_forward.1} parent=1 // pred_check
      _
    $region19: #{encoder_forward.1} parent=1 // pred_check_branch
      %67 = sbr.rel (0) target = $region21
    $region20: #{encoder_forward.1} parent=1 // pred_region
      _
    $region21: #{encoder_forward.1} parent=1 // pred_fallthru
      _
    // Predicated region
    $region22: #{encoder_forward.1} parent=1 // pred_check
      _
    $region23: #{encoder_forward.1} parent=1 // pred_check_branch
      %69 = sbr.rel (0) target = $region25
    $region24: #{encoder_forward.1} parent=1 // pred_region
      _
    $region25: #{encoder_forward.1} parent=1 // pred_fallthru
      _
    // Predicated region
    $region26: #{encoder_forward.1} parent=1 // pred_check
      _
    $region27: #{encoder_forward.1} parent=1 // pred_check_branch
      %71 = sbr.rel (0) target = $region29
    $region28: #{encoder_forward.1} parent=1 // pred_region
      _
    $region29: #{encoder_forward.1} parent=1 // pred_fallthru
      _
    // Predicated region
    $region30: #{encoder_forward.1} parent=1 // pred_check
      _
    $region31: #{encoder_forward.1} parent=1 // pred_check_branch
      %73 = sbr.rel (0) target = $region33
    $region32: #{encoder_forward.1} parent=1 // pred_region
      _
    $region33: #{encoder_forward.1} parent=1 // pred_fallthru
      _
    // Predicated region
    $region34: #{encoder_forward.1} parent=1 // pred_check
      _
    $region35: #{encoder_forward.1} parent=1 // pred_check_branch
      %75 = sbr.rel (0) target = $region37
    $region36: #{encoder_forward.1} parent=1 // pred_region
      %77 = vsyncadd [#allocation9], 0
      %s78 = sshll.u32 %s8, 4
      %s79 = int_to_ptr.hbm [resolvable:$true] %s78
      %s80 = sshll.u32 [#allocation8], 4
      %s81 = int_to_ptr.vmem [resolvable:$true] %s80
      %86 = dma.hbm_to_vmem [thread:$0]  %s79, 32, %s81, [#allocation9], 16, 16, 1
    $region37: #{encoder_forward.1} parent=1 // pred_fallthru
      _
    // Predicated region
    $region38: #{encoder_forward.1} parent=1 // pred_check
      _
    $region39: #{encoder_forward.1} parent=1 // pred_check_branch
      %88 = sbr.rel (0) target = $region41
    $region40: #{encoder_forward.1} parent=1 // pred_region
      _
    $region41: #{encoder_forward.1} parent=1 // pred_fallthru
      _
    // Predicated region
    $region42: #{encoder_forward.1} parent=1 // pred_check
      _
    $region43: #{encoder_forward.1} parent=1 // pred_check_branch
      %90 = sbr.rel (0) target = $region45
    $region44: #{encoder_forward.1} parent=1 // pred_region
      _
    $region45: #{encoder_forward.1} parent=1 // pred_fallthru
      _
    // Predicated region
    $region46: #{encoder_forward.1} parent=1 // pred_check
      _
    $region47: #{encoder_forward.1} parent=1 // pred_check_branch
      %92 = sbr.rel (0) target = $region49
    $region48: #{encoder_forward.1} parent=1 // pred_region
      _
    $region49: #{encoder_forward.1} parent=1 // pred_fallthru
      _
    // Predicated region
    $region50: #{encoder_forward.1} parent=1 // pred_check
      _
    $region51: #{encoder_forward.1} parent=1 // pred_check_branch
      %94 = sbr.rel (0) target = $region53
    $region52: #{encoder_forward.1} parent=1 // pred_region
      _
    $region53: #{encoder_forward.1} parent=1 // pred_fallthru
      _
    // Predicated region
    $region54: #{encoder_forward.1} parent=1 // pred_check
      _
    $region55: #{encoder_forward.1} parent=1 // pred_check_branch
      %96 = sbr.rel (0) target = $region57
    $region56: #{encoder_forward.1} parent=1 // pred_region
      _
    $region57: #{encoder_forward.1} parent=1 // pred_fallthru
      _
    // Predicated region
    $region58: #{encoder_forward.1} parent=1 // pred_check
      _
    $region59: #{encoder_forward.1} parent=1 // pred_check_branch
      %98 = sbr.rel (0) target = $region61
    $region60: #{encoder_forward.1} parent=1 // pred_region
      _
    $region61: #{encoder_forward.1} parent=1 // pred_fallthru
      _
    // Predicated region
    $region62: #{encoder_forward.1} parent=1 // pred_check
      _
    $region63: #{encoder_forward.1} parent=1 // pred_check_branch
      %100 = sbr.rel (0) target = $region65
    $region64: #{encoder_forward.1} parent=1 // pred_region
      _
    $region65: #{encoder_forward.1} parent=1 // pred_fallthru
      _
    // Predicated region
    $region66: #{encoder_forward.1} parent=1 // pred_check
      _
    $region67: #{encoder_forward.1} parent=1 // pred_check_branch
      %102 = sbr.rel (0) target = $region69
    $region68: #{encoder_forward.1} parent=1 // pred_region
      %104 = dma.done [#allocation3], 256
    $region69: #{encoder_forward.1} parent=1 // pred_fallthru
      _
    // Predicated region
    $region70: #{encoder_forward.1} parent=1 // pred_check
      _
    $region71: #{encoder_forward.1} parent=1 // pred_check_branch
      %106 = sbr.rel (0) target = $region73
    $region72: #{encoder_forward.1} parent=1 // pred_region
      %108 = dma.done [#allocation6], 256
    $region73: #{encoder_forward.1} parent=1 // pred_fallthru
      _
    // Predicated region
    $region74: #{encoder_forward.1} parent=1 // pred_check
      _
    $region75: #{encoder_forward.1} parent=1 // pred_check_branch
      %110 = sbr.rel (0) target = $region77
    $region76: #{encoder_forward.1} parent=1 // pred_region
      %112 = dma.done [#allocation6], 32
    $region77: #{encoder_forward.1} parent=1 // pred_fallthru
      _
    // Predicated region
    $region78: #{encoder_forward.1} parent=1 // pred_check
      _
    $region79: #{encoder_forward.1} parent=1 // pred_check_branch
      %114 = sbr.rel (0) target = $region81
    $region80: #{encoder_forward.1} parent=1 // pred_region
      %116 = dma.done [#allocation9], 32
    $region81: #{encoder_forward.1} parent=1 // pred_fallthru
      _
    %v118 = vld [vmem:[#allocation2] sm:$0xff]
    %v119 = vld [vmem:[#allocation2 + $0x8] sm:$0xff]
    %v120 = vld [vmem:[#allocation7] sm:$0x1]
    %v121 = vld [vmem:[%s3] sm:$0x1]
    %vm122 = vcmask 261120
    %v123 = vsel %vm122, %v118, 0.0
    %124 = vadd.xlane.f32.xlu0 %v123
    %v125 = vpop.xlane.xlu0 %124
    %v126 = vsel %vm122, %v119, 0.0
    %127 = vadd.xlane.f32.xlu0 %v126
    %v128 = vpop.xlane.xlu0 %127
    %v129 = vrcp.pop 32.0
    %v130 = vmul.f32 32.0, %v129
    %v131 = vsub.f32 1.0, %v130
    %v132 = vmul.f32 %v129, %v131
    %v133 = vadd.f32 %v129, %v132
    %vm134 = vweird.f32 %v129
    %v135 = vsel %vm134, %v129, %v133
    %v136 = vmul.f32 %v125, %v135
    %v137 = vmul.f32 %v128, %v135
    %v138 = vsub.f32 %v118, %v136
    %v139 = vsub.f32 %v119, %v137
    %v140 = vmul.f32 %v138, %v138
    %v141 = vmul.f32 %v139, %v139
    %v142 = vsel %vm122, %v140, 0.0
    %143 = vadd.xlane.f32.xlu0 %v142
    %v144 = vpop.xlane.xlu0 %143
    %v145 = vsel %vm122, %v141, 0.0
    %146 = vadd.xlane.f32.xlu0 %v145
    %v147 = vpop.xlane.xlu0 %146
    %v148 = vmul.f32 %v144, %v135
    %v149 = vmul.f32 %v147, %v135
    %v150 = vadd.f32 %v148, 1e-06
    %v151 = vadd.f32 %v149, 1e-06
    %v152 = vrsqrt.pop %v150
    %v153 = vmul.f32 %v152, %v150
    %v154 = vmul.f32 %v153, %v152
    %v155 = vmul.f32 0.5, %v154
    %v156 = vsub.f32 1.5, %v155
    %v157 = vmul.f32 %v152, %v156
    %vm158 = vweird.f32 %v150
    %vm159 = vweird.f32 %v152
    %vm160 = vmor %vm158, %vm159
    %v161 = vsel %vm160, %v152, %v157
    %v162 = vrsqrt.pop %v151
    %v163 = vmul.f32 %v162, %v151
    %v164 = vmul.f32 %v163, %v162
    %v165 = vmul.f32 0.5, %v164
    %v166 = vsub.f32 1.5, %v165
    %v167 = vmul.f32 %v162, %v166
    %vm168 = vweird.f32 %v151
    %vm169 = vweird.f32 %v162
    %vm170 = vmor %vm168, %vm169
    %v171 = vsel %vm170, %v162, %v167
    %v172 = vmul.f32 %v138, %v161
    %v173 = vmul.f32 %v139, %v171
    %v175 = vperm.slane %v120, 0
    %v177 = vmul.f32 %v172, %v175
    %v178 = vmul.f32 %v173, %v175
    %v180 = vperm.slane %v121, 0
    %v182 = vadd.f32 %v177, %v180
    %v183 = vadd.f32 %v178, %v180
    %v184 = vpack.c.bf16 %v183, %v182
    %v185 = vld [vmem:[%s4] sm:$0xf]
    %v186 = vld [vmem:[%s4 + $0x4] sm:$0xf]
    %v187 = vld [vmem:[%s4 + $0x8] sm:$0xf]
    %v188 = vld [vmem:[%s4 + $0xc] sm:$0xf]
    %v189 = vld [vmem:[%s5] sm:$0x1]
    %v191 = vperm.slane %v189, 0
    %v197 = vunpack.c.l.b16 %v185
    %v198 = vunpack.c.l.b16 %v186
    %v199 = vunpack.c.l.b16 %v187
    %v200 = vunpack.c.l.b16 %v188
    %v201 = vpack.c.b16 %v198, %v197
    %v202 = vpack.c.b16 %v200, %v199
    %v206 = vsel %vm122, %v184, 0
    %208 = vmatpush.bf16.msra.mxu0 0
    %209 = vmatpush.bf16.msra.mxu0 0
    %210 = vmatpush.bf16.msra.mxu0 0
    %211 = vmatpush.bf16.msra.mxu0 0
    %212 = vmatpush.bf16.msra.mxu0 0
    %213 = vmatpush.bf16.msra.mxu0 0
    %214 = vmatpush.bf16.msra.mxu0 %v202
    %215 = vmatpush.bf16.msra.mxu0 %v201
    %216 = vmatmul.bf16.gmra.mxu0 %v206
    %v217 = vpop.f32.mrf.mxu0
    %v218 = vadd.f32 %v191, %v217
    %v219 = vpop.f32.mrf.mxu0
    %v220 = vadd.f32 %v191, %v219
    %221 = vdwg.mxu0
    %v222 = vpack.c.bf16 %v218, %v218
    %v223 = vpack.c.bf16 %v220, %v220
    %v224 = vld [vmem:[%s6] sm:$0xf]
    %v225 = vld [vmem:[%s6 + $0x4] sm:$0xf]
    %v226 = vld [vmem:[%s6 + $0x8] sm:$0xf]
    %v227 = vld [vmem:[%s6 + $0xc] sm:$0xf]
    %v228 = vld [vmem:[#allocation5] sm:$0xff]
    %vm229 = vcmp.gt.f32.partialorder %v228, 0.0
    %v231 = vunpack.c.l.b16 %v222
    %v232 = vpack.c.b16 %v231, %v231
    %233 = vrot.lane.b32.xlu0 %v232, 96
    %v234 = vpop.permute.xlu0 %233
    %vm235 = vcmask 64512
    %v237 = vsel %vm235, %v222, 0
    %v240 = vsel %vm235, %v234, 0
    %242 = vmatpush.bf16.xpose.msra.mxu0 0
    %243 = vmatpush.bf16.xpose.msra.mxu0 0
    %244 = vmatpush.bf16.xpose.msra.mxu0 0
    %245 = vmatpush.bf16.xpose.msra.mxu0 0
    %246 = vmatpush.bf16.xpose.msra.mxu0 0
    %247 = vmatpush.bf16.xpose.msra.mxu0 0
    %248 = vmatpush.bf16.xpose.msra.mxu0 0
    %249 = vmatpush.bf16.xpose.msra.mxu0 %v240
    %250 = vmatmul.bf16.gmra.mxu0 %v237
    %v251 = vpop.f32.mrf.mxu0
    %v252 = vadd.f32 0.0, %v251
    %v253 = vpop.f32.mrf.mxu0
    %254 = vdwg.mxu0
    %v255 = vsel %vm229, %v252, -1e+09
    %v256 = vsel %vm235, %v255, -inf
    %257 = vmax.xlane.f32.xlu0 %v256
    %v258 = vpop.xlane.xlu0 %257
    %v259 = vsub.f32 %v255, %v258
    %v260 = vmul.f32 %v259, 1.442695
    %v261 = vpow.pop %v260
    %v262 = vsel %vm235, %v261, 0.0
    %263 = vadd.xlane.f32.xlu0 %v262
    %v264 = vpop.xlane.xlu0 %263
    %v265 = vrcp.pop %v264
    %v266 = vmul.f32 %v261, %v265
    %v267 = vpack.c.bf16 %v266, %v266
    %268 = vrot.lane.b32.xlu0 %v232, 64
    %v269 = vpop.permute.xlu0 %268
    %v271 = vsel %vm235, %v267, 0
    %vm273 = vcmask 1043456
    %v275 = vsel %vm273, %v269, 0
    %277 = vmatpush.bf16.msra.mxu0 0
    %278 = vmatpush.bf16.msra.mxu0 0
    %279 = vmatpush.bf16.msra.mxu0 0
    %280 = vmatpush.bf16.msra.mxu0 0
    %281 = vmatpush.bf16.msra.mxu0 0
    %282 = vmatpush.bf16.msra.mxu0 0
    %283 = vmatpush.bf16.msra.mxu0 0
    %284 = vmatpush.bf16.msra.mxu0 %v275
    %285 = vmatmul.bf16.gmra.mxu0 %v271
    %v286 = vpop.f32.mrf.mxu0
    %v287 = vadd.f32 0.0, %v286
    %v288 = vpop.f32.mrf.mxu0
    %289 = vdwg.mxu0
    %v290 = vpack.c.bf16 %v287, %v287
    %291 = vrot.lane.b32.xlu0 %v232, 120
    %v292 = vpop.permute.xlu0 %291
    %293 = vrot.lane.b32.xlu0 %v232, 88
    %v294 = vpop.permute.xlu0 %293
    %v296 = vsel %vm235, %v292, 0
    %v299 = vsel %vm235, %v294, 0
    %301 = vmatpush.bf16.xpose.msra.mxu0 0
    %302 = vmatpush.bf16.xpose.msra.mxu0 0
    %303 = vmatpush.bf16.xpose.msra.mxu0 0
    %304 = vmatpush.bf16.xpose.msra.mxu0 0
    %305 = vmatpush.bf16.xpose.msra.mxu0 0
    %306 = vmatpush.bf16.xpose.msra.mxu0 0
    %307 = vmatpush.bf16.xpose.msra.mxu0 0
    %308 = vmatpush.bf16.xpose.msra.mxu0 %v299
    %309 = vmatmul.bf16.gmra.mxu0 %v296
    %v310 = vpop.f32.mrf.mxu0
    %v311 = vadd.f32 0.0, %v310
    %v312 = vpop.f32.mrf.mxu0
    %313 = vdwg.mxu0
    %v314 = vsel %vm229, %v311, -1e+09
    %v315 = vsel %vm235, %v314, -inf
    %316 = vmax.xlane.f32.xlu0 %v315
    %v317 = vpop.xlane.xlu0 %316
    %v318 = vsub.f32 %v314, %v317
    %v319 = vmul.f32 %v318, 1.442695
    %v320 = vpow.pop %v319
    %v321 = vsel %vm235, %v320, 0.0
    %322 = vadd.xlane.f32.xlu0 %v321
    %v323 = vpop.xlane.xlu0 %322
    %v324 = vrcp.pop %v323
    %v325 = vmul.f32 %v320, %v324
    %v326 = vpack.c.bf16 %v325, %v325
    %327 = vrot.lane.b32.xlu0 %v232, 56
    %v328 = vpop.permute.xlu0 %327
    %v330 = vsel %vm235, %v326, 0
    %v333 = vsel %vm273, %v328, 0
    %335 = vmatpush.bf16.msra.mxu0 0
    %336 = vmatpush.bf16.msra.mxu0 0
    %337 = vmatpush.bf16.msra.mxu0 0
    %338 = vmatpush.bf16.msra.mxu0 0
    %339 = vmatpush.bf16.msra.mxu0 0
    %340 = vmatpush.bf16.msra.mxu0 0
    %341 = vmatpush.bf16.msra.mxu0 0
    %342 = vmatpush.bf16.msra.mxu0 %v333
    %343 = vmatmul.bf16.gmra.mxu0 %v330
    %v344 = vpop.f32.mrf.mxu0
    %v345 = vadd.f32 0.0, %v344
    %v346 = vpop.f32.mrf.mxu0
    %347 = vdwg.mxu0
    %v348 = vpack.c.bf16 %v345, %v345
    %v350 = vsel %vm235, %v348, 0
    %v353 = vsel %vm273, %v225, 0
    %355 = vmatpush.bf16.msra.mxu0 0
    %356 = vmatpush.bf16.msra.mxu0 0
    %357 = vmatpush.bf16.msra.mxu0 0
    %358 = vmatpush.bf16.msra.mxu0 0
    %359 = vmatpush.bf16.msra.mxu0 0
    %360 = vmatpush.bf16.msra.mxu0 0
    %361 = vmatpush.bf16.msra.mxu0 0
    %362 = vmatpush.bf16.msra.mxu0 %v353
    %363 = vmatmul.bf16.gmra.mxu0 %v350
    %v364 = vpop.f32.mrf.mxu0
    %v365 = vadd.f32 0.0, %v364
    %v366 = vpop.f32.mrf.mxu0
    %367 = vdwg.mxu0
    %v369 = vsel %vm235, %v290, 0
    %v372 = vsel %vm273, %v224, 0
    %374 = vmatpush.bf16.msra.mxu0 0
    %375 = vmatpush.bf16.msra.mxu0 0
    %376 = vmatpush.bf16.msra.mxu0 0
    %377 = vmatpush.bf16.msra.mxu0 0
    %378 = vmatpush.bf16.msra.mxu0 0
    %379 = vmatpush.bf16.msra.mxu0 0
    %380 = vmatpush.bf16.msra.mxu0 0
    %381 = vmatpush.bf16.msra.mxu0 %v372
    %382 = vmatmul.bf16.gmra.mxu0 %v369
    %v383 = vpop.f32.mrf.mxu0
    %v384 = vadd.f32 %v365, %v383
    %v385 = vpop.f32.mrf.mxu0
    %386 = vdwg.mxu0
    %387 = vrot.lane.b32.xlu0 %v232, 112
    %v388 = vpop.permute.xlu0 %387
    %389 = vrot.lane.b32.xlu0 %v232, 80
    %v390 = vpop.permute.xlu0 %389
    %v392 = vsel %vm235, %v388, 0
    %v395 = vsel %vm235, %v390, 0
    %397 = vmatpush.bf16.xpose.msra.mxu0 0
    %398 = vmatpush.bf16.xpose.msra.mxu0 0
    %399 = vmatpush.bf16.xpose.msra.mxu0 0
    %400 = vmatpush.bf16.xpose.msra.mxu0 0
    %401 = vmatpush.bf16.xpose.msra.mxu0 0
    %402 = vmatpush.bf16.xpose.msra.mxu0 0
    %403 = vmatpush.bf16.xpose.msra.mxu0 0
    %404 = vmatpush.bf16.xpose.msra.mxu0 %v395
    %405 = vmatmul.bf16.gmra.mxu0 %v392
    %v406 = vpop.f32.mrf.mxu0
    %v407 = vadd.f32 0.0, %v406
    %v408 = vpop.f32.mrf.mxu0
    %409 = vdwg.mxu0
    %v410 = vsel %vm229, %v407, -1e+09
    %v411 = vsel %vm235, %v410, -inf
    %412 = vmax.xlane.f32.xlu0 %v411
    %v413 = vpop.xlane.xlu0 %412
    %v414 = vsub.f32 %v410, %v413
    %v415 = vmul.f32 %v414, 1.442695
    %v416 = vpow.pop %v415
    %v417 = vsel %vm235, %v416, 0.0
    %418 = vadd.xlane.f32.xlu0 %v417
    %v419 = vpop.xlane.xlu0 %418
    %v420 = vrcp.pop %v419
    %v421 = vmul.f32 %v416, %v420
    %v422 = vpack.c.bf16 %v421, %v421
    %423 = vrot.lane.b32.xlu0 %v232, 48
    %v424 = vpop.permute.xlu0 %423
    %v426 = vsel %vm235, %v422, 0
    %v429 = vsel %vm273, %v424, 0
    %431 = vmatpush.bf16.msra.mxu0 0
    %432 = vmatpush.bf16.msra.mxu0 0
    %433 = vmatpush.bf16.msra.mxu0 0
    %434 = vmatpush.bf16.msra.mxu0 0
    %435 = vmatpush.bf16.msra.mxu0 0
    %436 = vmatpush.bf16.msra.mxu0 0
    %437 = vmatpush.bf16.msra.mxu0 0
    %438 = vmatpush.bf16.msra.mxu0 %v429
    %439 = vmatmul.bf16.gmra.mxu0 %v426
    %v440 = vpop.f32.mrf.mxu0
    %v441 = vadd.f32 0.0, %v440
    %v442 = vpop.f32.mrf.mxu0
    %443 = vdwg.mxu0
    %v444 = vpack.c.bf16 %v441, %v441
    %v446 = vsel %vm235, %v444, 0
    %v449 = vsel %vm273, %v226, 0
    %451 = vmatpush.bf16.msra.mxu0 0
    %452 = vmatpush.bf16.msra.mxu0 0
    %453 = vmatpush.bf16.msra.mxu0 0
    %454 = vmatpush.bf16.msra.mxu0 0
    %455 = vmatpush.bf16.msra.mxu0 0
    %456 = vmatpush.bf16.msra.mxu0 0
    %457 = vmatpush.bf16.msra.mxu0 0
    %458 = vmatpush.bf16.msra.mxu0 %v449
    %459 = vmatmul.bf16.gmra.mxu0 %v446
    %v460 = vpop.f32.mrf.mxu0
    %v461 = vadd.f32 0.0, %v460
    %v462 = vpop.f32.mrf.mxu0
    %463 = vdwg.mxu0
    %v464 = vadd.f32 %v384, %v461
    %465 = vrot.lane.b32.xlu0 %v232, 104
    %v466 = vpop.permute.xlu0 %465
    %467 = vrot.lane.b32.xlu0 %v232, 72
    %v468 = vpop.permute.xlu0 %467
    %v470 = vsel %vm235, %v466, 0
    %v473 = vsel %vm235, %v468, 0
    %475 = vmatpush.bf16.xpose.msra.mxu0 0
    %476 = vmatpush.bf16.xpose.msra.mxu0 0
    %477 = vmatpush.bf16.xpose.msra.mxu0 0
    %478 = vmatpush.bf16.xpose.msra.mxu0 0
    %479 = vmatpush.bf16.xpose.msra.mxu0 0
    %480 = vmatpush.bf16.xpose.msra.mxu0 0
    %481 = vmatpush.bf16.xpose.msra.mxu0 0
    %482 = vmatpush.bf16.xpose.msra.mxu0 %v473
    %483 = vmatmul.bf16.gmra.mxu0 %v470
    %v484 = vpop.f32.mrf.mxu0
    %v485 = vadd.f32 0.0, %v484
    %v486 = vpop.f32.mrf.mxu0
    %487 = vdwg.mxu0
    %v488 = vsel %vm229, %v485, -1e+09
    %v489 = vsel %vm235, %v488, -inf
    %490 = vmax.xlane.f32.xlu0 %v489
    %v491 = vpop.xlane.xlu0 %490
    %v492 = vsub.f32 %v488, %v491
    %v493 = vmul.f32 %v492, 1.442695
    %v494 = vpow.pop %v493
    %v495 = vsel %vm235, %v494, 0.0
    %496 = vadd.xlane.f32.xlu0 %v495
    %v497 = vpop.xlane.xlu0 %496
    %v498 = vrcp.pop %v497
    %v499 = vmul.f32 %v494, %v498
    %v500 = vpack.c.bf16 %v499, %v499
    %501 = vrot.lane.b32.xlu0 %v232, 40
    %v502 = vpop.permute.xlu0 %501
    %v504 = vsel %vm235, %v500, 0
    %v507 = vsel %vm273, %v502, 0
    %509 = vmatpush.bf16.msra.mxu0 0
    %510 = vmatpush.bf16.msra.mxu0 0
    %511 = vmatpush.bf16.msra.mxu0 0
    %512 = vmatpush.bf16.msra.mxu0 0
    %513 = vmatpush.bf16.msra.mxu0 0
    %514 = vmatpush.bf16.msra.mxu0 0
    %515 = vmatpush.bf16.msra.mxu0 0
    %516 = vmatpush.bf16.msra.mxu0 %v507
    %517 = vmatmul.bf16.gmra.mxu0 %v504
    %v518 = vpop.f32.mrf.mxu0
    %v519 = vadd.f32 0.0, %v518
    %v520 = vpop.f32.mrf.mxu0
    %521 = vdwg.mxu0
    %v522 = vpack.c.bf16 %v519, %v519
    %v524 = vsel %vm235, %v522, 0
    %v527 = vsel %vm273, %v227, 0
    %529 = vmatpush.bf16.msra.mxu0 0
    %530 = vmatpush.bf16.msra.mxu0 0
    %531 = vmatpush.bf16.msra.mxu0 0
    %532 = vmatpush.bf16.msra.mxu0 0
    %533 = vmatpush.bf16.msra.mxu0 0
    %534 = vmatpush.bf16.msra.mxu0 0
    %535 = vmatpush.bf16.msra.mxu0 0
    %536 = vmatpush.bf16.msra.mxu0 %v527
    %537 = vmatmul.bf16.gmra.mxu0 %v524
    %v538 = vpop.f32.mrf.mxu0
    %v539 = vadd.f32 0.0, %v538
    %v540 = vpop.f32.mrf.mxu0
    %541 = vdwg.mxu0
    %v542 = vadd.f32 %v464, %v539
    %s543 = scalar_lea.vmem [#allocation5], 8
    %v544 = vld [vmem:[%s543] sm:$0xff]
    %vm545 = vcmp.gt.f32.partialorder %v544, 0.0
    %v547 = vunpack.c.l.b16 %v223
    %v548 = vpack.c.b16 %v547, %v547
    %549 = vrot.lane.b32.xlu0 %v548, 96
    %v550 = vpop.permute.xlu0 %549
    %v552 = vsel %vm235, %v223, 0
    %v555 = vsel %vm235, %v550, 0
    %557 = vmatpush.bf16.xpose.msra.mxu0 0
    %558 = vmatpush.bf16.xpose.msra.mxu0 0
    %559 = vmatpush.bf16.xpose.msra.mxu0 0
    %560 = vmatpush.bf16.xpose.msra.mxu0 0
    %561 = vmatpush.bf16.xpose.msra.mxu0 0
    %562 = vmatpush.bf16.xpose.msra.mxu0 0
    %563 = vmatpush.bf16.xpose.msra.mxu0 0
    %564 = vmatpush.bf16.xpose.msra.mxu0 %v555
    %565 = vmatmul.bf16.gmra.mxu0 %v552
    %v566 = vpop.f32.mrf.mxu0
    %v567 = vadd.f32 0.0, %v566
    %v568 = vpop.f32.mrf.mxu0
    %569 = vdwg.mxu0
    %v570 = vsel %vm545, %v567, -1e+09
    %v571 = vsel %vm235, %v570, -inf
    %572 = vmax.xlane.f32.xlu0 %v571
    %v573 = vpop.xlane.xlu0 %572
    %v574 = vsub.f32 %v570, %v573
    %v575 = vmul.f32 %v574, 1.442695
    %v576 = vpow.pop %v575
    %v577 = vsel %vm235, %v576, 0.0
    %578 = vadd.xlane.f32.xlu0 %v577
    %v579 = vpop.xlane.xlu0 %578
    %v580 = vrcp.pop %v579
    %v581 = vmul.f32 %v576, %v580
    %v582 = vpack.c.bf16 %v581, %v581
    %583 = vrot.lane.b32.xlu0 %v548, 64
    %v584 = vpop.permute.xlu0 %583
    %v586 = vsel %vm235, %v582, 0
    %v589 = vsel %vm273, %v584, 0
    %591 = vmatpush.bf16.msra.mxu0 0
    %592 = vmatpush.bf16.msra.mxu0 0
    %593 = vmatpush.bf16.msra.mxu0 0
    %594 = vmatpush.bf16.msra.mxu0 0
    %595 = vmatpush.bf16.msra.mxu0 0
    %596 = vmatpush.bf16.msra.mxu0 0
    %597 = vmatpush.bf16.msra.mxu0 0
    %598 = vmatpush.bf16.msra.mxu0 %v589
    %599 = vmatmul.bf16.gmra.mxu0 %v586
    %v600 = vpop.f32.mrf.mxu0
    %v601 = vadd.f32 0.0, %v600
    %v602 = vpop.f32.mrf.mxu0
    %603 = vdwg.mxu0
    %v604 = vpack.c.bf16 %v601, %v601
    %605 = vrot.lane.b32.xlu0 %v548, 120
    %v606 = vpop.permute.xlu0 %605
    %607 = vrot.lane.b32.xlu0 %v548, 88
    %v608 = vpop.permute.xlu0 %607
    %v610 = vsel %vm235, %v606, 0
    %v613 = vsel %vm235, %v608, 0
    %615 = vmatpush.bf16.xpose.msra.mxu0 0
    %616 = vmatpush.bf16.xpose.msra.mxu0 0
    %617 = vmatpush.bf16.xpose.msra.mxu0 0
    %618 = vmatpush.bf16.xpose.msra.mxu0 0
    %619 = vmatpush.bf16.xpose.msra.mxu0 0
    %620 = vmatpush.bf16.xpose.msra.mxu0 0
    %621 = vmatpush.bf16.xpose.msra.mxu0 0
    %622 = vmatpush.bf16.xpose.msra.mxu0 %v613
    %623 = vmatmul.bf16.gmra.mxu0 %v610
    %v624 = vpop.f32.mrf.mxu0
    %v625 = vadd.f32 0.0, %v624
    %v626 = vpop.f32.mrf.mxu0
    %627 = vdwg.mxu0
    %v628 = vsel %vm545, %v625, -1e+09
    %v629 = vsel %vm235, %v628, -inf
    %630 = vmax.xlane.f32.xlu0 %v629
    %v631 = vpop.xlane.xlu0 %630
    %v632 = vsub.f32 %v628, %v631
    %v633 = vmul.f32 %v632, 1.442695
    %v634 = vpow.pop %v633
    %v635 = vsel %vm235, %v634, 0.0
    %636 = vadd.xlane.f32.xlu0 %v635
    %v637 = vpop.xlane.xlu0 %636
    %v638 = vrcp.pop %v637
    %v639 = vmul.f32 %v634, %v638
    %v640 = vpack.c.bf16 %v639, %v639
    %641 = vrot.lane.b32.xlu0 %v548, 56
    %v642 = vpop.permute.xlu0 %641
    %v644 = vsel %vm235, %v640, 0
    %v647 = vsel %vm273, %v642, 0
    %649 = vmatpush.bf16.msra.mxu0 0
    %650 = vmatpush.bf16.msra.mxu0 0
    %651 = vmatpush.bf16.msra.mxu0 0
    %652 = vmatpush.bf16.msra.mxu0 0
    %653 = vmatpush.bf16.msra.mxu0 0
    %654 = vmatpush.bf16.msra.mxu0 0
    %655 = vmatpush.bf16.msra.mxu0 0
    %656 = vmatpush.bf16.msra.mxu0 %v647
    %657 = vmatmul.bf16.gmra.mxu0 %v644
    %v658 = vpop.f32.mrf.mxu0
    %v659 = vadd.f32 0.0, %v658
    %v660 = vpop.f32.mrf.mxu0
    %661 = vdwg.mxu0
    %v662 = vpack.c.bf16 %v659, %v659
    %v664 = vsel %vm235, %v662, 0
    %666 = vmatpush.bf16.msra.mxu0 0
    %667 = vmatpush.bf16.msra.mxu0 0
    %668 = vmatpush.bf16.msra.mxu0 0
    %669 = vmatpush.bf16.msra.mxu0 0
    %670 = vmatpush.bf16.msra.mxu0 0
    %671 = vmatpush.bf16.msra.mxu0 0
    %672 = vmatpush.bf16.msra.mxu0 0
    %673 = vmatpush.bf16.msra.mxu0 %v353
    %674 = vmatmul.bf16.gmra.mxu0 %v664
    %v675 = vpop.f32.mrf.mxu0
    %v676 = vadd.f32 0.0, %v675
    %v677 = vpop.f32.mrf.mxu0
    %678 = vdwg.mxu0
    %v680 = vsel %vm235, %v604, 0
    %682 = vmatpush.bf16.msra.mxu0 0
    %683 = vmatpush.bf16.msra.mxu0 0
    %684 = vmatpush.bf16.msra.mxu0 0
    %685 = vmatpush.bf16.msra.mxu0 0
    %686 = vmatpush.bf16.msra.mxu0 0
    %687 = vmatpush.bf16.msra.mxu0 0
    %688 = vmatpush.bf16.msra.mxu0 0
    %689 = vmatpush.bf16.msra.mxu0 %v372
    %690 = vmatmul.bf16.gmra.mxu0 %v680
    %v691 = vpop.f32.mrf.mxu0
    %v692 = vadd.f32 %v676, %v691
    %v693 = vpop.f32.mrf.mxu0
    %694 = vdwg.mxu0
    %695 = vrot.lane.b32.xlu0 %v548, 112
    %v696 = vpop.permute.xlu0 %695
    %697 = vrot.lane.b32.xlu0 %v548, 80
    %v698 = vpop.permute.xlu0 %697
    %v700 = vsel %vm235, %v696, 0
    %v703 = vsel %vm235, %v698, 0
    %705 = vmatpush.bf16.xpose.msra.mxu0 0
    %706 = vmatpush.bf16.xpose.msra.mxu0 0
    %707 = vmatpush.bf16.xpose.msra.mxu0 0
    %708 = vmatpush.bf16.xpose.msra.mxu0 0
    %709 = vmatpush.bf16.xpose.msra.mxu0 0
    %710 = vmatpush.bf16.xpose.msra.mxu0 0
    %711 = vmatpush.bf16.xpose.msra.mxu0 0
    %712 = vmatpush.bf16.xpose.msra.mxu0 %v703
    %713 = vmatmul.bf16.gmra.mxu0 %v700
    %v714 = vpop.f32.mrf.mxu0
    %v715 = vadd.f32 0.0, %v714
    %v716 = vpop.f32.mrf.mxu0
    %717 = vdwg.mxu0
    %v718 = vsel %vm545, %v715, -1e+09
    %v719 = vsel %vm235, %v718, -inf
    %720 = vmax.xlane.f32.xlu0 %v719
    %v721 = vpop.xlane.xlu0 %720
    %v722 = vsub.f32 %v718, %v721
    %v723 = vmul.f32 %v722, 1.442695
    %v724 = vpow.pop %v723
    %v725 = vsel %vm235, %v724, 0.0
    %726 = vadd.xlane.f32.xlu0 %v725
    %v727 = vpop.xlane.xlu0 %726
    %v728 = vrcp.pop %v727
    %v729 = vmul.f32 %v724, %v728
    %v730 = vpack.c.bf16 %v729, %v729
    %731 = vrot.lane.b32.xlu0 %v548, 48
    %v732 = vpop.permute.xlu0 %731
    %v734 = vsel %vm235, %v730, 0
    %v737 = vsel %vm273, %v732, 0
    %739 = vmatpush.bf16.msra.mxu0 0
    %740 = vmatpush.bf16.msra.mxu0 0
    %741 = vmatpush.bf16.msra.mxu0 0
    %742 = vmatpush.bf16.msra.mxu0 0
    %743 = vmatpush.bf16.msra.mxu0 0
    %744 = vmatpush.bf16.msra.mxu0 0
    %745 = vmatpush.bf16.msra.mxu0 0
    %746 = vmatpush.bf16.msra.mxu0 %v737
    %747 = vmatmul.bf16.gmra.mxu0 %v734
    %v748 = vpop.f32.mrf.mxu0
    %v749 = vadd.f32 0.0, %v748
    %v750 = vpop.f32.mrf.mxu0
    %751 = vdwg.mxu0
    %v752 = vpack.c.bf16 %v749, %v749
    %v754 = vsel %vm235, %v752, 0
    %756 = vmatpush.bf16.msra.mxu0 0
    %757 = vmatpush.bf16.msra.mxu0 0
    %758 = vmatpush.bf16.msra.mxu0 0
    %759 = vmatpush.bf16.msra.mxu0 0
    %760 = vmatpush.bf16.msra.mxu0 0
    %761 = vmatpush.bf16.msra.mxu0 0
    %762 = vmatpush.bf16.msra.mxu0 0
    %763 = vmatpush.bf16.msra.mxu0 %v449
    %764 = vmatmul.bf16.gmra.mxu0 %v754
    %v765 = vpop.f32.mrf.mxu0
    %v766 = vadd.f32 0.0, %v765
    %v767 = vpop.f32.mrf.mxu0
    %768 = vdwg.mxu0
    %v769 = vadd.f32 %v692, %v766
    %770 = vrot.lane.b32.xlu0 %v548, 104
    %v771 = vpop.permute.xlu0 %770
    %772 = vrot.lane.b32.xlu0 %v548, 72
    %v773 = vpop.permute.xlu0 %772
    %v775 = vsel %vm235, %v771, 0
    %v778 = vsel %vm235, %v773, 0
    %780 = vmatpush.bf16.xpose.msra.mxu0 0
    %781 = vmatpush.bf16.xpose.msra.mxu0 0
    %782 = vmatpush.bf16.xpose.msra.mxu0 0
    %783 = vmatpush.bf16.xpose.msra.mxu0 0
    %784 = vmatpush.bf16.xpose.msra.mxu0 0
    %785 = vmatpush.bf16.xpose.msra.mxu0 0
    %786 = vmatpush.bf16.xpose.msra.mxu0 0
    %787 = vmatpush.bf16.xpose.msra.mxu0 %v778
    %788 = vmatmul.bf16.gmra.mxu0 %v775
    %v789 = vpop.f32.mrf.mxu0
    %v790 = vadd.f32 0.0, %v789
    %v791 = vpop.f32.mrf.mxu0
    %792 = vdwg.mxu0
    %v793 = vsel %vm545, %v790, -1e+09
    %v794 = vsel %vm235, %v793, -inf
    %795 = vmax.xlane.f32.xlu0 %v794
    %v796 = vpop.xlane.xlu0 %795
    %v797 = vsub.f32 %v793, %v796
    %v798 = vmul.f32 %v797, 1.442695
    %v799 = vpow.pop %v798
    %v800 = vsel %vm235, %v799, 0.0
    %801 = vadd.xlane.f32.xlu0 %v800
    %v802 = vpop.xlane.xlu0 %801
    %v803 = vrcp.pop %v802
    %v804 = vmul.f32 %v799, %v803
    %v805 = vpack.c.bf16 %v804, %v804
    %806 = vrot.lane.b32.xlu0 %v548, 40
    %v807 = vpop.permute.xlu0 %806
    %v809 = vsel %vm235, %v805, 0
    %v812 = vsel %vm273, %v807, 0
    %814 = vmatpush.bf16.msra.mxu0 0
    %815 = vmatpush.bf16.msra.mxu0 0
    %816 = vmatpush.bf16.msra.mxu0 0
    %817 = vmatpush.bf16.msra.mxu0 0
    %818 = vmatpush.bf16.msra.mxu0 0
    %819 = vmatpush.bf16.msra.mxu0 0
    %820 = vmatpush.bf16.msra.mxu0 0
    %821 = vmatpush.bf16.msra.mxu0 %v812
    %822 = vmatmul.bf16.gmra.mxu0 %v809
    %v823 = vpop.f32.mrf.mxu0
    %v824 = vadd.f32 0.0, %v823
    %v825 = vpop.f32.mrf.mxu0
    %826 = vdwg.mxu0
    %v827 = vpack.c.bf16 %v824, %v824
    %v829 = vsel %vm235, %v827, 0
    %831 = vmatpush.bf16.msra.mxu0 0
    %832 = vmatpush.bf16.msra.mxu0 0
    %833 = vmatpush.bf16.msra.mxu0 0
    %834 = vmatpush.bf16.msra.mxu0 0
    %835 = vmatpush.bf16.msra.mxu0 0
    %836 = vmatpush.bf16.msra.mxu0 0
    %837 = vmatpush.bf16.msra.mxu0 0
    %838 = vmatpush.bf16.msra.mxu0 %v527
    %839 = vmatmul.bf16.gmra.mxu0 %v829
    %v840 = vpop.f32.mrf.mxu0
    %v841 = vadd.f32 0.0, %v840
    %v842 = vpop.f32.mrf.mxu0
    %843 = vdwg.mxu0
    %v844 = vadd.f32 %v769, %v841
    %v845 = vadd.f32 %v118, %v542
    %v846 = vadd.f32 %v119, %v844
    %v847 = vld [vmem:[%s7] sm:$0x1]
    %v849 = vperm.slane %v847, 0
    %v851 = vadd.f32 %v845, %v849
    %v852 = vadd.f32 %v846, %v849
    %v853 = vld [vmem:[#allocation8] sm:$0x1]
    %v854 = vld [vmem:[%s9] sm:$0x1]
    %v855 = vsel %vm122, %v851, 0.0
    %856 = vadd.xlane.f32.xlu0 %v855
    %v857 = vpop.xlane.xlu0 %856
    %v858 = vsel %vm122, %v852, 0.0
    %859 = vadd.xlane.f32.xlu0 %v858
    %v860 = vpop.xlane.xlu0 %859
    %v861 = vmul.f32 %v857, %v135
    %v862 = vmul.f32 %v860, %v135
    %v863 = vsub.f32 %v851, %v861
    %v864 = vsub.f32 %v852, %v862
    %v865 = vmul.f32 %v863, %v863
    %v866 = vmul.f32 %v864, %v864
    %v867 = vsel %vm122, %v865, 0.0
    %868 = vadd.xlane.f32.xlu0 %v867
    %v869 = vpop.xlane.xlu0 %868
    %v870 = vsel %vm122, %v866, 0.0
    %871 = vadd.xlane.f32.xlu0 %v870
    %v872 = vpop.xlane.xlu0 %871
    %v873 = vmul.f32 %v869, %v135
    %v874 = vmul.f32 %v872, %v135
    %v875 = vadd.f32 %v873, 1e-06
    %v876 = vadd.f32 %v874, 1e-06
    %v877 = vrsqrt.pop %v875
    %v878 = vmul.f32 %v877, %v875
    %v879 = vmul.f32 %v878, %v877
    %v880 = vmul.f32 0.5, %v879
    %v881 = vsub.f32 1.5, %v880
    %v882 = vmul.f32 %v877, %v881
    %vm883 = vweird.f32 %v875
    %vm884 = vweird.f32 %v877
    %vm885 = vmor %vm883, %vm884
    %v886 = vsel %vm885, %v877, %v882
    %v887 = vrsqrt.pop %v876
    %v888 = vmul.f32 %v887, %v876
    %v889 = vmul.f32 %v888, %v887
    %v890 = vmul.f32 0.5, %v889
    %v891 = vsub.f32 1.5, %v890
    %v892 = vmul.f32 %v887, %v891
    %vm893 = vweird.f32 %v876
    %vm894 = vweird.f32 %v887
    %vm895 = vmor %vm893, %vm894
    %v896 = vsel %vm895, %v887, %v892
    %v897 = vmul.f32 %v863, %v886
    %v898 = vmul.f32 %v864, %v896
    %v900 = vperm.slane %v853, 0
    %v902 = vmul.f32 %v897, %v900
    %v903 = vmul.f32 %v898, %v900
    %v905 = vperm.slane %v854, 0
    %v907 = vadd.f32 %v902, %v905
    %v908 = vadd.f32 %v903, %v905
    %v909 = vpack.c.bf16 %v908, %v907
    %v910 = vld [vmem:[%s10] sm:$0xf]
    %v911 = vld [vmem:[%s10 + $0x4] sm:$0xf]
    %v912 = vld [vmem:[%s10 + $0x8] sm:$0xf]
    %v913 = vld [vmem:[%s10 + $0xc] sm:$0xf]
    %v914 = vld [vmem:[%s11] sm:$0x1]
    %v916 = vperm.slane %v914, 0
    %v922 = vunpack.c.l.b16 %v910
    %v923 = vunpack.c.l.b16 %v911
    %v924 = vunpack.c.l.b16 %v912
    %v925 = vunpack.c.l.b16 %v913
    %v926 = vpack.c.b16 %v923, %v922
    %v927 = vpack.c.b16 %v925, %v924
    %v931 = vsel %vm122, %v909, 0
    %933 = vmatpush.bf16.msra.mxu0 0
    %934 = vmatpush.bf16.msra.mxu0 0
    %935 = vmatpush.bf16.msra.mxu0 0
    %936 = vmatpush.bf16.msra.mxu0 0
    %937 = vmatpush.bf16.msra.mxu0 0
    %938 = vmatpush.bf16.msra.mxu0 0
    %939 = vmatpush.bf16.msra.mxu0 %v927
    %940 = vmatpush.bf16.msra.mxu0 %v926
    %941 = vmatmul.bf16.gmra.mxu0 %v931
    %v942 = vpop.f32.mrf.mxu0
    %v943 = vadd.f32 %v916, %v942
    %v944 = vpop.f32.mrf.mxu0
    %v945 = vadd.f32 %v916, %v944
    %946 = vdwg.mxu0
    %v947 = vmax.f32 %v943, 0.0
    %v948 = vmax.f32 %v945, 0.0
    %v949 = vpack.c.bf16 %v948, %v947
    %v950 = vld [vmem:[%s12] sm:$0xf]
    %v951 = vld [vmem:[%s12 + $0x4] sm:$0xf]
    %v952 = vld [vmem:[%s12 + $0x8] sm:$0xf]
    %v953 = vld [vmem:[%s12 + $0xc] sm:$0xf]
    %v954 = vld [vmem:[%s12 + $0x10] sm:$0xf]
    %v955 = vld [vmem:[%s12 + $0x14] sm:$0xf]
    %v956 = vld [vmem:[%s12 + $0x18] sm:$0xf]
    %v957 = vld [vmem:[%s12 + $0x1c] sm:$0xf]
    %v966 = vunpack.c.l.b16 %v950
    %v967 = vunpack.c.l.b16 %v951
    %v968 = vunpack.c.l.b16 %v952
    %v969 = vunpack.c.l.b16 %v953
    %v970 = vunpack.c.l.b16 %v954
    %v971 = vunpack.c.l.b16 %v955
    %v972 = vunpack.c.l.b16 %v956
    %v973 = vunpack.c.l.b16 %v957
    %v974 = vpack.c.b16 %v967, %v966
    %v975 = vpack.c.b16 %v969, %v968
    %v976 = vpack.c.b16 %v971, %v970
    %v977 = vpack.c.b16 %v973, %v972
    %vm982 = vcmask 523264
    %v984 = vsel %vm982, %v949, 0
    %986 = vmatpush.bf16.msra.mxu0 0
    %987 = vmatpush.bf16.msra.mxu0 0
    %988 = vmatpush.bf16.msra.mxu0 0
    %989 = vmatpush.bf16.msra.mxu0 0
    %990 = vmatpush.bf16.msra.mxu0 %v977
    %991 = vmatpush.bf16.msra.mxu0 %v976
    %992 = vmatpush.bf16.msra.mxu0 %v975
    %993 = vmatpush.bf16.msra.mxu0 %v974
    %994 = vmatmul.bf16.gmra.mxu0 %v984
    %v995 = vpop.f32.mrf.mxu0
    %v996 = vadd.f32 0.0, %v995
    %v997 = vpop.f32.mrf.mxu0
    %v998 = vadd.f32 0.0, %v997
    %999 = vdwg.mxu0
    %v1000 = vadd.f32 %v851, %v996
    %v1001 = vadd.f32 %v852, %v998
    %v1002 = vld [vmem:[%s13] sm:$0x1]
    %v1004 = vperm.slane %v1002, 0
    %v1006 = vadd.f32 %v1000, %v1004
    %v1007 = vadd.f32 %v1001, %v1004
    %s1008 = scalar_lea.vmem [#allocation7], 1
    %v1009 = vld [vmem:[%s1008] sm:$0x1]
    %s1010 = scalar_lea.vmem %s3, 1
    %v1011 = vld [vmem:[%s1010] sm:$0x1]
    %v1012 = vsel %vm122, %v1006, 0.0
    %1013 = vadd.xlane.f32.xlu0 %v1012
    %v1014 = vpop.xlane.xlu0 %1013
    %v1015 = vsel %vm122, %v1007, 0.0
    %1016 = vadd.xlane.f32.xlu0 %v1015
    %v1017 = vpop.xlane.xlu0 %1016
    %v1018 = vmul.f32 %v1014, %v135
    %v1019 = vmul.f32 %v1017, %v135
    %v1020 = vsub.f32 %v1006, %v1018
    %v1021 = vsub.f32 %v1007, %v1019
    %v1022 = vmul.f32 %v1020, %v1020
    %v1023 = vmul.f32 %v1021, %v1021
    %v1024 = vsel %vm122, %v1022, 0.0
    %1025 = vadd.xlane.f32.xlu0 %v1024
    %v1026 = vpop.xlane.xlu0 %1025
    %v1027 = vsel %vm122, %v1023, 0.0
    %1028 = vadd.xlane.f32.xlu0 %v1027
    %v1029 = vpop.xlane.xlu0 %1028
    %v1030 = vmul.f32 %v1026, %v135
    %v1031 = vmul.f32 %v1029, %v135
    %v1032 = vadd.f32 %v1030, 1e-06
    %v1033 = vadd.f32 %v1031, 1e-06
    %v1034 = vrsqrt.pop %v1032
    %v1035 = vmul.f32 %v1034, %v1032
    %v1036 = vmul.f32 %v1035, %v1034
    %v1037 = vmul.f32 0.5, %v1036
    %v1038 = vsub.f32 1.5, %v1037
    %v1039 = vmul.f32 %v1034, %v1038
    %vm1040 = vweird.f32 %v1032
    %vm1041 = vweird.f32 %v1034
    %vm1042 = vmor %vm1040, %vm1041
    %v1043 = vsel %vm1042, %v1034, %v1039
    %v1044 = vrsqrt.pop %v1033
    %v1045 = vmul.f32 %v1044, %v1033
    %v1046 = vmul.f32 %v1045, %v1044
    %v1047 = vmul.f32 0.5, %v1046
    %v1048 = vsub.f32 1.5, %v1047
    %v1049 = vmul.f32 %v1044, %v1048
    %vm1050 = vweird.f32 %v1033
    %vm1051 = vweird.f32 %v1044
    %vm1052 = vmor %vm1050, %vm1051
    %v1053 = vsel %vm1052, %v1044, %v1049
    %v1054 = vmul.f32 %v1020, %v1043
    %v1055 = vmul.f32 %v1021, %v1053
    %v1057 = vperm.slane %v1009, 0
    %v1059 = vmul.f32 %v1054, %v1057
    %v1060 = vmul.f32 %v1055, %v1057
    %v1062 = vperm.slane %v1011, 0
    %v1064 = vadd.f32 %v1059, %v1062
    %v1065 = vadd.f32 %v1060, %v1062
    %v1066 = vpack.c.bf16 %v1065, %v1064
    %s1067 = scalar_lea.vmem %s4, 16
    %v1068 = vld [vmem:[%s1067] sm:$0xf]
    %v1069 = vld [vmem:[%s1067 + $0x4] sm:$0xf]
    %v1070 = vld [vmem:[%s1067 + $0x8] sm:$0xf]
    %v1071 = vld [vmem:[%s1067 + $0xc] sm:$0xf]
    %s1072 = scalar_lea.vmem %s5, 1
    %v1073 = vld [vmem:[%s1072] sm:$0x1]
    %v1075 = vperm.slane %v1073, 0
    %v1081 = vunpack.c.l.b16 %v1068
    %v1082 = vunpack.c.l.b16 %v1069
    %v1083 = vunpack.c.l.b16 %v1070
    %v1084 = vunpack.c.l.b16 %v1071
    %v1085 = vpack.c.b16 %v1082, %v1081
    %v1086 = vpack.c.b16 %v1084, %v1083
    %v1090 = vsel %vm122, %v1066, 0
    %1092 = vmatpush.bf16.msra.mxu0 0
    %1093 = vmatpush.bf16.msra.mxu0 0
    %1094 = vmatpush.bf16.msra.mxu0 0
    %1095 = vmatpush.bf16.msra.mxu0 0
    %1096 = vmatpush.bf16.msra.mxu0 0
    %1097 = vmatpush.bf16.msra.mxu0 0
    %1098 = vmatpush.bf16.msra.mxu0 %v1086
    %1099 = vmatpush.bf16.msra.mxu0 %v1085
    %1100 = vmatmul.bf16.gmra.mxu0 %v1090
    %v1101 = vpop.f32.mrf.mxu0
    %v1102 = vadd.f32 %v1075, %v1101
    %v1103 = vpop.f32.mrf.mxu0
    %v1104 = vadd.f32 %v1075, %v1103
    %1105 = vdwg.mxu0
    %v1106 = vpack.c.bf16 %v1102, %v1102
    %v1107 = vpack.c.bf16 %v1104, %v1104
    %s1108 = scalar_lea.vmem %s6, 16
    %v1109 = vld [vmem:[%s1108] sm:$0xf]
    %v1110 = vld [vmem:[%s1108 + $0x4] sm:$0xf]
    %v1111 = vld [vmem:[%s1108 + $0x8] sm:$0xf]
    %v1112 = vld [vmem:[%s1108 + $0xc] sm:$0xf]
    %v1113 = vld [vmem:[#allocation5] sm:$0xff]
    %vm1114 = vcmp.gt.f32.partialorder %v1113, 0.0
    %v1116 = vunpack.c.l.b16 %v1106
    %v1117 = vpack.c.b16 %v1116, %v1116
    %1118 = vrot.lane.b32.xlu0 %v1117, 96
    %v1119 = vpop.permute.xlu0 %1118
    %v1121 = vsel %vm235, %v1106, 0
    %v1124 = vsel %vm235, %v1119, 0
    %1126 = vmatpush.bf16.xpose.msra.mxu0 0
    %1127 = vmatpush.bf16.xpose.msra.mxu0 0
    %1128 = vmatpush.bf16.xpose.msra.mxu0 0
    %1129 = vmatpush.bf16.xpose.msra.mxu0 0
    %1130 = vmatpush.bf16.xpose.msra.mxu0 0
    %1131 = vmatpush.bf16.xpose.msra.mxu0 0
    %1132 = vmatpush.bf16.xpose.msra.mxu0 0
    %1133 = vmatpush.bf16.xpose.msra.mxu0 %v1124
    %1134 = vmatmul.bf16.gmra.mxu0 %v1121
    %v1135 = vpop.f32.mrf.mxu0
    %v1136 = vadd.f32 0.0, %v1135
    %v1137 = vpop.f32.mrf.mxu0
    %1138 = vdwg.mxu0
    %v1139 = vsel %vm1114, %v1136, -1e+09
    %v1140 = vsel %vm235, %v1139, -inf
    %1141 = vmax.xlane.f32.xlu0 %v1140
    %v1142 = vpop.xlane.xlu0 %1141
    %v1143 = vsub.f32 %v1139, %v1142
    %v1144 = vmul.f32 %v1143, 1.442695
    %v1145 = vpow.pop %v1144
    %v1146 = vsel %vm235, %v1145, 0.0
    %1147 = vadd.xlane.f32.xlu0 %v1146
    %v1148 = vpop.xlane.xlu0 %1147
    %v1149 = vrcp.pop %v1148
    %v1150 = vmul.f32 %v1145, %v1149
    %v1151 = vpack.c.bf16 %v1150, %v1150
    %1152 = vrot.lane.b32.xlu0 %v1117, 64
    %v1153 = vpop.permute.xlu0 %1152
    %v1155 = vsel %vm235, %v1151, 0
    %v1158 = vsel %vm273, %v1153, 0
    %1160 = vmatpush.bf16.msra.mxu0 0
    %1161 = vmatpush.bf16.msra.mxu0 0
    %1162 = vmatpush.bf16.msra.mxu0 0
    %1163 = vmatpush.bf16.msra.mxu0 0
    %1164 = vmatpush.bf16.msra.mxu0 0
    %1165 = vmatpush.bf16.msra.mxu0 0
    %1166 = vmatpush.bf16.msra.mxu0 0
    %1167 = vmatpush.bf16.msra.mxu0 %v1158
    %1168 = vmatmul.bf16.gmra.mxu0 %v1155
    %v1169 = vpop.f32.mrf.mxu0
    %v1170 = vadd.f32 0.0, %v1169
    %v1171 = vpop.f32.mrf.mxu0
    %1172 = vdwg.mxu0
    %v1173 = vpack.c.bf16 %v1170, %v1170
    %1174 = vrot.lane.b32.xlu0 %v1117, 120
    %v1175 = vpop.permute.xlu0 %1174
    %1176 = vrot.lane.b32.xlu0 %v1117, 88
    %v1177 = vpop.permute.xlu0 %1176
    %v1179 = vsel %vm235, %v1175, 0
    %v1182 = vsel %vm235, %v1177, 0
    %1184 = vmatpush.bf16.xpose.msra.mxu0 0
    %1185 = vmatpush.bf16.xpose.msra.mxu0 0
    %1186 = vmatpush.bf16.xpose.msra.mxu0 0
    %1187 = vmatpush.bf16.xpose.msra.mxu0 0
    %1188 = vmatpush.bf16.xpose.msra.mxu0 0
    %1189 = vmatpush.bf16.xpose.msra.mxu0 0
    %1190 = vmatpush.bf16.xpose.msra.mxu0 0
    %1191 = vmatpush.bf16.xpose.msra.mxu0 %v1182
    %1192 = vmatmul.bf16.gmra.mxu0 %v1179
    %v1193 = vpop.f32.mrf.mxu0
    %v1194 = vadd.f32 0.0, %v1193
    %v1195 = vpop.f32.mrf.mxu0
    %1196 = vdwg.mxu0
    %v1197 = vsel %vm1114, %v1194, -1e+09
    %v1198 = vsel %vm235, %v1197, -inf
    %1199 = vmax.xlane.f32.xlu0 %v1198
    %v1200 = vpop.xlane.xlu0 %1199
    %v1201 = vsub.f32 %v1197, %v1200
    %v1202 = vmul.f32 %v1201, 1.442695
    %v1203 = vpow.pop %v1202
    %v1204 = vsel %vm235, %v1203, 0.0
    %1205 = vadd.xlane.f32.xlu0 %v1204
    %v1206 = vpop.xlane.xlu0 %1205
    %v1207 = vrcp.pop %v1206
    %v1208 = vmul.f32 %v1203, %v1207
    %v1209 = vpack.c.bf16 %v1208, %v1208
    %1210 = vrot.lane.b32.xlu0 %v1117, 56
    %v1211 = vpop.permute.xlu0 %1210
    %v1213 = vsel %vm235, %v1209, 0
    %v1216 = vsel %vm273, %v1211, 0
    %1218 = vmatpush.bf16.msra.mxu0 0
    %1219 = vmatpush.bf16.msra.mxu0 0
    %1220 = vmatpush.bf16.msra.mxu0 0
    %1221 = vmatpush.bf16.msra.mxu0 0
    %1222 = vmatpush.bf16.msra.mxu0 0
    %1223 = vmatpush.bf16.msra.mxu0 0
    %1224 = vmatpush.bf16.msra.mxu0 0
    %1225 = vmatpush.bf16.msra.mxu0 %v1216
    %1226 = vmatmul.bf16.gmra.mxu0 %v1213
    %v1227 = vpop.f32.mrf.mxu0
    %v1228 = vadd.f32 0.0, %v1227
    %v1229 = vpop.f32.mrf.mxu0
    %1230 = vdwg.mxu0
    %v1231 = vpack.c.bf16 %v1228, %v1228
    %v1233 = vsel %vm235, %v1231, 0
    %v1236 = vsel %vm273, %v1110, 0
    %1238 = vmatpush.bf16.msra.mxu0 0
    %1239 = vmatpush.bf16.msra.mxu0 0
    %1240 = vmatpush.bf16.msra.mxu0 0
    %1241 = vmatpush.bf16.msra.mxu0 0
    %1242 = vmatpush.bf16.msra.mxu0 0
    %1243 = vmatpush.bf16.msra.mxu0 0
    %1244 = vmatpush.bf16.msra.mxu0 0
    %1245 = vmatpush.bf16.msra.mxu0 %v1236
    %1246 = vmatmul.bf16.gmra.mxu0 %v1233
    %v1247 = vpop.f32.mrf.mxu0
    %v1248 = vadd.f32 0.0, %v1247
    %v1249 = vpop.f32.mrf.mxu0
    %1250 = vdwg.mxu0
    %v1252 = vsel %vm235, %v1173, 0
    %v1255 = vsel %vm273, %v1109, 0
    %1257 = vmatpush.bf16.msra.mxu0 0
    %1258 = vmatpush.bf16.msra.mxu0 0
    %1259 = vmatpush.bf16.msra.mxu0 0
    %1260 = vmatpush.bf16.msra.mxu0 0
    %1261 = vmatpush.bf16.msra.mxu0 0
    %1262 = vmatpush.bf16.msra.mxu0 0
    %1263 = vmatpush.bf16.msra.mxu0 0
    %1264 = vmatpush.bf16.msra.mxu0 %v1255
    %1265 = vmatmul.bf16.gmra.mxu0 %v1252
    %v1266 = vpop.f32.mrf.mxu0
    %v1267 = vadd.f32 %v1248, %v1266
    %v1268 = vpop.f32.mrf.mxu0
    %1269 = vdwg.mxu0
    %1270 = vrot.lane.b32.xlu0 %v1117, 112
    %v1271 = vpop.permute.xlu0 %1270
    %1272 = vrot.lane.b32.xlu0 %v1117, 80
    %v1273 = vpop.permute.xlu0 %1272
    %v1275 = vsel %vm235, %v1271, 0
    %v1278 = vsel %vm235, %v1273, 0
    %1280 = vmatpush.bf16.xpose.msra.mxu0 0
    %1281 = vmatpush.bf16.xpose.msra.mxu0 0
    %1282 = vmatpush.bf16.xpose.msra.mxu0 0
    %1283 = vmatpush.bf16.xpose.msra.mxu0 0
    %1284 = vmatpush.bf16.xpose.msra.mxu0 0
    %1285 = vmatpush.bf16.xpose.msra.mxu0 0
    %1286 = vmatpush.bf16.xpose.msra.mxu0 0
    %1287 = vmatpush.bf16.xpose.msra.mxu0 %v1278
    %1288 = vmatmul.bf16.gmra.mxu0 %v1275
    %v1289 = vpop.f32.mrf.mxu0
    %v1290 = vadd.f32 0.0, %v1289
    %v1291 = vpop.f32.mrf.mxu0
    %1292 = vdwg.mxu0
    %v1293 = vsel %vm1114, %v1290, -1e+09
    %v1294 = vsel %vm235, %v1293, -inf
    %1295 = vmax.xlane.f32.xlu0 %v1294
    %v1296 = vpop.xlane.xlu0 %1295
    %v1297 = vsub.f32 %v1293, %v1296
    %v1298 = vmul.f32 %v1297, 1.442695
    %v1299 = vpow.pop %v1298
    %v1300 = vsel %vm235, %v1299, 0.0
    %1301 = vadd.xlane.f32.xlu0 %v1300
    %v1302 = vpop.xlane.xlu0 %1301
    %v1303 = vrcp.pop %v1302
    %v1304 = vmul.f32 %v1299, %v1303
    %v1305 = vpack.c.bf16 %v1304, %v1304
    %1306 = vrot.lane.b32.xlu0 %v1117, 48
    %v1307 = vpop.permute.xlu0 %1306
    %v1309 = vsel %vm235, %v1305, 0
    %v1312 = vsel %vm273, %v1307, 0
    %1314 = vmatpush.bf16.msra.mxu0 0
    %1315 = vmatpush.bf16.msra.mxu0 0
    %1316 = vmatpush.bf16.msra.mxu0 0
    %1317 = vmatpush.bf16.msra.mxu0 0
    %1318 = vmatpush.bf16.msra.mxu0 0
    %1319 = vmatpush.bf16.msra.mxu0 0
    %1320 = vmatpush.bf16.msra.mxu0 0
    %1321 = vmatpush.bf16.msra.mxu0 %v1312
    %1322 = vmatmul.bf16.gmra.mxu0 %v1309
    %v1323 = vpop.f32.mrf.mxu0
    %v1324 = vadd.f32 0.0, %v1323
    %v1325 = vpop.f32.mrf.mxu0
    %1326 = vdwg.mxu0
    %v1327 = vpack.c.bf16 %v1324, %v1324
    %v1329 = vsel %vm235, %v1327, 0
    %v1332 = vsel %vm273, %v1111, 0
    %1334 = vmatpush.bf16.msra.mxu0 0
    %1335 = vmatpush.bf16.msra.mxu0 0
    %1336 = vmatpush.bf16.msra.mxu0 0
    %1337 = vmatpush.bf16.msra.mxu0 0
    %1338 = vmatpush.bf16.msra.mxu0 0
    %1339 = vmatpush.bf16.msra.mxu0 0
    %1340 = vmatpush.bf16.msra.mxu0 0
    %1341 = vmatpush.bf16.msra.mxu0 %v1332
    %1342 = vmatmul.bf16.gmra.mxu0 %v1329
    %v1343 = vpop.f32.mrf.mxu0
    %v1344 = vadd.f32 0.0, %v1343
    %v1345 = vpop.f32.mrf.mxu0
    %1346 = vdwg.mxu0
    %v1347 = vadd.f32 %v1267, %v1344
    %1348 = vrot.lane.b32.xlu0 %v1117, 104
    %v1349 = vpop.permute.xlu0 %1348
    %1350 = vrot.lane.b32.xlu0 %v1117, 72
    %v1351 = vpop.permute.xlu0 %1350
    %v1353 = vsel %vm235, %v1349, 0
    %v1356 = vsel %vm235, %v1351, 0
    %1358 = vmatpush.bf16.xpose.msra.mxu0 0
    %1359 = vmatpush.bf16.xpose.msra.mxu0 0
    %1360 = vmatpush.bf16.xpose.msra.mxu0 0
    %1361 = vmatpush.bf16.xpose.msra.mxu0 0
    %1362 = vmatpush.bf16.xpose.msra.mxu0 0
    %1363 = vmatpush.bf16.xpose.msra.mxu0 0
    %1364 = vmatpush.bf16.xpose.msra.mxu0 0
    %1365 = vmatpush.bf16.xpose.msra.mxu0 %v1356
    %1366 = vmatmul.bf16.gmra.mxu0 %v1353
    %v1367 = vpop.f32.mrf.mxu0
    %v1368 = vadd.f32 0.0, %v1367
    %v1369 = vpop.f32.mrf.mxu0
    %1370 = vdwg.mxu0
    %v1371 = vsel %vm1114, %v1368, -1e+09
    %v1372 = vsel %vm235, %v1371, -inf
    %1373 = vmax.xlane.f32.xlu0 %v1372
    %v1374 = vpop.xlane.xlu0 %1373
    %v1375 = vsub.f32 %v1371, %v1374
    %v1376 = vmul.f32 %v1375, 1.442695
    %v1377 = vpow.pop %v1376
    %v1378 = vsel %vm235, %v1377, 0.0
    %1379 = vadd.xlane.f32.xlu0 %v1378
    %v1380 = vpop.xlane.xlu0 %1379
    %v1381 = vrcp.pop %v1380
    %v1382 = vmul.f32 %v1377, %v1381
    %v1383 = vpack.c.bf16 %v1382, %v1382
    %1384 = vrot.lane.b32.xlu0 %v1117, 40
    %v1385 = vpop.permute.xlu0 %1384
    %v1387 = vsel %vm235, %v1383, 0
    %v1390 = vsel %vm273, %v1385, 0
    %1392 = vmatpush.bf16.msra.mxu0 0
    %1393 = vmatpush.bf16.msra.mxu0 0
    %1394 = vmatpush.bf16.msra.mxu0 0
    %1395 = vmatpush.bf16.msra.mxu0 0
    %1396 = vmatpush.bf16.msra.mxu0 0
    %1397 = vmatpush.bf16.msra.mxu0 0
    %1398 = vmatpush.bf16.msra.mxu0 0
    %1399 = vmatpush.bf16.msra.mxu0 %v1390
    %1400 = vmatmul.bf16.gmra.mxu0 %v1387
    %v1401 = vpop.f32.mrf.mxu0
    %v1402 = vadd.f32 0.0, %v1401
    %v1403 = vpop.f32.mrf.mxu0
    %1404 = vdwg.mxu0
    %v1405 = vpack.c.bf16 %v1402, %v1402
    %v1407 = vsel %vm235, %v1405, 0
    %v1410 = vsel %vm273, %v1112, 0
    %1412 = vmatpush.bf16.msra.mxu0 0
    %1413 = vmatpush.bf16.msra.mxu0 0
    %1414 = vmatpush.bf16.msra.mxu0 0
    %1415 = vmatpush.bf16.msra.mxu0 0
    %1416 = vmatpush.bf16.msra.mxu0 0
    %1417 = vmatpush.bf16.msra.mxu0 0
    %1418 = vmatpush.bf16.msra.mxu0 0
    %1419 = vmatpush.bf16.msra.mxu0 %v1410
    %1420 = vmatmul.bf16.gmra.mxu0 %v1407
    %v1421 = vpop.f32.mrf.mxu0
    %v1422 = vadd.f32 0.0, %v1421
    %v1423 = vpop.f32.mrf.mxu0
    %1424 = vdwg.mxu0
    %v1425 = vadd.f32 %v1347, %v1422
    %v1426 = vld [vmem:[%s543] sm:$0xff]
    %vm1427 = vcmp.gt.f32.partialorder %v1426, 0.0
    %v1429 = vunpack.c.l.b16 %v1107
    %v1430 = vpack.c.b16 %v1429, %v1429
    %1431 = vrot.lane.b32.xlu0 %v1430, 96
    %v1432 = vpop.permute.xlu0 %1431
    %v1434 = vsel %vm235, %v1107, 0
    %v1437 = vsel %vm235, %v1432, 0
    %1439 = vmatpush.bf16.xpose.msra.mxu0 0
    %1440 = vmatpush.bf16.xpose.msra.mxu0 0
    %1441 = vmatpush.bf16.xpose.msra.mxu0 0
    %1442 = vmatpush.bf16.xpose.msra.mxu0 0
    %1443 = vmatpush.bf16.xpose.msra.mxu0 0
    %1444 = vmatpush.bf16.xpose.msra.mxu0 0
    %1445 = vmatpush.bf16.xpose.msra.mxu0 0
    %1446 = vmatpush.bf16.xpose.msra.mxu0 %v1437
    %1447 = vmatmul.bf16.gmra.mxu0 %v1434
    %v1448 = vpop.f32.mrf.mxu0
    %v1449 = vadd.f32 0.0, %v1448
    %v1450 = vpop.f32.mrf.mxu0
    %1451 = vdwg.mxu0
    %v1452 = vsel %vm1427, %v1449, -1e+09
    %v1453 = vsel %vm235, %v1452, -inf
    %1454 = vmax.xlane.f32.xlu0 %v1453
    %v1455 = vpop.xlane.xlu0 %1454
    %v1456 = vsub.f32 %v1452, %v1455
    %v1457 = vmul.f32 %v1456, 1.442695
    %v1458 = vpow.pop %v1457
    %v1459 = vsel %vm235, %v1458, 0.0
    %1460 = vadd.xlane.f32.xlu0 %v1459
    %v1461 = vpop.xlane.xlu0 %1460
    %v1462 = vrcp.pop %v1461
    %v1463 = vmul.f32 %v1458, %v1462
    %v1464 = vpack.c.bf16 %v1463, %v1463
    %1465 = vrot.lane.b32.xlu0 %v1430, 64
    %v1466 = vpop.permute.xlu0 %1465
    %v1468 = vsel %vm235, %v1464, 0
    %v1471 = vsel %vm273, %v1466, 0
    %1473 = vmatpush.bf16.msra.mxu0 0
    %1474 = vmatpush.bf16.msra.mxu0 0
    %1475 = vmatpush.bf16.msra.mxu0 0
    %1476 = vmatpush.bf16.msra.mxu0 0
    %1477 = vmatpush.bf16.msra.mxu0 0
    %1478 = vmatpush.bf16.msra.mxu0 0
    %1479 = vmatpush.bf16.msra.mxu0 0
    %1480 = vmatpush.bf16.msra.mxu0 %v1471
    %1481 = vmatmul.bf16.gmra.mxu0 %v1468
    %v1482 = vpop.f32.mrf.mxu0
    %v1483 = vadd.f32 0.0, %v1482
    %v1484 = vpop.f32.mrf.mxu0
    %1485 = vdwg.mxu0
    %v1486 = vpack.c.bf16 %v1483, %v1483
    %1487 = vrot.lane.b32.xlu0 %v1430, 120
    %v1488 = vpop.permute.xlu0 %1487
    %1489 = vrot.lane.b32.xlu0 %v1430, 88
    %v1490 = vpop.permute.xlu0 %1489
    %v1492 = vsel %vm235, %v1488, 0
    %v1495 = vsel %vm235, %v1490, 0
    %1497 = vmatpush.bf16.xpose.msra.mxu0 0
    %1498 = vmatpush.bf16.xpose.msra.mxu0 0
    %1499 = vmatpush.bf16.xpose.msra.mxu0 0
    %1500 = vmatpush.bf16.xpose.msra.mxu0 0
    %1501 = vmatpush.bf16.xpose.msra.mxu0 0
    %1502 = vmatpush.bf16.xpose.msra.mxu0 0
    %1503 = vmatpush.bf16.xpose.msra.mxu0 0
    %1504 = vmatpush.bf16.xpose.msra.mxu0 %v1495
    %1505 = vmatmul.bf16.gmra.mxu0 %v1492
    %v1506 = vpop.f32.mrf.mxu0
    %v1507 = vadd.f32 0.0, %v1506
    %v1508 = vpop.f32.mrf.mxu0
    %1509 = vdwg.mxu0
    %v1510 = vsel %vm1427, %v1507, -1e+09
    %v1511 = vsel %vm235, %v1510, -inf
    %1512 = vmax.xlane.f32.xlu0 %v1511
    %v1513 = vpop.xlane.xlu0 %1512
    %v1514 = vsub.f32 %v1510, %v1513
    %v1515 = vmul.f32 %v1514, 1.442695
    %v1516 = vpow.pop %v1515
    %v1517 = vsel %vm235, %v1516, 0.0
    %1518 = vadd.xlane.f32.xlu0 %v1517
    %v1519 = vpop.xlane.xlu0 %1518
    %v1520 = vrcp.pop %v1519
    %v1521 = vmul.f32 %v1516, %v1520
    %v1522 = vpack.c.bf16 %v1521, %v1521
    %1523 = vrot.lane.b32.xlu0 %v1430, 56
    %v1524 = vpop.permute.xlu0 %1523
    %v1526 = vsel %vm235, %v1522, 0
    %v1529 = vsel %vm273, %v1524, 0
    %1531 = vmatpush.bf16.msra.mxu0 0
    %1532 = vmatpush.bf16.msra.mxu0 0
    %1533 = vmatpush.bf16.msra.mxu0 0
    %1534 = vmatpush.bf16.msra.mxu0 0
    %1535 = vmatpush.bf16.msra.mxu0 0
    %1536 = vmatpush.bf16.msra.mxu0 0
    %1537 = vmatpush.bf16.msra.mxu0 0
    %1538 = vmatpush.bf16.msra.mxu0 %v1529
    %1539 = vmatmul.bf16.gmra.mxu0 %v1526
    %v1540 = vpop.f32.mrf.mxu0
    %v1541 = vadd.f32 0.0, %v1540
    %v1542 = vpop.f32.mrf.mxu0
    %1543 = vdwg.mxu0
    %v1544 = vpack.c.bf16 %v1541, %v1541
    %v1546 = vsel %vm235, %v1544, 0
    %1548 = vmatpush.bf16.msra.mxu0 0
    %1549 = vmatpush.bf16.msra.mxu0 0
    %1550 = vmatpush.bf16.msra.mxu0 0
    %1551 = vmatpush.bf16.msra.mxu0 0
    %1552 = vmatpush.bf16.msra.mxu0 0
    %1553 = vmatpush.bf16.msra.mxu0 0
    %1554 = vmatpush.bf16.msra.mxu0 0
    %1555 = vmatpush.bf16.msra.mxu0 %v1236
    %1556 = vmatmul.bf16.gmra.mxu0 %v1546
    %v1557 = vpop.f32.mrf.mxu0
    %v1558 = vadd.f32 0.0, %v1557
    %v1559 = vpop.f32.mrf.mxu0
    %1560 = vdwg.mxu0
    %v1562 = vsel %vm235, %v1486, 0
    %1564 = vmatpush.bf16.msra.mxu0 0
    %1565 = vmatpush.bf16.msra.mxu0 0
    %1566 = vmatpush.bf16.msra.mxu0 0
    %1567 = vmatpush.bf16.msra.mxu0 0
    %1568 = vmatpush.bf16.msra.mxu0 0
    %1569 = vmatpush.bf16.msra.mxu0 0
    %1570 = vmatpush.bf16.msra.mxu0 0
    %1571 = vmatpush.bf16.msra.mxu0 %v1255
    %1572 = vmatmul.bf16.gmra.mxu0 %v1562
    %v1573 = vpop.f32.mrf.mxu0
    %v1574 = vadd.f32 %v1558, %v1573
    %v1575 = vpop.f32.mrf.mxu0
    %1576 = vdwg.mxu0
    %1577 = vrot.lane.b32.xlu0 %v1430, 112
    %v1578 = vpop.permute.xlu0 %1577
    %1579 = vrot.lane.b32.xlu0 %v1430, 80
    %v1580 = vpop.permute.xlu0 %1579
    %v1582 = vsel %vm235, %v1578, 0
    %v1585 = vsel %vm235, %v1580, 0
    %1587 = vmatpush.bf16.xpose.msra.mxu0 0
    %1588 = vmatpush.bf16.xpose.msra.mxu0 0
    %1589 = vmatpush.bf16.xpose.msra.mxu0 0
    %1590 = vmatpush.bf16.xpose.msra.mxu0 0
    %1591 = vmatpush.bf16.xpose.msra.mxu0 0
    %1592 = vmatpush.bf16.xpose.msra.mxu0 0
    %1593 = vmatpush.bf16.xpose.msra.mxu0 0
    %1594 = vmatpush.bf16.xpose.msra.mxu0 %v1585
    %1595 = vmatmul.bf16.gmra.mxu0 %v1582
    %v1596 = vpop.f32.mrf.mxu0
    %v1597 = vadd.f32 0.0, %v1596
    %v1598 = vpop.f32.mrf.mxu0
    %1599 = vdwg.mxu0
    %v1600 = vsel %vm1427, %v1597, -1e+09
    %v1601 = vsel %vm235, %v1600, -inf
    %1602 = vmax.xlane.f32.xlu0 %v1601
    %v1603 = vpop.xlane.xlu0 %1602
    %v1604 = vsub.f32 %v1600, %v1603
    %v1605 = vmul.f32 %v1604, 1.442695
    %v1606 = vpow.pop %v1605
    %v1607 = vsel %vm235, %v1606, 0.0
    %1608 = vadd.xlane.f32.xlu0 %v1607
    %v1609 = vpop.xlane.xlu0 %1608
    %v1610 = vrcp.pop %v1609
    %v1611 = vmul.f32 %v1606, %v1610
    %v1612 = vpack.c.bf16 %v1611, %v1611
    %1613 = vrot.lane.b32.xlu0 %v1430, 48
    %v1614 = vpop.permute.xlu0 %1613
    %v1616 = vsel %vm235, %v1612, 0
    %v1619 = vsel %vm273, %v1614, 0
    %1621 = vmatpush.bf16.msra.mxu0 0
    %1622 = vmatpush.bf16.msra.mxu0 0
    %1623 = vmatpush.bf16.msra.mxu0 0
    %1624 = vmatpush.bf16.msra.mxu0 0
    %1625 = vmatpush.bf16.msra.mxu0 0
    %1626 = vmatpush.bf16.msra.mxu0 0
    %1627 = vmatpush.bf16.msra.mxu0 0
    %1628 = vmatpush.bf16.msra.mxu0 %v1619
    %1629 = vmatmul.bf16.gmra.mxu0 %v1616
    %v1630 = vpop.f32.mrf.mxu0
    %v1631 = vadd.f32 0.0, %v1630
    %v1632 = vpop.f32.mrf.mxu0
    %1633 = vdwg.mxu0
    %v1634 = vpack.c.bf16 %v1631, %v1631
    %v1636 = vsel %vm235, %v1634, 0
    %1638 = vmatpush.bf16.msra.mxu0 0
    %1639 = vmatpush.bf16.msra.mxu0 0
    %1640 = vmatpush.bf16.msra.mxu0 0
    %1641 = vmatpush.bf16.msra.mxu0 0
    %1642 = vmatpush.bf16.msra.mxu0 0
    %1643 = vmatpush.bf16.msra.mxu0 0
    %1644 = vmatpush.bf16.msra.mxu0 0
    %1645 = vmatpush.bf16.msra.mxu0 %v1332
    %1646 = vmatmul.bf16.gmra.mxu0 %v1636
    %v1647 = vpop.f32.mrf.mxu0
    %v1648 = vadd.f32 0.0, %v1647
    %v1649 = vpop.f32.mrf.mxu0
    %1650 = vdwg.mxu0
    %v1651 = vadd.f32 %v1574, %v1648
    %1652 = vrot.lane.b32.xlu0 %v1430, 104
    %v1653 = vpop.permute.xlu0 %1652
    %1654 = vrot.lane.b32.xlu0 %v1430, 72
    %v1655 = vpop.permute.xlu0 %1654
    %v1657 = vsel %vm235, %v1653, 0
    %v1660 = vsel %vm235, %v1655, 0
    %1662 = vmatpush.bf16.xpose.msra.mxu0 0
    %1663 = vmatpush.bf16.xpose.msra.mxu0 0
    %1664 = vmatpush.bf16.xpose.msra.mxu0 0
    %1665 = vmatpush.bf16.xpose.msra.mxu0 0
    %1666 = vmatpush.bf16.xpose.msra.mxu0 0
    %1667 = vmatpush.bf16.xpose.msra.mxu0 0
    %1668 = vmatpush.bf16.xpose.msra.mxu0 0
    %1669 = vmatpush.bf16.xpose.msra.mxu0 %v1660
    %1670 = vmatmul.bf16.gmra.mxu0 %v1657
    %v1671 = vpop.f32.mrf.mxu0
    %v1672 = vadd.f32 0.0, %v1671
    %v1673 = vpop.f32.mrf.mxu0
    %1674 = vdwg.mxu0
    %v1675 = vsel %vm1427, %v1672, -1e+09
    %v1676 = vsel %vm235, %v1675, -inf
    %1677 = vmax.xlane.f32.xlu0 %v1676
    %v1678 = vpop.xlane.xlu0 %1677
    %v1679 = vsub.f32 %v1675, %v1678
    %v1680 = vmul.f32 %v1679, 1.442695
    %v1681 = vpow.pop %v1680
    %v1682 = vsel %vm235, %v1681, 0.0
    %1683 = vadd.xlane.f32.xlu0 %v1682
    %v1684 = vpop.xlane.xlu0 %1683
    %v1685 = vrcp.pop %v1684
    %v1686 = vmul.f32 %v1681, %v1685
    %v1687 = vpack.c.bf16 %v1686, %v1686
    %1688 = vrot.lane.b32.xlu0 %v1430, 40
    %v1689 = vpop.permute.xlu0 %1688
    %v1691 = vsel %vm235, %v1687, 0
    %v1694 = vsel %vm273, %v1689, 0
    %1696 = vmatpush.bf16.msra.mxu0 0
    %1697 = vmatpush.bf16.msra.mxu0 0
    %1698 = vmatpush.bf16.msra.mxu0 0
    %1699 = vmatpush.bf16.msra.mxu0 0
    %1700 = vmatpush.bf16.msra.mxu0 0
    %1701 = vmatpush.bf16.msra.mxu0 0
    %1702 = vmatpush.bf16.msra.mxu0 0
    %1703 = vmatpush.bf16.msra.mxu0 %v1694
    %1704 = vmatmul.bf16.gmra.mxu0 %v1691
    %v1705 = vpop.f32.mrf.mxu0
    %v1706 = vadd.f32 0.0, %v1705
    %v1707 = vpop.f32.mrf.mxu0
    %1708 = vdwg.mxu0
    %v1709 = vpack.c.bf16 %v1706, %v1706
    %v1711 = vsel %vm235, %v1709, 0
    %1713 = vmatpush.bf16.msra.mxu0 0
    %1714 = vmatpush.bf16.msra.mxu0 0
    %1715 = vmatpush.bf16.msra.mxu0 0
    %1716 = vmatpush.bf16.msra.mxu0 0
    %1717 = vmatpush.bf16.msra.mxu0 0
    %1718 = vmatpush.bf16.msra.mxu0 0
    %1719 = vmatpush.bf16.msra.mxu0 0
    %1720 = vmatpush.bf16.msra.mxu0 %v1410
    %1721 = vmatmul.bf16.gmra.mxu0 %v1711
    %v1722 = vpop.f32.mrf.mxu0
    %v1723 = vadd.f32 0.0, %v1722
    %v1724 = vpop.f32.mrf.mxu0
    %1725 = vdwg.mxu0
    %v1726 = vadd.f32 %v1651, %v1723
    %v1727 = vadd.f32 %v1006, %v1425
    %v1728 = vadd.f32 %v1007, %v1726
    %s1729 = scalar_lea.vmem %s7, 1
    %v1730 = vld [vmem:[%s1729] sm:$0x1]
    %v1732 = vperm.slane %v1730, 0
    %v1734 = vadd.f32 %v1727, %v1732
    %v1735 = vadd.f32 %v1728, %v1732
    %s1736 = scalar_lea.vmem [#allocation8], 1
    %v1737 = vld [vmem:[%s1736] sm:$0x1]
    %s1738 = scalar_lea.vmem %s9, 1
    %v1739 = vld [vmem:[%s1738] sm:$0x1]
    %v1740 = vsel %vm122, %v1734, 0.0
    %1741 = vadd.xlane.f32.xlu0 %v1740
    %v1742 = vpop.xlane.xlu0 %1741
    %v1743 = vsel %vm122, %v1735, 0.0
    %1744 = vadd.xlane.f32.xlu0 %v1743
    %v1745 = vpop.xlane.xlu0 %1744
    %v1746 = vmul.f32 %v1742, %v135
    %v1747 = vmul.f32 %v1745, %v135
    %v1748 = vsub.f32 %v1734, %v1746
    %v1749 = vsub.f32 %v1735, %v1747
    %v1750 = vmul.f32 %v1748, %v1748
    %v1751 = vmul.f32 %v1749, %v1749
    %v1752 = vsel %vm122, %v1750, 0.0
    %1753 = vadd.xlane.f32.xlu0 %v1752
    %v1754 = vpop.xlane.xlu0 %1753
    %v1755 = vsel %vm122, %v1751, 0.0
    %1756 = vadd.xlane.f32.xlu0 %v1755
    %v1757 = vpop.xlane.xlu0 %1756
    %v1758 = vmul.f32 %v1754, %v135
    %v1759 = vmul.f32 %v1757, %v135
    %v1760 = vadd.f32 %v1758, 1e-06
    %v1761 = vadd.f32 %v1759, 1e-06
    %v1762 = vrsqrt.pop %v1760
    %v1763 = vmul.f32 %v1762, %v1760
    %v1764 = vmul.f32 %v1763, %v1762
    %v1765 = vmul.f32 0.5, %v1764
    %v1766 = vsub.f32 1.5, %v1765
    %v1767 = vmul.f32 %v1762, %v1766
    %vm1768 = vweird.f32 %v1760
    %vm1769 = vweird.f32 %v1762
    %vm1770 = vmor %vm1768, %vm1769
    %v1771 = vsel %vm1770, %v1762, %v1767
    %v1772 = vrsqrt.pop %v1761
    %v1773 = vmul.f32 %v1772, %v1761
    %v1774 = vmul.f32 %v1773, %v1772
    %v1775 = vmul.f32 0.5, %v1774
    %v1776 = vsub.f32 1.5, %v1775
    %v1777 = vmul.f32 %v1772, %v1776
    %vm1778 = vweird.f32 %v1761
    %vm1779 = vweird.f32 %v1772
    %vm1780 = vmor %vm1778, %vm1779
    %v1781 = vsel %vm1780, %v1772, %v1777
    %v1782 = vmul.f32 %v1748, %v1771
    %v1783 = vmul.f32 %v1749, %v1781
    %v1785 = vperm.slane %v1737, 0
    %v1787 = vmul.f32 %v1782, %v1785
    %v1788 = vmul.f32 %v1783, %v1785
    %v1790 = vperm.slane %v1739, 0
    %v1792 = vadd.f32 %v1787, %v1790
    %v1793 = vadd.f32 %v1788, %v1790
    %v1794 = vpack.c.bf16 %v1793, %v1792
    %s1795 = scalar_lea.vmem %s10, 16
    %v1796 = vld [vmem:[%s1795] sm:$0xf]
    %v1797 = vld [vmem:[%s1795 + $0x4] sm:$0xf]
    %v1798 = vld [vmem:[%s1795 + $0x8] sm:$0xf]
    %v1799 = vld [vmem:[%s1795 + $0xc] sm:$0xf]
    %s1800 = scalar_lea.vmem %s11, 1
    %v1801 = vld [vmem:[%s1800] sm:$0x1]
    %v1803 = vperm.slane %v1801, 0
    %v1809 = vunpack.c.l.b16 %v1796
    %v1810 = vunpack.c.l.b16 %v1797
    %v1811 = vunpack.c.l.b16 %v1798
    %v1812 = vunpack.c.l.b16 %v1799
    %v1813 = vpack.c.b16 %v1810, %v1809
    %v1814 = vpack.c.b16 %v1812, %v1811
    %v1818 = vsel %vm122, %v1794, 0
    %1820 = vmatpush.bf16.msra.mxu0 0
    %1821 = vmatpush.bf16.msra.mxu0 0
    %1822 = vmatpush.bf16.msra.mxu0 0
    %1823 = vmatpush.bf16.msra.mxu0 0
    %1824 = vmatpush.bf16.msra.mxu0 0
    %1825 = vmatpush.bf16.msra.mxu0 0
    %1826 = vmatpush.bf16.msra.mxu0 %v1814
    %1827 = vmatpush.bf16.msra.mxu0 %v1813
    %1828 = vmatmul.bf16.gmra.mxu0 %v1818
    %v1829 = vpop.f32.mrf.mxu0
    %v1830 = vadd.f32 %v1803, %v1829
    %v1831 = vpop.f32.mrf.mxu0
    %v1832 = vadd.f32 %v1803, %v1831
    %1833 = vdwg.mxu0
    %v1834 = vmax.f32 %v1830, 0.0
    %v1835 = vmax.f32 %v1832, 0.0
    %v1836 = vpack.c.bf16 %v1835, %v1834
    %s1837 = scalar_lea.vmem %s12, 32
    %v1838 = vld [vmem:[%s1837] sm:$0xf]
    %v1839 = vld [vmem:[%s1837 + $0x4] sm:$0xf]
    %v1840 = vld [vmem:[%s1837 + $0x8] sm:$0xf]
    %v1841 = vld [vmem:[%s1837 + $0xc] sm:$0xf]
    %v1842 = vld [vmem:[%s1837 + $0x10] sm:$0xf]
    %v1843 = vld [vmem:[%s1837 + $0x14] sm:$0xf]
    %v1844 = vld [vmem:[%s1837 + $0x18] sm:$0xf]
    %v1845 = vld [vmem:[%s1837 + $0x1c] sm:$0xf]
    %v1854 = vunpack.c.l.b16 %v1838
    %v1855 = vunpack.c.l.b16 %v1839
    %v1856 = vunpack.c.l.b16 %v1840
    %v1857 = vunpack.c.l.b16 %v1841
    %v1858 = vunpack.c.l.b16 %v1842
    %v1859 = vunpack.c.l.b16 %v1843
    %v1860 = vunpack.c.l.b16 %v1844
    %v1861 = vunpack.c.l.b16 %v1845
    %v1862 = vpack.c.b16 %v1855, %v1854
    %v1863 = vpack.c.b16 %v1857, %v1856
    %v1864 = vpack.c.b16 %v1859, %v1858
    %v1865 = vpack.c.b16 %v1861, %v1860
    %v1871 = vsel %vm982, %v1836, 0
    %1873 = vmatpush.bf16.msra.mxu0 0
    %1874 = vmatpush.bf16.msra.mxu0 0
    %1875 = vmatpush.bf16.msra.mxu0 0
    %1876 = vmatpush.bf16.msra.mxu0 0
    %1877 = vmatpush.bf16.msra.mxu0 %v1865
    %1878 = vmatpush.bf16.msra.mxu0 %v1864
    %1879 = vmatpush.bf16.msra.mxu0 %v1863
    %1880 = vmatpush.bf16.msra.mxu0 %v1862
    %1881 = vmatmul.bf16.gmra.mxu0 %v1871
    %v1882 = vpop.f32.mrf.mxu0
    %v1883 = vadd.f32 0.0, %v1882
    %v1884 = vpop.f32.mrf.mxu0
    %v1885 = vadd.f32 0.0, %v1884
    %1886 = vdwg.mxu0
    %v1887 = vadd.f32 %v1734, %v1883
    %v1888 = vadd.f32 %v1735, %v1885
    %s1889 = scalar_lea.vmem %s13, 1
    %v1890 = vld [vmem:[%s1889] sm:$0x1]
    %v1892 = vperm.slane %v1890, 0
    %v1894 = vadd.f32 %v1887, %v1892
    %v1895 = vadd.f32 %v1888, %v1892
    %v1896 = vld [vmem:[%s14] sm:$0x1]
    %v1897 = vld [vmem:[%s15] sm:$0x1]
    %v1898 = vsel %vm122, %v1894, 0.0
    %1899 = vadd.xlane.f32.xlu0 %v1898
    %v1900 = vpop.xlane.xlu0 %1899
    %v1901 = vsel %vm122, %v1895, 0.0
    %1902 = vadd.xlane.f32.xlu0 %v1901
    %v1903 = vpop.xlane.xlu0 %1902
    %v1904 = vmul.f32 %v1900, %v135
    %v1905 = vmul.f32 %v1903, %v135
    %v1906 = vsub.f32 %v1894, %v1904
    %v1907 = vsub.f32 %v1895, %v1905
    %v1908 = vmul.f32 %v1906, %v1906
    %v1909 = vmul.f32 %v1907, %v1907
    %v1910 = vsel %vm122, %v1908, 0.0
    %1911 = vadd.xlane.f32.xlu0 %v1910
    %v1912 = vpop.xlane.xlu0 %1911
    %v1913 = vsel %vm122, %v1909, 0.0
    %1914 = vadd.xlane.f32.xlu0 %v1913
    %v1915 = vpop.xlane.xlu0 %1914
    %v1916 = vmul.f32 %v1912, %v135
    %v1917 = vmul.f32 %v1915, %v135
    %v1918 = vadd.f32 %v1916, 1e-06
    %v1919 = vadd.f32 %v1917, 1e-06
    %v1920 = vrsqrt.pop %v1918
    %v1921 = vmul.f32 %v1920, %v1918
    %v1922 = vmul.f32 %v1921, %v1920
    %v1923 = vmul.f32 0.5, %v1922
    %v1924 = vsub.f32 1.5, %v1923
    %v1925 = vmul.f32 %v1920, %v1924
    %vm1926 = vweird.f32 %v1918
    %vm1927 = vweird.f32 %v1920
    %vm1928 = vmor %vm1926, %vm1927
    %v1929 = vsel %vm1928, %v1920, %v1925
    %v1930 = vrsqrt.pop %v1919
    %v1931 = vmul.f32 %v1930, %v1919
    %v1932 = vmul.f32 %v1931, %v1930
    %v1933 = vmul.f32 0.5, %v1932
    %v1934 = vsub.f32 1.5, %v1933
    %v1935 = vmul.f32 %v1930, %v1934
    %vm1936 = vweird.f32 %v1919
    %vm1937 = vweird.f32 %v1930
    %vm1938 = vmor %vm1936, %vm1937
    %v1939 = vsel %vm1938, %v1930, %v1935
    %v1940 = vmul.f32 %v1906, %v1929
    %v1941 = vmul.f32 %v1907, %v1939
    %v1943 = vperm.slane %v1896, 0
    %v1945 = vmul.f32 %v1940, %v1943
    %v1946 = vmul.f32 %v1941, %v1943
    %v1948 = vperm.slane %v1897, 0
    %v1950 = vadd.f32 %v1945, %v1948
    %v1951 = vadd.f32 %v1946, %v1948
    %1952 = vst.msk [vmem:[#allocation10] sm:$0xff] %vm122, %v1950
    %1953 = vst.msk [vmem:[#allocation10 + $0x8] sm:$0xff] %vm122, %v1951
    // Predicated region
    $region82: #{encoder_forward.1} parent=1 // pred_check
      _
    $region83: #{encoder_forward.1} parent=1 // pred_check_branch
      %1955 = sbr.rel (0) target = $region85
    $region84: #{encoder_forward.1} parent=1 // pred_region
      %1957 = vsyncadd [#allocation4], 0
      %s1958 = sshll.u32 [#allocation10], 4
      %s1959 = int_to_ptr.vmem [resolvable:$true] %s1958
      %s1960 = sshll.u32 %s16, 4
      %s1961 = int_to_ptr.hbm [resolvable:$true] %s1960
      %1966 = dma.vmem_to_hbm [thread:$0]  %s1959, 256, %s1961, [#allocation4], 128, 128, 8
    $region85: #{encoder_forward.1} parent=1 // pred_fallthru
      _
    // Predicated region
    $region86: #{encoder_forward.1} parent=1 // pred_check
      _
    $region87: #{encoder_forward.1} parent=1 // pred_check_branch
      %1968 = sbr.rel (0) target = $region89
    $region88: #{encoder_forward.1} parent=1 // pred_region
      %1970 = dma.done [#allocation4], 256
    $region89: #{encoder_forward.1} parent=1 // pred_fallthru
      _
    %1971 = vsyncpa [#allocation3], 1
    %1972 = vsyncpa [#allocation6], 1
    %1973 = vsyncpa [#allocation9], 1
    %1974 = vsyncpa [#allocation4], 1

</llo_original>
